<compile_context>
chip_gen: v7x
topology: tpu7x:2x2x1
jax: 0.10.0
libtpu: 0.0.40
codegen_flags: <defaults>
</compile_context>

<pallas_src>
import jax
import jax.numpy as jnp
from jax import lax
from jax.experimental import pallas as pl
from jax.experimental.pallas import tpu as pltpu


def _round_up(x, m):
    return ((x + m - 1) // m) * m


def _silu(x):
    return x * jax.nn.sigmoid(x)


# ----------------------------------------------------------------------------
# Weight preparation (fold to matmul layout; zero-pad channels to sublane mults)
# ----------------------------------------------------------------------------
def _prep_conv_mat(w, b, cin_pad, cout_pad):
    """(KH,KW,Cin,Cout),(Cout,) -> (Cout_p, KH*KW*Cin_p) f32, (Cout_p,) f32|None."""
    KH, KW, Cin, Cout = w.shape
    w = jnp.pad(w, ((0, 0), (0, 0), (0, cin_pad - Cin), (0, cout_pad - Cout)))
    wmat = w.reshape(KH * KW * cin_pad, cout_pad).T
    bvec = None if b is None else jnp.pad(b, (0, cout_pad - Cout))
    return wmat, bvec


def _prep_conv3x3_taps(w, b, cin_pad, cout_pad):
    """(3,3,Cin,Cout) -> tap-major (9*Cout_p, Cin_p) weight + (Cout_p,) bias.

    Tap t = kh*3+kw lives in rows [t*Cout_p, (t+1)*Cout_p) -> per-tap weight
    loads are sublane-aligned row slices (no lane rotates).
    """
    KH, KW, Cin, Cout = w.shape
    w = jnp.pad(w, ((0, 0), (0, 0), (0, cin_pad - Cin), (0, cout_pad - Cout)))
    wmat = jnp.concatenate([w[kh, kw].T for kh in range(3) for kw in range(3)],
                           axis=0)
    bvec = None if b is None else jnp.pad(b, (0, cout_pad - Cout))
    return wmat, bvec


def _prep_1x1_embed(w, b, k_total, k_off, cout_pad):
    """1x1 conv weight placed at input-channel columns [k_off, k_off+Cin).

    Folds a channel-chunk slice of the activation into zeroed weight columns,
    so the kernel never slices sublanes at unaligned offsets.
    """
    Cin, Cout = w.shape[2], w.shape[3]
    wmat = jnp.zeros((cout_pad, k_total), w.dtype)
    wmat = wmat.at[:Cout, k_off:k_off + Cin].set(w[0, 0].T)
    bvec = jnp.pad(b, (0, cout_pad - Cout))
    return wmat, bvec


class _WeightPack:
    """Packs every conv's folded weight matrix / bias into two contiguous
    buffers so the fused kernel takes 3 inputs instead of ~28 tiny ones."""

    def __init__(self):
        self._w, self._b = [], []
        self.w_meta, self.b_meta = [], []     # (row_off, rows, cols) / (row_off, rows)
        self._wr = 0
        self._br = 0

    def add(self, wmat, bvec=None):
        rows, cols = wmat.shape
        self._w.append(wmat)
        self.w_meta.append((self._wr, rows, cols))
        self._wr += rows
        widx = len(self.w_meta) - 1
        bidx = None
        if bvec is not None:
            brows = bvec.shape[0]
            self._b.append(bvec.reshape(brows, 1))
            bidx = len(self.b_meta)
            self.b_meta.append((self._br, brows))
            self._br += brows
        return widx, bidx

    def buffers(self):
        kmax = _round_up(max(c for _, _, c in self.w_meta), 128)
        w_pack = jnp.concatenate(
            [jnp.pad(w, ((0, 0), (0, kmax - w.shape[1]))) for w in self._w],
            axis=0).astype(jnp.bfloat16)
        b_pack = jnp.concatenate(self._b, axis=0).astype(jnp.float32)
        return w_pack, b_pack


# ----------------------------------------------------------------------------
# In-kernel 3x3 conv: per-tap matmuls, f32 accumulation, no im2col buffer
# ----------------------------------------------------------------------------
def _conv3x3(x_bf, tap_w, b_col, W, keep_r, keep_l):
    """3x3 stride-1 'same' conv on a (Cp, H*W) bf16 activation (pad rows == 0).

    Each of the 9 taps is a bf16 shifted view of one lane-padded copy of x
    (W-boundary wrap masked with precomputed masks); every tap feeds its own
    small MXU matmul and results are accumulated in f32.
    """
    Cp, HW = x_bf.shape
    P = W + 1
    zpad = jnp.zeros((Cp, P), x_bf.dtype)
    xp = jnp.concatenate([zpad, x_bf, zpad], axis=1)   # zero fill handles H edges
    zero = jnp.zeros((), x_bf.dtype)
    acc = None
    for kh in range(3):
        for kw in range(3):
            s = (kh - 1) * W + (kw - 1)
            t = xp[:, P + s:P + s + HW]
            if kw == 2:            # dw = +1: mask reads wrapping past right edge
                t = jnp.where(keep_r, t, zero)
            elif kw == 0:          # dw = -1: mask reads wrapping past left edge
                t = jnp.where(keep_l, t, zero)
            d = jnp.dot(tap_w(kh * 3 + kw), t, preferred_element_type=jnp.float32)
            acc = d if acc is None else acc + d
    return acc + b_col


# ----------------------------------------------------------------------------
# Fused module builder: one pallas_call for the whole RepNCSPELAN4 forward
# ----------------------------------------------------------------------------
def _build_fused_call(params, N, c1, H, W):
    HW = H * W
    c3 = params["cv1"]["w"].shape[-1]
    c4 = params["cv2"]["conv"]["w"].shape[-1]
    c2 = params["cv4"]["w"].shape[-1]
    c = c3 // 2
    c3p = _round_up(c3, 8)
    c4p = _round_up(c4, 8)
    c2p = _round_up(c2, 8)

    pk = _WeightPack()
    plan = {}

    # cv1 (1x1): c1 -> c3 (padded output rows stay exactly zero: zero W/b, SiLU(0)=0)
    plan["cv1"] = pk.add(*_prep_conv_mat(params["cv1"]["w"], params["cv1"]["b"],
                                         cin_pad=c1, cout_pad=c3p))

    def add_branch(csp_p, tail_p, k_total, k_off):
        c_ = csp_p["cv1"]["w"].shape[-1]
        c2r = csp_p["cv3"]["w"].shape[-1]
        cout = tail_p["w"].shape[-1]
        cp = _round_up(c_, 8)
        c2rp = _round_up(c2r, 8)
        coutp = _round_up(cout, 8)
        bp = {"cp": cp, "coutp": coutp}
        # RepCSP cv1 + cv2 stacked into ONE matmul; channel-chunk folded in.
        w1m, b1v = _prep_1x1_embed(csp_p["cv1"]["w"], csp_p["cv1"]["b"],
                                   k_total, k_off, cp)
        w2m, b2v = _prep_1x1_embed(csp_p["cv2"]["w"], csp_p["cv2"]["b"],
                                   k_total, k_off, cp)
        bp["cv12"] = pk.add(jnp.concatenate([w1m, w2m], axis=0),
                            jnp.concatenate([b1v, b2v], axis=0))
        bp["m"] = []
        for rbp in csp_p["m"]:                        # n x RepBottleneck (3x3, 3x3)
            i1 = pk.add(*_prep_conv3x3_taps(rbp["cv1"]["w"], rbp["cv1"]["b"],
                                            cin_pad=cp, cout_pad=cp))
            i2 = pk.add(*_prep_conv3x3_taps(rbp["cv2"]["w"], rbp["cv2"]["b"],
                                            cin_pad=cp, cout_pad=cp))
            bp["m"].append((i1, i2))
        w3, b3 = csp_p["cv3"]["w"], csp_p["cv3"]["b"]  # 1x1 on concat(2*c_)
        bp["cv3a"] = pk.add(*_prep_conv_mat(w3[:, :, :c_, :], b3,
                                            cin_pad=cp, cout_pad=c2rp))
        bp["cv3b"] = pk.add(*_prep_conv_mat(w3[:, :, c_:, :], None,
                                            cin_pad=cp, cout_pad=c2rp))
        bp["tail"] = pk.add(*_prep_conv3x3_taps(tail_p["w"], tail_p["b"],
                                                cin_pad=c2rp, cout_pad=coutp))
        return bp

    # chunk(2, channel): branch "cv2" consumes t[:, c:] (folded via k_off=c).
    plan["br2"] = add_branch(params["cv2"]["csp"], params["cv2"]["conv"],
                             k_total=c3p, k_off=c)
    plan["br3"] = add_branch(params["cv3"]["csp"], params["cv3"]["conv"],
                             k_total=c4p, k_off=0)

    # cv4 (1x1) on concat([y0, y1, y2, y3]); y0||y1 == t -> 3 partial matmuls.
    w4, b4 = params["cv4"]["w"], params["cv4"]["b"]
    plan["cv4a"] = pk.add(*_prep_conv_mat(w4[:, :, :c3, :], b4,
                                          cin_pad=c3p, cout_pad=c2p))
    plan["cv4b"] = pk.add(*_prep_conv_mat(w4[:, :, c3:c3 + c4, :], None,
                                          cin_pad=c4p, cout_pad=c2p))
    plan["cv4c"] = pk.add(*_prep_conv_mat(w4[:, :, c3 + c4:, :], None,
                                          cin_pad=c4p, cout_pad=c2p))

    w_pack, b_pack = pk.buffers()
    w_meta, b_meta = pk.w_meta, pk.b_meta

    # --- in-kernel packed-weight accessors (static, 8-aligned row offsets) ---
    def gw(w_ref, idx):
        off, rows, cols = w_meta[idx]
        return w_ref[off:off + rows, 0:cols]

    def gw3(w_ref, idx, tap):
        off, rows, cols = w_meta[idx]
        cpo = rows // 9
        return w_ref[off + tap * cpo:off + (tap + 1) * cpo, 0:cols]

    def gb(b_ref, idx):
        off, rows = b_meta[idx]
        return b_ref[off:off + rows, :]

    def run_branch(w_ref, b_ref, bp, x_bf, keep_r, keep_l):
        """RepCSP(n) + trailing 3x3 Conv, entirely in-register."""
        cp = bp["cp"]
        w12i, b12i = bp["cv12"]
        ab = jnp.dot(gw(w_ref, w12i), x_bf, preferred_element_type=jnp.float32)
        ab = _silu(ab + gb(b_ref, b12i))
        a = ab[:cp]                                    # cv1 path, f32 (residual acc)
        b_side = ab[cp:].astype(jnp.bfloat16)          # cv2 path, bf16 across the loop
        for (i1w, i1b), (i2w, i2b) in bp["m"]:         # x + Conv3x3(SiLU(RepConv3x3(x)))
            h = _silu(_conv3x3(a.astype(jnp.bfloat16),
                               lambda t, i=i1w: gw3(w_ref, i, t),
                               gb(b_ref, i1b), W, keep_r, keep_l))
            h = _silu(_conv3x3(h.astype(jnp.bfloat16),
                               lambda t, i=i2w: gw3(w_ref, i, t),
                               gb(b_ref, i2b), W, keep_r, keep_l))
            a = a + h                                  # f32 residual accumulation
        w3ai, b3i = bp["cv3a"]
        w3bi, _ = bp["cv3b"]
        y = jnp.dot(gw(w_ref, w3ai), a.astype(jnp.bfloat16),
                    preferred_element_type=jnp.float32)
        y = y + jnp.dot(gw(w_ref, w3bi), b_side, preferred_element_type=jnp.float32)
        y = _silu(y + gb(b_ref, b3i))
        wti, bti = bp["tail"]
        return _silu(_conv3x3(y.astype(jnp.bfloat16),
                              lambda t, i=wti: gw3(w_ref, i, t),
                              gb(b_ref, bti), W, keep_r, keep_l))

    def kernel(x_ref, w_ref, b_ref, o_ref):
        # W-boundary masks: computed once, reused by every 3x3 conv / tap.
        col = lax.broadcasted_iota(jnp.int32, (1, HW), 1) % W
        keep_r = col < (W - 1)
        keep_l = col >= 1

        x = x_ref[0]                                           # (c1, HW) bf16
        w1i, b1i = plan["cv1"]
        t = _silu(jnp.dot(gw(w_ref, w1i), x, preferred_element_type=jnp.float32)
                  + gb(b_ref, b1i))
        t_bf = t.astype(jnp.bfloat16)                          # (c3p, HW)

        y2_bf = run_branch(w_ref, b_ref, plan["br2"], t_bf,
                           keep_r, keep_l).astype(jnp.bfloat16)
        y3_bf = run_branch(w_ref, b_ref, plan["br3"], y2_bf,
                           keep_r, keep_l).astype(jnp.bfloat16)

        wai, b4i = plan["cv4a"]
        wbi, _ = plan["cv4b"]
        wci, _ = plan["cv4c"]
        acc = jnp.dot(gw(w_ref, wai), t_bf, preferred_element_type=jnp.float32)
        acc = acc + jnp.dot(gw(w_ref, wbi), y2_bf, preferred_element_type=jnp.float32)
        acc = acc + jnp.dot(gw(w_ref, wci), y3_bf, preferred_element_type=jnp.float32)
        out = _silu(acc + gb(b_ref, b4i))
        o_ref[0] = out[:c2].astype(o_ref.dtype)

    # --- VMEM working-set estimate & compiler params ---
    cmax = max(c3p, c4p, c2p, 2 * plan["br2"]["cp"], 2 * plan["br3"]["cp"])
    act_bytes = 12 * cmax * HW * 4                       # live (cmax, HW) f32 slabs
    wgt_bytes = w_pack.size * 2 + b_pack.shape[0] * 128 * 4
    io_bytes = 2 * (c1 * HW * 2 + c2 * HW * 4)           # double-buffered in/out blocks
    est = act_bytes + 2 * wgt_bytes + io_bytes
    # TODO(synk): when `est` outgrows VMEM at production shapes, add an HW grid
    # axis with 1-pixel halos on the 3x3 path instead of whole-image tiles.
    cp_kwargs = {"dimension_semantics": ("parallel",)}
    if est > (16 << 20):                                 # exceeds smallest default scoped limit
        cap = 64 << 20
        try:
            cap = int(pltpu.get_tpu_info().vmem_capacity_bytes)
        except Exception:
            pass
        cp_kwargs["vmem_limit_bytes"] = min(_round_up(2 * est, 1 << 20), cap * 3 // 4)

    fused = pl.pallas_call(
        kernel,
        out_shape=jax.ShapeDtypeStruct((N, c2, HW), jnp.float32),
        grid=(N,),
        in_specs=[
            pl.BlockSpec((1, c1, HW), lambda n: (n, 0, 0)),
            pl.BlockSpec(w_pack.shape, lambda n: (0, 0)),
            pl.BlockSpec(b_pack.shape, lambda n: (0, 0)),
        ],
        out_specs=pl.BlockSpec((1, c2, HW), lambda n: (n, 0, 0)),
        compiler_params=pltpu.CompilerParams(**cp_kwargs),
    )
    return fused, w_pack, b_pack


# ----------------------------------------------------------------------------
# Deterministic parameter construction (BatchNorm folded into conv + bias)
# ----------------------------------------------------------------------------
def _init_conv(key, cin, cout, k):
    kw_, kb_ = jax.random.split(key)
    w = jax.random.normal(kw_, (k, k, cin, cout), jnp.float32) / jnp.sqrt(
        float(k * k * cin))
    b = 0.01 * jax.random.normal(kb_, (cout,), jnp.float32)
    return {"w": w, "b": b}


def _init_repconv(key, cin, cout):
    # RepConv: BN(3x3) + BN(1x1) summed pre-SiLU; fused into one 3x3 kernel.
    k3_, k1_ = jax.random.split(key)
    c3_ = _init_conv(k3_, cin, cout, 3)
    c1_ = _init_conv(k1_, cin, cout, 1)
    w = c3_["w"].at[1, 1].add(c1_["w"][0, 0])
    b = c3_["b"] + c1_["b"]
    return {"w": w, "b": b}


def _init_rep_bottleneck(key, c1b, c2b):
    c_ = int(c2b * 1.0)  # e = 1.0
    k1, k2 = jax.random.split(key)
    return {"cv1": _init_repconv(k1, c1b, c_),
            "cv2": _init_conv(k2, c_, c2b, 3)}


def _init_rep_csp(key, c1r, c2r, n):
    c_ = int(c2r * 0.5)  # e = 0.5
    ks = jax.random.split(key, 3 + n)
    return {
        "cv1": _init_conv(ks[0], c1r, c_, 1),
        "cv2": _init_conv(ks[1], c1r, c_, 1),
        "cv3": _init_conv(ks[2], 2 * c_, c2r, 1),
        "m": [_init_rep_bottleneck(ks[3 + i], c_, c_) for i in range(n)],
    }


def init_params(key, c1, c2, c3, c4, n=1):
    ks = jax.random.split(key, 6)
    return {
        "cv1": _init_conv(ks[0], c1, c3, 1),
        "cv2": {"csp": _init_rep_csp(ks[1], c3 // 2, c4, n),
                "conv": _init_conv(ks[2], c4, c4, 3)},
        "cv3": {"csp": _init_rep_csp(ks[3], c4, c4, n),
                "conv": _init_conv(ks[4], c4, c4, 3)},
        "cv4": _init_conv(ks[5], c3 + 2 * c4, c2, 1),
    }


# ----------------------------------------------------------------------------
# Forward pass (matches the PyTorch module structure, NCHW in / NCHW out)
# ----------------------------------------------------------------------------
@jax.jit
def repncspelan4(x_nchw, params):
    N, c1, H, W = x_nchw.shape
    HW = H * W
    x = x_nchw.reshape(N, c1, HW).astype(jnp.bfloat16)
    fused, w_pack, b_pack = _build_fused_call(params, N, c1, H, W)
    out = fused(x, w_pack, b_pack)                         # (N, c2, HW) f32
    return out.reshape(N, -1, H, W)


# ----------------------------------------------------------------------------
if __name__ == "__main__":
    key = jax.random.PRNGKey(0)
    # RepNCSPELAN4(c1=4, c2=16, c3=8, c4=8, n=1); input NCHW (2, 4, 16, 16)
    c1, c2, c3, c4, n = 4, 16, 8, 8, 1
    N, H, W = 2, 16, 16

    kx, kp = jax.random.split(key)
    x = jax.random.normal(kx, (N, c1, H, W), jnp.float32)   # NCHW, as PyTorch
    params = init_params(kp, c1, c2, c3, c4, n)

    out = jax.block_until_ready(repncspelan4(x, params))

    assert out.shape == (N, c2, H, W), out.shape
    assert bool(jnp.all(jnp.isfinite(out)))
    print("KERNEL_OK")
</pallas_src>

<mosaic_0001>
module attributes {stable_mosaic.version = 11 : i64} {
  func.func @kernel(%arg0: i32, %arg1: memref<1x4x256xbf16, #tpu.memory_space<vmem>>, %arg2: memref<552x128xbf16, #tpu.memory_space<vmem>>, %arg3: memref<120x1xf32, #tpu.memory_space<vmem>>, %arg4: memref<1x16x256xf32, #tpu.memory_space<vmem>>) attributes {dimension_semantics = [#tpu.dimension_semantics<parallel>], iteration_bounds = array<i64: 2>, scalar_prefetch = 0 : i64, scratch_operands = 0 : i64, tpu.core_type = #tpu.core_type<tc>, window_params = [{transform_indices = @transform_0, window_bounds = array<i64: 1, 4, 256>}, {pipeline_mode = #tpu.pipeline_mode<synchronous>, transform_indices = @transform_1, window_bounds = array<i64: 552, 128>}, {pipeline_mode = #tpu.pipeline_mode<synchronous>, transform_indices = @transform_2, window_bounds = array<i64: 120, 1>}, {transform_indices = @transform_3, window_bounds = array<i64: 1, 16, 256>}]} {
    %0 = tpu.iota {dimensions = array<i32: 1>} : vector<1x256xi32>
    %c16_i32 = arith.constant 16 : i32
    %c0_i32 = arith.constant 0 : i32
    %1 = arith.cmpi eq, %c16_i32, %c0_i32 : i32
    %c1_i32 = arith.constant 1 : i32
    %2 = arith.select %1, %c1_i32, %c16_i32 : i32
    %3 = vector.broadcast %2 : i32 to vector<1x256xi32>
    %4 = arith.remsi %0, %3 : vector<1x256xi32>
    %c0_i32_0 = arith.constant 0 : i32
    %5 = vector.broadcast %c0_i32_0 : i32 to vector<1x256xi32>
    %6 = arith.cmpi ne, %4, %5 : vector<1x256xi32>
    %c0_i32_1 = arith.constant 0 : i32
    %7 = vector.broadcast %c0_i32_1 : i32 to vector<1x256xi32>
    %8 = arith.cmpi slt, %4, %7 : vector<1x256xi32>
    %c0_i32_2 = arith.constant 0 : i32
    %9 = arith.cmpi slt, %2, %c0_i32_2 : i32
    %10 = vector.broadcast %9 : i1 to vector<1x256xi1>
    %11 = vector.broadcast %10 : vector<1x256xi1> to vector<1x256xi1>
    %12 = arith.xori %8, %11 : vector<1x256xi1>
    %13 = arith.andi %12, %6 : vector<1x256xi1>
    %14 = vector.broadcast %2 : i32 to vector<1x256xi32>
    %15 = arith.addi %4, %14 : vector<1x256xi32>
    %16 = arith.select %13, %15, %4 : vector<1x256xi1>, vector<1x256xi32>
    %c15_i32 = arith.constant 15 : i32
    %17 = vector.broadcast %c15_i32 : i32 to vector<1x256xi32>
    %18 = arith.cmpi slt, %16, %17 : vector<1x256xi32>
    %c1_i32_3 = arith.constant 1 : i32
    %19 = vector.broadcast %c1_i32_3 : i32 to vector<1x256xi32>
    %20 = arith.cmpi sge, %16, %19 : vector<1x256xi32>
    %c0 = arith.constant 0 : index
    %c0_4 = arith.constant 0 : index
    %c0_5 = arith.constant 0 : index
    %21 = vector.load %arg1[%c0, %c0_4, %c0_5] : memref<1x4x256xbf16, #tpu.memory_space<vmem>>, vector<1x4x256xbf16>
    %22 = vector.shape_cast %21 : vector<1x4x256xbf16> to vector<4x256xbf16>
    %c0_6 = arith.constant 0 : index
    %c0_7 = arith.constant 0 : index
    %23 = vector.load %arg2[%c0_6, %c0_7] : memref<552x128xbf16, #tpu.memory_space<vmem>>, vector<8x4xbf16>
    %cst = arith.constant dense<0.000000e+00> : vector<8x256xf32>
    %24 = tpu.matmul %23, %22, %cst {dimension_numbers = #tpu.dot_dimension_numbers<[1], [0], [0], [1], [0, 0, 1, 1], [], []>} : vector<8x4xbf16>, vector<4x256xbf16>, vector<8x256xf32> -> vector<8x256xf32>
    %c0_8 = arith.constant 0 : index
    %c0_9 = arith.constant 0 : index
    %25 = vector.load %arg3[%c0_8, %c0_9] : memref<120x1xf32, #tpu.memory_space<vmem>>, vector<8x1xf32>
    %26 = vector.broadcast %25 : vector<8x1xf32> to vector<8x256xf32>
    %27 = arith.addf %24, %26 : vector<8x256xf32>
    %28 = arith.negf %27 : vector<8x256xf32>
    %29 = math.exp %28 : vector<8x256xf32>
    %cst_10 = arith.constant 1.000000e+00 : f32
    %30 = vector.broadcast %cst_10 : f32 to vector<8x256xf32>
    %31 = arith.addf %30, %29 : vector<8x256xf32>
    %32 = arith.divf %30, %31 : vector<8x256xf32>
    %33 = arith.mulf %27, %32 : vector<8x256xf32>
    %34 = arith.truncf %33 : vector<8x256xf32> to vector<8x256xbf16>
    %c8 = arith.constant 8 : index
    %c0_11 = arith.constant 0 : index
    %35 = vector.load %arg2[%c8, %c0_11] : memref<552x128xbf16, #tpu.memory_space<vmem>>, vector<16x8xbf16>
    %cst_12 = arith.constant dense<0.000000e+00> : vector<16x256xf32>
    %36 = tpu.matmul %35, %34, %cst_12 {dimension_numbers = #tpu.dot_dimension_numbers<[1], [0], [0], [1], [0, 0, 1, 1], [], []>} : vector<16x8xbf16>, vector<8x256xbf16>, vector<16x256xf32> -> vector<16x256xf32>
    %c8_13 = arith.constant 8 : index
    %c0_14 = arith.constant 0 : index
    %37 = vector.load %arg3[%c8_13, %c0_14] : memref<120x1xf32, #tpu.memory_space<vmem>>, vector<16x1xf32>
    %38 = vector.broadcast %37 : vector<16x1xf32> to vector<16x256xf32>
    %39 = arith.addf %36, %38 : vector<16x256xf32>
    %40 = arith.negf %39 : vector<16x256xf32>
    %41 = math.exp %40 : vector<16x256xf32>
    %cst_15 = arith.constant 1.000000e+00 : f32
    %42 = vector.broadcast %cst_15 : f32 to vector<16x256xf32>
    %43 = arith.addf %42, %41 : vector<16x256xf32>
    %44 = arith.divf %42, %43 : vector<16x256xf32>
    %45 = arith.mulf %39, %44 : vector<16x256xf32>
    %46 = vector.extract_strided_slice %45 {offsets = [0, 0], sizes = [8, 256], strides = [1, 1]} : vector<16x256xf32> to vector<8x256xf32>
    %47 = vector.extract_strided_slice %45 {offsets = [8, 0], sizes = [8, 256], strides = [1, 1]} : vector<16x256xf32> to vector<8x256xf32>
    %48 = arith.truncf %47 : vector<8x256xf32> to vector<8x256xbf16>
    %49 = arith.truncf %46 : vector<8x256xf32> to vector<8x256xbf16>
    %c24 = arith.constant 24 : index
    %c0_16 = arith.constant 0 : index
    %50 = vector.load %arg3[%c24, %c0_16] : memref<120x1xf32, #tpu.memory_space<vmem>>, vector<8x1xf32>
    %cst_17 = arith.constant 0.000000e+00 : bf16
    %51 = vector.broadcast %cst_17 : bf16 to vector<8x17xbf16>
    %52 = tpu.concatenate %51, %49, %51 in 1 : vector<8x17xbf16>, vector<8x256xbf16>, vector<8x17xbf16> -> vector<8x290xbf16>
    %53 = vector.extract_strided_slice %52 {offsets = [0, 0], sizes = [8, 256], strides = [1, 1]} : vector<8x290xbf16> to vector<8x256xbf16>
    %cst_18 = arith.constant 0.000000e+00 : bf16
    %54 = vector.shape_cast %20 : vector<1x256xi1> to vector<1x256xi1>
    %55 = vector.broadcast %54 : vector<1x256xi1> to vector<8x256xi1>
    %56 = vector.broadcast %cst_18 : bf16 to vector<8x256xbf16>
    %57 = arith.select %55, %53, %56 : vector<8x256xi1>, vector<8x256xbf16>
    %c24_19 = arith.constant 24 : index
    %c0_20 = arith.constant 0 : index
    %58 = vector.load %arg2[%c24_19, %c0_20] : memref<552x128xbf16, #tpu.memory_space<vmem>>, vector<8x8xbf16>
    %cst_21 = arith.constant dense<0.000000e+00> : vector<8x256xf32>
    %59 = tpu.matmul %58, %57, %cst_21 {dimension_numbers = #tpu.dot_dimension_numbers<[1], [0], [0], [1], [0, 0, 1, 1], [], []>} : vector<8x8xbf16>, vector<8x256xbf16>, vector<8x256xf32> -> vector<8x256xf32>
    %60 = vector.extract_strided_slice %52 {offsets = [0, 1], sizes = [8, 256], strides = [1, 1]} : vector<8x290xbf16> to vector<8x256xbf16>
    %c32 = arith.constant 32 : index
    %c0_22 = arith.constant 0 : index
    %61 = vector.load %arg2[%c32, %c0_22] : memref<552x128xbf16, #tpu.memory_space<vmem>>, vector<8x8xbf16>
    %cst_23 = arith.constant dense<0.000000e+00> : vector<8x256xf32>
    %62 = tpu.matmul %61, %60, %cst_23 {dimension_numbers = #tpu.dot_dimension_numbers<[1], [0], [0], [1], [0, 0, 1, 1], [], []>} : vector<8x8xbf16>, vector<8x256xbf16>, vector<8x256xf32> -> vector<8x256xf32>
    %63 = arith.addf %59, %62 : vector<8x256xf32>
    %64 = vector.extract_strided_slice %52 {offsets = [0, 2], sizes = [8, 256], strides = [1, 1]} : vector<8x290xbf16> to vector<8x256xbf16>
    %cst_24 = arith.constant 0.000000e+00 : bf16
    %65 = vector.shape_cast %18 : vector<1x256xi1> to vector<1x256xi1>
    %66 = vector.broadcast %65 : vector<1x256xi1> to vector<8x256xi1>
    %67 = vector.broadcast %cst_24 : bf16 to vector<8x256xbf16>
    %68 = arith.select %66, %64, %67 : vector<8x256xi1>, vector<8x256xbf16>
    %c40 = arith.constant 40 : index
    %c0_25 = arith.constant 0 : index
    %69 = vector.load %arg2[%c40, %c0_25] : memref<552x128xbf16, #tpu.memory_space<vmem>>, vector<8x8xbf16>
    %cst_26 = arith.constant dense<0.000000e+00> : vector<8x256xf32>
    %70 = tpu.matmul %69, %68, %cst_26 {dimension_numbers = #tpu.dot_dimension_numbers<[1], [0], [0], [1], [0, 0, 1, 1], [], []>} : vector<8x8xbf16>, vector<8x256xbf16>, vector<8x256xf32> -> vector<8x256xf32>
    %71 = arith.addf %63, %70 : vector<8x256xf32>
    %72 = vector.extract_strided_slice %52 {offsets = [0, 16], sizes = [8, 256], strides = [1, 1]} : vector<8x290xbf16> to vector<8x256xbf16>
    %cst_27 = arith.constant 0.000000e+00 : bf16
    %73 = vector.shape_cast %20 : vector<1x256xi1> to vector<1x256xi1>
    %74 = vector.broadcast %73 : vector<1x256xi1> to vector<8x256xi1>
    %75 = vector.broadcast %cst_27 : bf16 to vector<8x256xbf16>
    %76 = arith.select %74, %72, %75 : vector<8x256xi1>, vector<8x256xbf16>
    %c48 = arith.constant 48 : index
    %c0_28 = arith.constant 0 : index
    %77 = vector.load %arg2[%c48, %c0_28] : memref<552x128xbf16, #tpu.memory_space<vmem>>, vector<8x8xbf16>
    %cst_29 = arith.constant dense<0.000000e+00> : vector<8x256xf32>
    %78 = tpu.matmul %77, %76, %cst_29 {dimension_numbers = #tpu.dot_dimension_numbers<[1], [0], [0], [1], [0, 0, 1, 1], [], []>} : vector<8x8xbf16>, vector<8x256xbf16>, vector<8x256xf32> -> vector<8x256xf32>
    %79 = arith.addf %71, %78 : vector<8x256xf32>
    %80 = vector.extract_strided_slice %52 {offsets = [0, 17], sizes = [8, 256], strides = [1, 1]} : vector<8x290xbf16> to vector<8x256xbf16>
    %c56 = arith.constant 56 : index
    %c0_30 = arith.constant 0 : index
    %81 = vector.load %arg2[%c56, %c0_30] : memref<552x128xbf16, #tpu.memory_space<vmem>>, vector<8x8xbf16>
    %cst_31 = arith.constant dense<0.000000e+00> : vector<8x256xf32>
    %82 = tpu.matmul %81, %80, %cst_31 {dimension_numbers = #tpu.dot_dimension_numbers<[1], [0], [0], [1], [0, 0, 1, 1], [], []>} : vector<8x8xbf16>, vector<8x256xbf16>, vector<8x256xf32> -> vector<8x256xf32>
    %83 = arith.addf %79, %82 : vector<8x256xf32>
    %84 = vector.extract_strided_slice %52 {offsets = [0, 18], sizes = [8, 256], strides = [1, 1]} : vector<8x290xbf16> to vector<8x256xbf16>
    %cst_32 = arith.constant 0.000000e+00 : bf16
    %85 = vector.shape_cast %18 : vector<1x256xi1> to vector<1x256xi1>
    %86 = vector.broadcast %85 : vector<1x256xi1> to vector<8x256xi1>
    %87 = vector.broadcast %cst_32 : bf16 to vector<8x256xbf16>
    %88 = arith.select %86, %84, %87 : vector<8x256xi1>, vector<8x256xbf16>
    %c64 = arith.constant 64 : index
    %c0_33 = arith.constant 0 : index
    %89 = vector.load %arg2[%c64, %c0_33] : memref<552x128xbf16, #tpu.memory_space<vmem>>, vector<8x8xbf16>
    %cst_34 = arith.constant dense<0.000000e+00> : vector<8x256xf32>
    %90 = tpu.matmul %89, %88, %cst_34 {dimension_numbers = #tpu.dot_dimension_numbers<[1], [0], [0], [1], [0, 0, 1, 1], [], []>} : vector<8x8xbf16>, vector<8x256xbf16>, vector<8x256xf32> -> vector<8x256xf32>
    %91 = arith.addf %83, %90 : vector<8x256xf32>
    %92 = vector.extract_strided_slice %52 {offsets = [0, 32], sizes = [8, 256], strides = [1, 1]} : vector<8x290xbf16> to vector<8x256xbf16>
    %cst_35 = arith.constant 0.000000e+00 : bf16
    %93 = vector.shape_cast %20 : vector<1x256xi1> to vector<1x256xi1>
    %94 = vector.broadcast %93 : vector<1x256xi1> to vector<8x256xi1>
    %95 = vector.broadcast %cst_35 : bf16 to vector<8x256xbf16>
    %96 = arith.select %94, %92, %95 : vector<8x256xi1>, vector<8x256xbf16>
    %c72 = arith.constant 72 : index
    %c0_36 = arith.constant 0 : index
    %97 = vector.load %arg2[%c72, %c0_36] : memref<552x128xbf16, #tpu.memory_space<vmem>>, vector<8x8xbf16>
    %cst_37 = arith.constant dense<0.000000e+00> : vector<8x256xf32>
    %98 = tpu.matmul %97, %96, %cst_37 {dimension_numbers = #tpu.dot_dimension_numbers<[1], [0], [0], [1], [0, 0, 1, 1], [], []>} : vector<8x8xbf16>, vector<8x256xbf16>, vector<8x256xf32> -> vector<8x256xf32>
    %99 = arith.addf %91, %98 : vector<8x256xf32>
    %100 = vector.extract_strided_slice %52 {offsets = [0, 33], sizes = [8, 256], strides = [1, 1]} : vector<8x290xbf16> to vector<8x256xbf16>
    %c80 = arith.constant 80 : index
    %c0_38 = arith.constant 0 : index
    %101 = vector.load %arg2[%c80, %c0_38] : memref<552x128xbf16, #tpu.memory_space<vmem>>, vector<8x8xbf16>
    %cst_39 = arith.constant dense<0.000000e+00> : vector<8x256xf32>
    %102 = tpu.matmul %101, %100, %cst_39 {dimension_numbers = #tpu.dot_dimension_numbers<[1], [0], [0], [1], [0, 0, 1, 1], [], []>} : vector<8x8xbf16>, vector<8x256xbf16>, vector<8x256xf32> -> vector<8x256xf32>
    %103 = arith.addf %99, %102 : vector<8x256xf32>
    %104 = vector.extract_strided_slice %52 {offsets = [0, 34], sizes = [8, 256], strides = [1, 1]} : vector<8x290xbf16> to vector<8x256xbf16>
    %cst_40 = arith.constant 0.000000e+00 : bf16
    %105 = vector.shape_cast %18 : vector<1x256xi1> to vector<1x256xi1>
    %106 = vector.broadcast %105 : vector<1x256xi1> to vector<8x256xi1>
    %107 = vector.broadcast %cst_40 : bf16 to vector<8x256xbf16>
    %108 = arith.select %106, %104, %107 : vector<8x256xi1>, vector<8x256xbf16>
    %c88 = arith.constant 88 : index
    %c0_41 = arith.constant 0 : index
    %109 = vector.load %arg2[%c88, %c0_41] : memref<552x128xbf16, #tpu.memory_space<vmem>>, vector<8x8xbf16>
    %cst_42 = arith.constant dense<0.000000e+00> : vector<8x256xf32>
    %110 = tpu.matmul %109, %108, %cst_42 {dimension_numbers = #tpu.dot_dimension_numbers<[1], [0], [0], [1], [0, 0, 1, 1], [], []>} : vector<8x8xbf16>, vector<8x256xbf16>, vector<8x256xf32> -> vector<8x256xf32>
    %111 = arith.addf %103, %110 : vector<8x256xf32>
    %112 = vector.broadcast %50 : vector<8x1xf32> to vector<8x256xf32>
    %113 = arith.addf %111, %112 : vector<8x256xf32>
    %114 = arith.negf %113 : vector<8x256xf32>
    %115 = math.exp %114 : vector<8x256xf32>
    %cst_43 = arith.constant 1.000000e+00 : f32
    %116 = vector.broadcast %cst_43 : f32 to vector<8x256xf32>
    %117 = arith.addf %116, %115 : vector<8x256xf32>
    %118 = arith.divf %116, %117 : vector<8x256xf32>
    %119 = arith.mulf %113, %118 : vector<8x256xf32>
    %120 = arith.truncf %119 : vector<8x256xf32> to vector<8x256xbf16>
    %c32_44 = arith.constant 32 : index
    %c0_45 = arith.constant 0 : index
    %121 = vector.load %arg3[%c32_44, %c0_45] : memref<120x1xf32, #tpu.memory_space<vmem>>, vector<8x1xf32>
    %cst_46 = arith.constant 0.000000e+00 : bf16
    %122 = vector.broadcast %cst_46 : bf16 to vector<8x17xbf16>
    %123 = tpu.concatenate %122, %120, %122 in 1 : vector<8x17xbf16>, vector<8x256xbf16>, vector<8x17xbf16> -> vector<8x290xbf16>
    %124 = vector.extract_strided_slice %123 {offsets = [0, 0], sizes = [8, 256], strides = [1, 1]} : vector<8x290xbf16> to vector<8x256xbf16>
    %cst_47 = arith.constant 0.000000e+00 : bf16
    %125 = vector.shape_cast %20 : vector<1x256xi1> to vector<1x256xi1>
    %126 = vector.broadcast %125 : vector<1x256xi1> to vector<8x256xi1>
    %127 = vector.broadcast %cst_47 : bf16 to vector<8x256xbf16>
    %128 = arith.select %126, %124, %127 : vector<8x256xi1>, vector<8x256xbf16>
    %c96 = arith.constant 96 : index
    %c0_48 = arith.constant 0 : index
    %129 = vector.load %arg2[%c96, %c0_48] : memref<552x128xbf16, #tpu.memory_space<vmem>>, vector<8x8xbf16>
    %cst_49 = arith.constant dense<0.000000e+00> : vector<8x256xf32>
    %130 = tpu.matmul %129, %128, %cst_49 {dimension_numbers = #tpu.dot_dimension_numbers<[1], [0], [0], [1], [0, 0, 1, 1], [], []>} : vector<8x8xbf16>, vector<8x256xbf16>, vector<8x256xf32> -> vector<8x256xf32>
    %131 = vector.extract_strided_slice %123 {offsets = [0, 1], sizes = [8, 256], strides = [1, 1]} : vector<8x290xbf16> to vector<8x256xbf16>
    %c104 = arith.constant 104 : index
    %c0_50 = arith.constant 0 : index
    %132 = vector.load %arg2[%c104, %c0_50] : memref<552x128xbf16, #tpu.memory_space<vmem>>, vector<8x8xbf16>
    %cst_51 = arith.constant dense<0.000000e+00> : vector<8x256xf32>
    %133 = tpu.matmul %132, %131, %cst_51 {dimension_numbers = #tpu.dot_dimension_numbers<[1], [0], [0], [1], [0, 0, 1, 1], [], []>} : vector<8x8xbf16>, vector<8x256xbf16>, vector<8x256xf32> -> vector<8x256xf32>
    %134 = arith.addf %130, %133 : vector<8x256xf32>
    %135 = vector.extract_strided_slice %123 {offsets = [0, 2], sizes = [8, 256], strides = [1, 1]} : vector<8x290xbf16> to vector<8x256xbf16>
    %cst_52 = arith.constant 0.000000e+00 : bf16
    %136 = vector.shape_cast %18 : vector<1x256xi1> to vector<1x256xi1>
    %137 = vector.broadcast %136 : vector<1x256xi1> to vector<8x256xi1>
    %138 = vector.broadcast %cst_52 : bf16 to vector<8x256xbf16>
    %139 = arith.select %137, %135, %138 : vector<8x256xi1>, vector<8x256xbf16>
    %c112 = arith.constant 112 : index
    %c0_53 = arith.constant 0 : index
    %140 = vector.load %arg2[%c112, %c0_53] : memref<552x128xbf16, #tpu.memory_space<vmem>>, vector<8x8xbf16>
    %cst_54 = arith.constant dense<0.000000e+00> : vector<8x256xf32>
    %141 = tpu.matmul %140, %139, %cst_54 {dimension_numbers = #tpu.dot_dimension_numbers<[1], [0], [0], [1], [0, 0, 1, 1], [], []>} : vector<8x8xbf16>, vector<8x256xbf16>, vector<8x256xf32> -> vector<8x256xf32>
    %142 = arith.addf %134, %141 : vector<8x256xf32>
    %143 = vector.extract_strided_slice %123 {offsets = [0, 16], sizes = [8, 256], strides = [1, 1]} : vector<8x290xbf16> to vector<8x256xbf16>
    %cst_55 = arith.constant 0.000000e+00 : bf16
    %144 = vector.shape_cast %20 : vector<1x256xi1> to vector<1x256xi1>
    %145 = vector.broadcast %144 : vector<1x256xi1> to vector<8x256xi1>
    %146 = vector.broadcast %cst_55 : bf16 to vector<8x256xbf16>
    %147 = arith.select %145, %143, %146 : vector<8x256xi1>, vector<8x256xbf16>
    %c120 = arith.constant 120 : index
    %c0_56 = arith.constant 0 : index
    %148 = vector.load %arg2[%c120, %c0_56] : memref<552x128xbf16, #tpu.memory_space<vmem>>, vector<8x8xbf16>
    %cst_57 = arith.constant dense<0.000000e+00> : vector<8x256xf32>
    %149 = tpu.matmul %148, %147, %cst_57 {dimension_numbers = #tpu.dot_dimension_numbers<[1], [0], [0], [1], [0, 0, 1, 1], [], []>} : vector<8x8xbf16>, vector<8x256xbf16>, vector<8x256xf32> -> vector<8x256xf32>
    %150 = arith.addf %142, %149 : vector<8x256xf32>
    %151 = vector.extract_strided_slice %123 {offsets = [0, 17], sizes = [8, 256], strides = [1, 1]} : vector<8x290xbf16> to vector<8x256xbf16>
    %c128 = arith.constant 128 : index
    %c0_58 = arith.constant 0 : index
    %152 = vector.load %arg2[%c128, %c0_58] : memref<552x128xbf16, #tpu.memory_space<vmem>>, vector<8x8xbf16>
    %cst_59 = arith.constant dense<0.000000e+00> : vector<8x256xf32>
    %153 = tpu.matmul %152, %151, %cst_59 {dimension_numbers = #tpu.dot_dimension_numbers<[1], [0], [0], [1], [0, 0, 1, 1], [], []>} : vector<8x8xbf16>, vector<8x256xbf16>, vector<8x256xf32> -> vector<8x256xf32>
    %154 = arith.addf %150, %153 : vector<8x256xf32>
    %155 = vector.extract_strided_slice %123 {offsets = [0, 18], sizes = [8, 256], strides = [1, 1]} : vector<8x290xbf16> to vector<8x256xbf16>
    %cst_60 = arith.constant 0.000000e+00 : bf16
    %156 = vector.shape_cast %18 : vector<1x256xi1> to vector<1x256xi1>
    %157 = vector.broadcast %156 : vector<1x256xi1> to vector<8x256xi1>
    %158 = vector.broadcast %cst_60 : bf16 to vector<8x256xbf16>
    %159 = arith.select %157, %155, %158 : vector<8x256xi1>, vector<8x256xbf16>
    %c136 = arith.constant 136 : index
    %c0_61 = arith.constant 0 : index
    %160 = vector.load %arg2[%c136, %c0_61] : memref<552x128xbf16, #tpu.memory_space<vmem>>, vector<8x8xbf16>
    %cst_62 = arith.constant dense<0.000000e+00> : vector<8x256xf32>
    %161 = tpu.matmul %160, %159, %cst_62 {dimension_numbers = #tpu.dot_dimension_numbers<[1], [0], [0], [1], [0, 0, 1, 1], [], []>} : vector<8x8xbf16>, vector<8x256xbf16>, vector<8x256xf32> -> vector<8x256xf32>
    %162 = arith.addf %154, %161 : vector<8x256xf32>
    %163 = vector.extract_strided_slice %123 {offsets = [0, 32], sizes = [8, 256], strides = [1, 1]} : vector<8x290xbf16> to vector<8x256xbf16>
    %cst_63 = arith.constant 0.000000e+00 : bf16
    %164 = vector.shape_cast %20 : vector<1x256xi1> to vector<1x256xi1>
    %165 = vector.broadcast %164 : vector<1x256xi1> to vector<8x256xi1>
    %166 = vector.broadcast %cst_63 : bf16 to vector<8x256xbf16>
    %167 = arith.select %165, %163, %166 : vector<8x256xi1>, vector<8x256xbf16>
    %c144 = arith.constant 144 : index
    %c0_64 = arith.constant 0 : index
    %168 = vector.load %arg2[%c144, %c0_64] : memref<552x128xbf16, #tpu.memory_space<vmem>>, vector<8x8xbf16>
    %cst_65 = arith.constant dense<0.000000e+00> : vector<8x256xf32>
    %169 = tpu.matmul %168, %167, %cst_65 {dimension_numbers = #tpu.dot_dimension_numbers<[1], [0], [0], [1], [0, 0, 1, 1], [], []>} : vector<8x8xbf16>, vector<8x256xbf16>, vector<8x256xf32> -> vector<8x256xf32>
    %170 = arith.addf %162, %169 : vector<8x256xf32>
    %171 = vector.extract_strided_slice %123 {offsets = [0, 33], sizes = [8, 256], strides = [1, 1]} : vector<8x290xbf16> to vector<8x256xbf16>
    %c152 = arith.constant 152 : index
    %c0_66 = arith.constant 0 : index
    %172 = vector.load %arg2[%c152, %c0_66] : memref<552x128xbf16, #tpu.memory_space<vmem>>, vector<8x8xbf16>
    %cst_67 = arith.constant dense<0.000000e+00> : vector<8x256xf32>
    %173 = tpu.matmul %172, %171, %cst_67 {dimension_numbers = #tpu.dot_dimension_numbers<[1], [0], [0], [1], [0, 0, 1, 1], [], []>} : vector<8x8xbf16>, vector<8x256xbf16>, vector<8x256xf32> -> vector<8x256xf32>
    %174 = arith.addf %170, %173 : vector<8x256xf32>
    %175 = vector.extract_strided_slice %123 {offsets = [0, 34], sizes = [8, 256], strides = [1, 1]} : vector<8x290xbf16> to vector<8x256xbf16>
    %cst_68 = arith.constant 0.000000e+00 : bf16
    %176 = vector.shape_cast %18 : vector<1x256xi1> to vector<1x256xi1>
    %177 = vector.broadcast %176 : vector<1x256xi1> to vector<8x256xi1>
    %178 = vector.broadcast %cst_68 : bf16 to vector<8x256xbf16>
    %179 = arith.select %177, %175, %178 : vector<8x256xi1>, vector<8x256xbf16>
    %c160 = arith.constant 160 : index
    %c0_69 = arith.constant 0 : index
    %180 = vector.load %arg2[%c160, %c0_69] : memref<552x128xbf16, #tpu.memory_space<vmem>>, vector<8x8xbf16>
    %cst_70 = arith.constant dense<0.000000e+00> : vector<8x256xf32>
    %181 = tpu.matmul %180, %179, %cst_70 {dimension_numbers = #tpu.dot_dimension_numbers<[1], [0], [0], [1], [0, 0, 1, 1], [], []>} : vector<8x8xbf16>, vector<8x256xbf16>, vector<8x256xf32> -> vector<8x256xf32>
    %182 = arith.addf %174, %181 : vector<8x256xf32>
    %183 = vector.broadcast %121 : vector<8x1xf32> to vector<8x256xf32>
    %184 = arith.addf %182, %183 : vector<8x256xf32>
    %185 = arith.negf %184 : vector<8x256xf32>
    %186 = math.exp %185 : vector<8x256xf32>
    %cst_71 = arith.constant 1.000000e+00 : f32
    %187 = vector.broadcast %cst_71 : f32 to vector<8x256xf32>
    %188 = arith.addf %187, %186 : vector<8x256xf32>
    %189 = arith.divf %187, %188 : vector<8x256xf32>
    %190 = arith.mulf %184, %189 : vector<8x256xf32>
    %191 = arith.addf %46, %190 : vector<8x256xf32>
    %c168 = arith.constant 168 : index
    %c0_72 = arith.constant 0 : index
    %192 = vector.load %arg2[%c168, %c0_72] : memref<552x128xbf16, #tpu.memory_space<vmem>>, vector<8x8xbf16>
    %193 = arith.truncf %191 : vector<8x256xf32> to vector<8x256xbf16>
    %cst_73 = arith.constant dense<0.000000e+00> : vector<8x256xf32>
    %194 = tpu.matmul %192, %193, %cst_73 {dimension_numbers = #tpu.dot_dimension_numbers<[1], [0], [0], [1], [0, 0, 1, 1], [], []>} : vector<8x8xbf16>, vector<8x256xbf16>, vector<8x256xf32> -> vector<8x256xf32>
    %c176 = arith.constant 176 : index
    %c0_74 = arith.constant 0 : index
    %195 = vector.load %arg2[%c176, %c0_74] : memref<552x128xbf16, #tpu.memory_space<vmem>>, vector<8x8xbf16>
    %cst_75 = arith.constant dense<0.000000e+00> : vector<8x256xf32>
    %196 = tpu.matmul %195, %48, %cst_75 {dimension_numbers = #tpu.dot_dimension_numbers<[1], [0], [0], [1], [0, 0, 1, 1], [], []>} : vector<8x8xbf16>, vector<8x256xbf16>, vector<8x256xf32> -> vector<8x256xf32>
    %197 = arith.addf %194, %196 : vector<8x256xf32>
    %c40_76 = arith.constant 40 : index
    %c0_77 = arith.constant 0 : index
    %198 = vector.load %arg3[%c40_76, %c0_77] : memref<120x1xf32, #tpu.memory_space<vmem>>, vector<8x1xf32>
    %199 = vector.broadcast %198 : vector<8x1xf32> to vector<8x256xf32>
    %200 = arith.addf %197, %199 : vector<8x256xf32>
    %201 = arith.negf %200 : vector<8x256xf32>
    %202 = math.exp %201 : vector<8x256xf32>
    %cst_78 = arith.constant 1.000000e+00 : f32
    %203 = vector.broadcast %cst_78 : f32 to vector<8x256xf32>
    %204 = arith.addf %203, %202 : vector<8x256xf32>
    %205 = arith.divf %203, %204 : vector<8x256xf32>
    %206 = arith.mulf %200, %205 : vector<8x256xf32>
    %207 = arith.truncf %206 : vector<8x256xf32> to vector<8x256xbf16>
    %c48_79 = arith.constant 48 : index
    %c0_80 = arith.constant 0 : index
    %208 = vector.load %arg3[%c48_79, %c0_80] : memref<120x1xf32, #tpu.memory_space<vmem>>, vector<8x1xf32>
    %cst_81 = arith.constant 0.000000e+00 : bf16
    %209 = vector.broadcast %cst_81 : bf16 to vector<8x17xbf16>
    %210 = tpu.concatenate %209, %207, %209 in 1 : vector<8x17xbf16>, vector<8x256xbf16>, vector<8x17xbf16> -> vector<8x290xbf16>
    %211 = vector.extract_strided_slice %210 {offsets = [0, 0], sizes = [8, 256], strides = [1, 1]} : vector<8x290xbf16> to vector<8x256xbf16>
    %cst_82 = arith.constant 0.000000e+00 : bf16
    %212 = vector.shape_cast %20 : vector<1x256xi1> to vector<1x256xi1>
    %213 = vector.broadcast %212 : vector<1x256xi1> to vector<8x256xi1>
    %214 = vector.broadcast %cst_82 : bf16 to vector<8x256xbf16>
    %215 = arith.select %213, %211, %214 : vector<8x256xi1>, vector<8x256xbf16>
    %c184 = arith.constant 184 : index
    %c0_83 = arith.constant 0 : index
    %216 = vector.load %arg2[%c184, %c0_83] : memref<552x128xbf16, #tpu.memory_space<vmem>>, vector<8x8xbf16>
    %cst_84 = arith.constant dense<0.000000e+00> : vector<8x256xf32>
    %217 = tpu.matmul %216, %215, %cst_84 {dimension_numbers = #tpu.dot_dimension_numbers<[1], [0], [0], [1], [0, 0, 1, 1], [], []>} : vector<8x8xbf16>, vector<8x256xbf16>, vector<8x256xf32> -> vector<8x256xf32>
    %218 = vector.extract_strided_slice %210 {offsets = [0, 1], sizes = [8, 256], strides = [1, 1]} : vector<8x290xbf16> to vector<8x256xbf16>
    %c192 = arith.constant 192 : index
    %c0_85 = arith.constant 0 : index
    %219 = vector.load %arg2[%c192, %c0_85] : memref<552x128xbf16, #tpu.memory_space<vmem>>, vector<8x8xbf16>
    %cst_86 = arith.constant dense<0.000000e+00> : vector<8x256xf32>
    %220 = tpu.matmul %219, %218, %cst_86 {dimension_numbers = #tpu.dot_dimension_numbers<[1], [0], [0], [1], [0, 0, 1, 1], [], []>} : vector<8x8xbf16>, vector<8x256xbf16>, vector<8x256xf32> -> vector<8x256xf32>
    %221 = arith.addf %217, %220 : vector<8x256xf32>
    %222 = vector.extract_strided_slice %210 {offsets = [0, 2], sizes = [8, 256], strides = [1, 1]} : vector<8x290xbf16> to vector<8x256xbf16>
    %cst_87 = arith.constant 0.000000e+00 : bf16
    %223 = vector.shape_cast %18 : vector<1x256xi1> to vector<1x256xi1>
    %224 = vector.broadcast %223 : vector<1x256xi1> to vector<8x256xi1>
    %225 = vector.broadcast %cst_87 : bf16 to vector<8x256xbf16>
    %226 = arith.select %224, %222, %225 : vector<8x256xi1>, vector<8x256xbf16>
    %c200 = arith.constant 200 : index
    %c0_88 = arith.constant 0 : index
    %227 = vector.load %arg2[%c200, %c0_88] : memref<552x128xbf16, #tpu.memory_space<vmem>>, vector<8x8xbf16>
    %cst_89 = arith.constant dense<0.000000e+00> : vector<8x256xf32>
    %228 = tpu.matmul %227, %226, %cst_89 {dimension_numbers = #tpu.dot_dimension_numbers<[1], [0], [0], [1], [0, 0, 1, 1], [], []>} : vector<8x8xbf16>, vector<8x256xbf16>, vector<8x256xf32> -> vector<8x256xf32>
    %229 = arith.addf %221, %228 : vector<8x256xf32>
    %230 = vector.extract_strided_slice %210 {offsets = [0, 16], sizes = [8, 256], strides = [1, 1]} : vector<8x290xbf16> to vector<8x256xbf16>
    %cst_90 = arith.constant 0.000000e+00 : bf16
    %231 = vector.shape_cast %20 : vector<1x256xi1> to vector<1x256xi1>
    %232 = vector.broadcast %231 : vector<1x256xi1> to vector<8x256xi1>
    %233 = vector.broadcast %cst_90 : bf16 to vector<8x256xbf16>
    %234 = arith.select %232, %230, %233 : vector<8x256xi1>, vector<8x256xbf16>
    %c208 = arith.constant 208 : index
    %c0_91 = arith.constant 0 : index
    %235 = vector.load %arg2[%c208, %c0_91] : memref<552x128xbf16, #tpu.memory_space<vmem>>, vector<8x8xbf16>
    %cst_92 = arith.constant dense<0.000000e+00> : vector<8x256xf32>
    %236 = tpu.matmul %235, %234, %cst_92 {dimension_numbers = #tpu.dot_dimension_numbers<[1], [0], [0], [1], [0, 0, 1, 1], [], []>} : vector<8x8xbf16>, vector<8x256xbf16>, vector<8x256xf32> -> vector<8x256xf32>
    %237 = arith.addf %229, %236 : vector<8x256xf32>
    %238 = vector.extract_strided_slice %210 {offsets = [0, 17], sizes = [8, 256], strides = [1, 1]} : vector<8x290xbf16> to vector<8x256xbf16>
    %c216 = arith.constant 216 : index
    %c0_93 = arith.constant 0 : index
    %239 = vector.load %arg2[%c216, %c0_93] : memref<552x128xbf16, #tpu.memory_space<vmem>>, vector<8x8xbf16>
    %cst_94 = arith.constant dense<0.000000e+00> : vector<8x256xf32>
    %240 = tpu.matmul %239, %238, %cst_94 {dimension_numbers = #tpu.dot_dimension_numbers<[1], [0], [0], [1], [0, 0, 1, 1], [], []>} : vector<8x8xbf16>, vector<8x256xbf16>, vector<8x256xf32> -> vector<8x256xf32>
    %241 = arith.addf %237, %240 : vector<8x256xf32>
    %242 = vector.extract_strided_slice %210 {offsets = [0, 18], sizes = [8, 256], strides = [1, 1]} : vector<8x290xbf16> to vector<8x256xbf16>
    %cst_95 = arith.constant 0.000000e+00 : bf16
    %243 = vector.shape_cast %18 : vector<1x256xi1> to vector<1x256xi1>
    %244 = vector.broadcast %243 : vector<1x256xi1> to vector<8x256xi1>
    %245 = vector.broadcast %cst_95 : bf16 to vector<8x256xbf16>
    %246 = arith.select %244, %242, %245 : vector<8x256xi1>, vector<8x256xbf16>
    %c224 = arith.constant 224 : index
    %c0_96 = arith.constant 0 : index
    %247 = vector.load %arg2[%c224, %c0_96] : memref<552x128xbf16, #tpu.memory_space<vmem>>, vector<8x8xbf16>
    %cst_97 = arith.constant dense<0.000000e+00> : vector<8x256xf32>
    %248 = tpu.matmul %247, %246, %cst_97 {dimension_numbers = #tpu.dot_dimension_numbers<[1], [0], [0], [1], [0, 0, 1, 1], [], []>} : vector<8x8xbf16>, vector<8x256xbf16>, vector<8x256xf32> -> vector<8x256xf32>
    %249 = arith.addf %241, %248 : vector<8x256xf32>
    %250 = vector.extract_strided_slice %210 {offsets = [0, 32], sizes = [8, 256], strides = [1, 1]} : vector<8x290xbf16> to vector<8x256xbf16>
    %cst_98 = arith.constant 0.000000e+00 : bf16
    %251 = vector.shape_cast %20 : vector<1x256xi1> to vector<1x256xi1>
    %252 = vector.broadcast %251 : vector<1x256xi1> to vector<8x256xi1>
    %253 = vector.broadcast %cst_98 : bf16 to vector<8x256xbf16>
    %254 = arith.select %252, %250, %253 : vector<8x256xi1>, vector<8x256xbf16>
    %c232 = arith.constant 232 : index
    %c0_99 = arith.constant 0 : index
    %255 = vector.load %arg2[%c232, %c0_99] : memref<552x128xbf16, #tpu.memory_space<vmem>>, vector<8x8xbf16>
    %cst_100 = arith.constant dense<0.000000e+00> : vector<8x256xf32>
    %256 = tpu.matmul %255, %254, %cst_100 {dimension_numbers = #tpu.dot_dimension_numbers<[1], [0], [0], [1], [0, 0, 1, 1], [], []>} : vector<8x8xbf16>, vector<8x256xbf16>, vector<8x256xf32> -> vector<8x256xf32>
    %257 = arith.addf %249, %256 : vector<8x256xf32>
    %258 = vector.extract_strided_slice %210 {offsets = [0, 33], sizes = [8, 256], strides = [1, 1]} : vector<8x290xbf16> to vector<8x256xbf16>
    %c240 = arith.constant 240 : index
    %c0_101 = arith.constant 0 : index
    %259 = vector.load %arg2[%c240, %c0_101] : memref<552x128xbf16, #tpu.memory_space<vmem>>, vector<8x8xbf16>
    %cst_102 = arith.constant dense<0.000000e+00> : vector<8x256xf32>
    %260 = tpu.matmul %259, %258, %cst_102 {dimension_numbers = #tpu.dot_dimension_numbers<[1], [0], [0], [1], [0, 0, 1, 1], [], []>} : vector<8x8xbf16>, vector<8x256xbf16>, vector<8x256xf32> -> vector<8x256xf32>
    %261 = arith.addf %257, %260 : vector<8x256xf32>
    %262 = vector.extract_strided_slice %210 {offsets = [0, 34], sizes = [8, 256], strides = [1, 1]} : vector<8x290xbf16> to vector<8x256xbf16>
    %cst_103 = arith.constant 0.000000e+00 : bf16
    %263 = vector.shape_cast %18 : vector<1x256xi1> to vector<1x256xi1>
    %264 = vector.broadcast %263 : vector<1x256xi1> to vector<8x256xi1>
    %265 = vector.broadcast %cst_103 : bf16 to vector<8x256xbf16>
    %266 = arith.select %264, %262, %265 : vector<8x256xi1>, vector<8x256xbf16>
    %c248 = arith.constant 248 : index
    %c0_104 = arith.constant 0 : index
    %267 = vector.load %arg2[%c248, %c0_104] : memref<552x128xbf16, #tpu.memory_space<vmem>>, vector<8x8xbf16>
    %cst_105 = arith.constant dense<0.000000e+00> : vector<8x256xf32>
    %268 = tpu.matmul %267, %266, %cst_105 {dimension_numbers = #tpu.dot_dimension_numbers<[1], [0], [0], [1], [0, 0, 1, 1], [], []>} : vector<8x8xbf16>, vector<8x256xbf16>, vector<8x256xf32> -> vector<8x256xf32>
    %269 = arith.addf %261, %268 : vector<8x256xf32>
    %270 = vector.broadcast %208 : vector<8x1xf32> to vector<8x256xf32>
    %271 = arith.addf %269, %270 : vector<8x256xf32>
    %272 = arith.negf %271 : vector<8x256xf32>
    %273 = math.exp %272 : vector<8x256xf32>
    %cst_106 = arith.constant 1.000000e+00 : f32
    %274 = vector.broadcast %cst_106 : f32 to vector<8x256xf32>
    %275 = arith.addf %274, %273 : vector<8x256xf32>
    %276 = arith.divf %274, %275 : vector<8x256xf32>
    %277 = arith.mulf %271, %276 : vector<8x256xf32>
    %278 = arith.truncf %277 : vector<8x256xf32> to vector<8x256xbf16>
    %c256 = arith.constant 256 : index
    %c0_107 = arith.constant 0 : index
    %279 = vector.load %arg2[%c256, %c0_107] : memref<552x128xbf16, #tpu.memory_space<vmem>>, vector<16x8xbf16>
    %cst_108 = arith.constant dense<0.000000e+00> : vector<16x256xf32>
    %280 = tpu.matmul %279, %278, %cst_108 {dimension_numbers = #tpu.dot_dimension_numbers<[1], [0], [0], [1], [0, 0, 1, 1], [], []>} : vector<16x8xbf16>, vector<8x256xbf16>, vector<16x256xf32> -> vector<16x256xf32>
    %c56_109 = arith.constant 56 : index
    %c0_110 = arith.constant 0 : index
    %281 = vector.load %arg3[%c56_109, %c0_110] : memref<120x1xf32, #tpu.memory_space<vmem>>, vector<16x1xf32>
    %282 = vector.broadcast %281 : vector<16x1xf32> to vector<16x256xf32>
    %283 = arith.addf %280, %282 : vector<16x256xf32>
    %284 = arith.negf %283 : vector<16x256xf32>
    %285 = math.exp %284 : vector<16x256xf32>
    %cst_111 = arith.constant 1.000000e+00 : f32
    %286 = vector.broadcast %cst_111 : f32 to vector<16x256xf32>
    %287 = arith.addf %286, %285 : vector<16x256xf32>
    %288 = arith.divf %286, %287 : vector<16x256xf32>
    %289 = arith.mulf %283, %288 : vector<16x256xf32>
    %290 = vector.extract_strided_slice %289 {offsets = [0, 0], sizes = [8, 256], strides = [1, 1]} : vector<16x256xf32> to vector<8x256xf32>
    %291 = vector.extract_strided_slice %289 {offsets = [8, 0], sizes = [8, 256], strides = [1, 1]} : vector<16x256xf32> to vector<8x256xf32>
    %292 = arith.truncf %291 : vector<8x256xf32> to vector<8x256xbf16>
    %293 = arith.truncf %290 : vector<8x256xf32> to vector<8x256xbf16>
    %c72_112 = arith.constant 72 : index
    %c0_113 = arith.constant 0 : index
    %294 = vector.load %arg3[%c72_112, %c0_113] : memref<120x1xf32, #tpu.memory_space<vmem>>, vector<8x1xf32>
    %cst_114 = arith.constant 0.000000e+00 : bf16
    %295 = vector.broadcast %cst_114 : bf16 to vector<8x17xbf16>
    %296 = tpu.concatenate %295, %293, %295 in 1 : vector<8x17xbf16>, vector<8x256xbf16>, vector<8x17xbf16> -> vector<8x290xbf16>
    %297 = vector.extract_strided_slice %296 {offsets = [0, 0], sizes = [8, 256], strides = [1, 1]} : vector<8x290xbf16> to vector<8x256xbf16>
    %cst_115 = arith.constant 0.000000e+00 : bf16
    %298 = vector.shape_cast %20 : vector<1x256xi1> to vector<1x256xi1>
    %299 = vector.broadcast %298 : vector<1x256xi1> to vector<8x256xi1>
    %300 = vector.broadcast %cst_115 : bf16 to vector<8x256xbf16>
    %301 = arith.select %299, %297, %300 : vector<8x256xi1>, vector<8x256xbf16>
    %c272 = arith.constant 272 : index
    %c0_116 = arith.constant 0 : index
    %302 = vector.load %arg2[%c272, %c0_116] : memref<552x128xbf16, #tpu.memory_space<vmem>>, vector<8x8xbf16>
    %cst_117 = arith.constant dense<0.000000e+00> : vector<8x256xf32>
    %303 = tpu.matmul %302, %301, %cst_117 {dimension_numbers = #tpu.dot_dimension_numbers<[1], [0], [0], [1], [0, 0, 1, 1], [], []>} : vector<8x8xbf16>, vector<8x256xbf16>, vector<8x256xf32> -> vector<8x256xf32>
    %304 = vector.extract_strided_slice %296 {offsets = [0, 1], sizes = [8, 256], strides = [1, 1]} : vector<8x290xbf16> to vector<8x256xbf16>
    %c280 = arith.constant 280 : index
    %c0_118 = arith.constant 0 : index
    %305 = vector.load %arg2[%c280, %c0_118] : memref<552x128xbf16, #tpu.memory_space<vmem>>, vector<8x8xbf16>
    %cst_119 = arith.constant dense<0.000000e+00> : vector<8x256xf32>
    %306 = tpu.matmul %305, %304, %cst_119 {dimension_numbers = #tpu.dot_dimension_numbers<[1], [0], [0], [1], [0, 0, 1, 1], [], []>} : vector<8x8xbf16>, vector<8x256xbf16>, vector<8x256xf32> -> vector<8x256xf32>
    %307 = arith.addf %303, %306 : vector<8x256xf32>
    %308 = vector.extract_strided_slice %296 {offsets = [0, 2], sizes = [8, 256], strides = [1, 1]} : vector<8x290xbf16> to vector<8x256xbf16>
    %cst_120 = arith.constant 0.000000e+00 : bf16
    %309 = vector.shape_cast %18 : vector<1x256xi1> to vector<1x256xi1>
    %310 = vector.broadcast %309 : vector<1x256xi1> to vector<8x256xi1>
    %311 = vector.broadcast %cst_120 : bf16 to vector<8x256xbf16>
    %312 = arith.select %310, %308, %311 : vector<8x256xi1>, vector<8x256xbf16>
    %c288 = arith.constant 288 : index
    %c0_121 = arith.constant 0 : index
    %313 = vector.load %arg2[%c288, %c0_121] : memref<552x128xbf16, #tpu.memory_space<vmem>>, vector<8x8xbf16>
    %cst_122 = arith.constant dense<0.000000e+00> : vector<8x256xf32>
    %314 = tpu.matmul %313, %312, %cst_122 {dimension_numbers = #tpu.dot_dimension_numbers<[1], [0], [0], [1], [0, 0, 1, 1], [], []>} : vector<8x8xbf16>, vector<8x256xbf16>, vector<8x256xf32> -> vector<8x256xf32>
    %315 = arith.addf %307, %314 : vector<8x256xf32>
    %316 = vector.extract_strided_slice %296 {offsets = [0, 16], sizes = [8, 256], strides = [1, 1]} : vector<8x290xbf16> to vector<8x256xbf16>
    %cst_123 = arith.constant 0.000000e+00 : bf16
    %317 = vector.shape_cast %20 : vector<1x256xi1> to vector<1x256xi1>
    %318 = vector.broadcast %317 : vector<1x256xi1> to vector<8x256xi1>
    %319 = vector.broadcast %cst_123 : bf16 to vector<8x256xbf16>
    %320 = arith.select %318, %316, %319 : vector<8x256xi1>, vector<8x256xbf16>
    %c296 = arith.constant 296 : index
    %c0_124 = arith.constant 0 : index
    %321 = vector.load %arg2[%c296, %c0_124] : memref<552x128xbf16, #tpu.memory_space<vmem>>, vector<8x8xbf16>
    %cst_125 = arith.constant dense<0.000000e+00> : vector<8x256xf32>
    %322 = tpu.matmul %321, %320, %cst_125 {dimension_numbers = #tpu.dot_dimension_numbers<[1], [0], [0], [1], [0, 0, 1, 1], [], []>} : vector<8x8xbf16>, vector<8x256xbf16>, vector<8x256xf32> -> vector<8x256xf32>
    %323 = arith.addf %315, %322 : vector<8x256xf32>
    %324 = vector.extract_strided_slice %296 {offsets = [0, 17], sizes = [8, 256], strides = [1, 1]} : vector<8x290xbf16> to vector<8x256xbf16>
    %c304 = arith.constant 304 : index
    %c0_126 = arith.constant 0 : index
    %325 = vector.load %arg2[%c304, %c0_126] : memref<552x128xbf16, #tpu.memory_space<vmem>>, vector<8x8xbf16>
    %cst_127 = arith.constant dense<0.000000e+00> : vector<8x256xf32>
    %326 = tpu.matmul %325, %324, %cst_127 {dimension_numbers = #tpu.dot_dimension_numbers<[1], [0], [0], [1], [0, 0, 1, 1], [], []>} : vector<8x8xbf16>, vector<8x256xbf16>, vector<8x256xf32> -> vector<8x256xf32>
    %327 = arith.addf %323, %326 : vector<8x256xf32>
    %328 = vector.extract_strided_slice %296 {offsets = [0, 18], sizes = [8, 256], strides = [1, 1]} : vector<8x290xbf16> to vector<8x256xbf16>
    %cst_128 = arith.constant 0.000000e+00 : bf16
    %329 = vector.shape_cast %18 : vector<1x256xi1> to vector<1x256xi1>
    %330 = vector.broadcast %329 : vector<1x256xi1> to vector<8x256xi1>
    %331 = vector.broadcast %cst_128 : bf16 to vector<8x256xbf16>
    %332 = arith.select %330, %328, %331 : vector<8x256xi1>, vector<8x256xbf16>
    %c312 = arith.constant 312 : index
    %c0_129 = arith.constant 0 : index
    %333 = vector.load %arg2[%c312, %c0_129] : memref<552x128xbf16, #tpu.memory_space<vmem>>, vector<8x8xbf16>
    %cst_130 = arith.constant dense<0.000000e+00> : vector<8x256xf32>
    %334 = tpu.matmul %333, %332, %cst_130 {dimension_numbers = #tpu.dot_dimension_numbers<[1], [0], [0], [1], [0, 0, 1, 1], [], []>} : vector<8x8xbf16>, vector<8x256xbf16>, vector<8x256xf32> -> vector<8x256xf32>
    %335 = arith.addf %327, %334 : vector<8x256xf32>
    %336 = vector.extract_strided_slice %296 {offsets = [0, 32], sizes = [8, 256], strides = [1, 1]} : vector<8x290xbf16> to vector<8x256xbf16>
    %cst_131 = arith.constant 0.000000e+00 : bf16
    %337 = vector.shape_cast %20 : vector<1x256xi1> to vector<1x256xi1>
    %338 = vector.broadcast %337 : vector<1x256xi1> to vector<8x256xi1>
    %339 = vector.broadcast %cst_131 : bf16 to vector<8x256xbf16>
    %340 = arith.select %338, %336, %339 : vector<8x256xi1>, vector<8x256xbf16>
    %c320 = arith.constant 320 : index
    %c0_132 = arith.constant 0 : index
    %341 = vector.load %arg2[%c320, %c0_132] : memref<552x128xbf16, #tpu.memory_space<vmem>>, vector<8x8xbf16>
    %cst_133 = arith.constant dense<0.000000e+00> : vector<8x256xf32>
    %342 = tpu.matmul %341, %340, %cst_133 {dimension_numbers = #tpu.dot_dimension_numbers<[1], [0], [0], [1], [0, 0, 1, 1], [], []>} : vector<8x8xbf16>, vector<8x256xbf16>, vector<8x256xf32> -> vector<8x256xf32>
    %343 = arith.addf %335, %342 : vector<8x256xf32>
    %344 = vector.extract_strided_slice %296 {offsets = [0, 33], sizes = [8, 256], strides = [1, 1]} : vector<8x290xbf16> to vector<8x256xbf16>
    %c328 = arith.constant 328 : index
    %c0_134 = arith.constant 0 : index
    %345 = vector.load %arg2[%c328, %c0_134] : memref<552x128xbf16, #tpu.memory_space<vmem>>, vector<8x8xbf16>
    %cst_135 = arith.constant dense<0.000000e+00> : vector<8x256xf32>
    %346 = tpu.matmul %345, %344, %cst_135 {dimension_numbers = #tpu.dot_dimension_numbers<[1], [0], [0], [1], [0, 0, 1, 1], [], []>} : vector<8x8xbf16>, vector<8x256xbf16>, vector<8x256xf32> -> vector<8x256xf32>
    %347 = arith.addf %343, %346 : vector<8x256xf32>
    %348 = vector.extract_strided_slice %296 {offsets = [0, 34], sizes = [8, 256], strides = [1, 1]} : vector<8x290xbf16> to vector<8x256xbf16>
    %cst_136 = arith.constant 0.000000e+00 : bf16
    %349 = vector.shape_cast %18 : vector<1x256xi1> to vector<1x256xi1>
    %350 = vector.broadcast %349 : vector<1x256xi1> to vector<8x256xi1>
    %351 = vector.broadcast %cst_136 : bf16 to vector<8x256xbf16>
    %352 = arith.select %350, %348, %351 : vector<8x256xi1>, vector<8x256xbf16>
    %c336 = arith.constant 336 : index
    %c0_137 = arith.constant 0 : index
    %353 = vector.load %arg2[%c336, %c0_137] : memref<552x128xbf16, #tpu.memory_space<vmem>>, vector<8x8xbf16>
    %cst_138 = arith.constant dense<0.000000e+00> : vector<8x256xf32>
    %354 = tpu.matmul %353, %352, %cst_138 {dimension_numbers = #tpu.dot_dimension_numbers<[1], [0], [0], [1], [0, 0, 1, 1], [], []>} : vector<8x8xbf16>, vector<8x256xbf16>, vector<8x256xf32> -> vector<8x256xf32>
    %355 = arith.addf %347, %354 : vector<8x256xf32>
    %356 = vector.broadcast %294 : vector<8x1xf32> to vector<8x256xf32>
    %357 = arith.addf %355, %356 : vector<8x256xf32>
    %358 = arith.negf %357 : vector<8x256xf32>
    %359 = math.exp %358 : vector<8x256xf32>
    %cst_139 = arith.constant 1.000000e+00 : f32
    %360 = vector.broadcast %cst_139 : f32 to vector<8x256xf32>
    %361 = arith.addf %360, %359 : vector<8x256xf32>
    %362 = arith.divf %360, %361 : vector<8x256xf32>
    %363 = arith.mulf %357, %362 : vector<8x256xf32>
    %364 = arith.truncf %363 : vector<8x256xf32> to vector<8x256xbf16>
    %c80_140 = arith.constant 80 : index
    %c0_141 = arith.constant 0 : index
    %365 = vector.load %arg3[%c80_140, %c0_141] : memref<120x1xf32, #tpu.memory_space<vmem>>, vector<8x1xf32>
    %cst_142 = arith.constant 0.000000e+00 : bf16
    %366 = vector.broadcast %cst_142 : bf16 to vector<8x17xbf16>
    %367 = tpu.concatenate %366, %364, %366 in 1 : vector<8x17xbf16>, vector<8x256xbf16>, vector<8x17xbf16> -> vector<8x290xbf16>
    %368 = vector.extract_strided_slice %367 {offsets = [0, 0], sizes = [8, 256], strides = [1, 1]} : vector<8x290xbf16> to vector<8x256xbf16>
    %cst_143 = arith.constant 0.000000e+00 : bf16
    %369 = vector.shape_cast %20 : vector<1x256xi1> to vector<1x256xi1>
    %370 = vector.broadcast %369 : vector<1x256xi1> to vector<8x256xi1>
    %371 = vector.broadcast %cst_143 : bf16 to vector<8x256xbf16>
    %372 = arith.select %370, %368, %371 : vector<8x256xi1>, vector<8x256xbf16>
    %c344 = arith.constant 344 : index
    %c0_144 = arith.constant 0 : index
    %373 = vector.load %arg2[%c344, %c0_144] : memref<552x128xbf16, #tpu.memory_space<vmem>>, vector<8x8xbf16>
    %cst_145 = arith.constant dense<0.000000e+00> : vector<8x256xf32>
    %374 = tpu.matmul %373, %372, %cst_145 {dimension_numbers = #tpu.dot_dimension_numbers<[1], [0], [0], [1], [0, 0, 1, 1], [], []>} : vector<8x8xbf16>, vector<8x256xbf16>, vector<8x256xf32> -> vector<8x256xf32>
    %375 = vector.extract_strided_slice %367 {offsets = [0, 1], sizes = [8, 256], strides = [1, 1]} : vector<8x290xbf16> to vector<8x256xbf16>
    %c352 = arith.constant 352 : index
    %c0_146 = arith.constant 0 : index
    %376 = vector.load %arg2[%c352, %c0_146] : memref<552x128xbf16, #tpu.memory_space<vmem>>, vector<8x8xbf16>
    %cst_147 = arith.constant dense<0.000000e+00> : vector<8x256xf32>
    %377 = tpu.matmul %376, %375, %cst_147 {dimension_numbers = #tpu.dot_dimension_numbers<[1], [0], [0], [1], [0, 0, 1, 1], [], []>} : vector<8x8xbf16>, vector<8x256xbf16>, vector<8x256xf32> -> vector<8x256xf32>
    %378 = arith.addf %374, %377 : vector<8x256xf32>
    %379 = vector.extract_strided_slice %367 {offsets = [0, 2], sizes = [8, 256], strides = [1, 1]} : vector<8x290xbf16> to vector<8x256xbf16>
    %cst_148 = arith.constant 0.000000e+00 : bf16
    %380 = vector.shape_cast %18 : vector<1x256xi1> to vector<1x256xi1>
    %381 = vector.broadcast %380 : vector<1x256xi1> to vector<8x256xi1>
    %382 = vector.broadcast %cst_148 : bf16 to vector<8x256xbf16>
    %383 = arith.select %381, %379, %382 : vector<8x256xi1>, vector<8x256xbf16>
    %c360 = arith.constant 360 : index
    %c0_149 = arith.constant 0 : index
    %384 = vector.load %arg2[%c360, %c0_149] : memref<552x128xbf16, #tpu.memory_space<vmem>>, vector<8x8xbf16>
    %cst_150 = arith.constant dense<0.000000e+00> : vector<8x256xf32>
    %385 = tpu.matmul %384, %383, %cst_150 {dimension_numbers = #tpu.dot_dimension_numbers<[1], [0], [0], [1], [0, 0, 1, 1], [], []>} : vector<8x8xbf16>, vector<8x256xbf16>, vector<8x256xf32> -> vector<8x256xf32>
    %386 = arith.addf %378, %385 : vector<8x256xf32>
    %387 = vector.extract_strided_slice %367 {offsets = [0, 16], sizes = [8, 256], strides = [1, 1]} : vector<8x290xbf16> to vector<8x256xbf16>
    %cst_151 = arith.constant 0.000000e+00 : bf16
    %388 = vector.shape_cast %20 : vector<1x256xi1> to vector<1x256xi1>
    %389 = vector.broadcast %388 : vector<1x256xi1> to vector<8x256xi1>
    %390 = vector.broadcast %cst_151 : bf16 to vector<8x256xbf16>
    %391 = arith.select %389, %387, %390 : vector<8x256xi1>, vector<8x256xbf16>
    %c368 = arith.constant 368 : index
    %c0_152 = arith.constant 0 : index
    %392 = vector.load %arg2[%c368, %c0_152] : memref<552x128xbf16, #tpu.memory_space<vmem>>, vector<8x8xbf16>
    %cst_153 = arith.constant dense<0.000000e+00> : vector<8x256xf32>
    %393 = tpu.matmul %392, %391, %cst_153 {dimension_numbers = #tpu.dot_dimension_numbers<[1], [0], [0], [1], [0, 0, 1, 1], [], []>} : vector<8x8xbf16>, vector<8x256xbf16>, vector<8x256xf32> -> vector<8x256xf32>
    %394 = arith.addf %386, %393 : vector<8x256xf32>
    %395 = vector.extract_strided_slice %367 {offsets = [0, 17], sizes = [8, 256], strides = [1, 1]} : vector<8x290xbf16> to vector<8x256xbf16>
    %c376 = arith.constant 376 : index
    %c0_154 = arith.constant 0 : index
    %396 = vector.load %arg2[%c376, %c0_154] : memref<552x128xbf16, #tpu.memory_space<vmem>>, vector<8x8xbf16>
    %cst_155 = arith.constant dense<0.000000e+00> : vector<8x256xf32>
    %397 = tpu.matmul %396, %395, %cst_155 {dimension_numbers = #tpu.dot_dimension_numbers<[1], [0], [0], [1], [0, 0, 1, 1], [], []>} : vector<8x8xbf16>, vector<8x256xbf16>, vector<8x256xf32> -> vector<8x256xf32>
    %398 = arith.addf %394, %397 : vector<8x256xf32>
    %399 = vector.extract_strided_slice %367 {offsets = [0, 18], sizes = [8, 256], strides = [1, 1]} : vector<8x290xbf16> to vector<8x256xbf16>
    %cst_156 = arith.constant 0.000000e+00 : bf16
    %400 = vector.shape_cast %18 : vector<1x256xi1> to vector<1x256xi1>
    %401 = vector.broadcast %400 : vector<1x256xi1> to vector<8x256xi1>
    %402 = vector.broadcast %cst_156 : bf16 to vector<8x256xbf16>
    %403 = arith.select %401, %399, %402 : vector<8x256xi1>, vector<8x256xbf16>
    %c384 = arith.constant 384 : index
    %c0_157 = arith.constant 0 : index
    %404 = vector.load %arg2[%c384, %c0_157] : memref<552x128xbf16, #tpu.memory_space<vmem>>, vector<8x8xbf16>
    %cst_158 = arith.constant dense<0.000000e+00> : vector<8x256xf32>
    %405 = tpu.matmul %404, %403, %cst_158 {dimension_numbers = #tpu.dot_dimension_numbers<[1], [0], [0], [1], [0, 0, 1, 1], [], []>} : vector<8x8xbf16>, vector<8x256xbf16>, vector<8x256xf32> -> vector<8x256xf32>
    %406 = arith.addf %398, %405 : vector<8x256xf32>
    %407 = vector.extract_strided_slice %367 {offsets = [0, 32], sizes = [8, 256], strides = [1, 1]} : vector<8x290xbf16> to vector<8x256xbf16>
    %cst_159 = arith.constant 0.000000e+00 : bf16
    %408 = vector.shape_cast %20 : vector<1x256xi1> to vector<1x256xi1>
    %409 = vector.broadcast %408 : vector<1x256xi1> to vector<8x256xi1>
    %410 = vector.broadcast %cst_159 : bf16 to vector<8x256xbf16>
    %411 = arith.select %409, %407, %410 : vector<8x256xi1>, vector<8x256xbf16>
    %c392 = arith.constant 392 : index
    %c0_160 = arith.constant 0 : index
    %412 = vector.load %arg2[%c392, %c0_160] : memref<552x128xbf16, #tpu.memory_space<vmem>>, vector<8x8xbf16>
    %cst_161 = arith.constant dense<0.000000e+00> : vector<8x256xf32>
    %413 = tpu.matmul %412, %411, %cst_161 {dimension_numbers = #tpu.dot_dimension_numbers<[1], [0], [0], [1], [0, 0, 1, 1], [], []>} : vector<8x8xbf16>, vector<8x256xbf16>, vector<8x256xf32> -> vector<8x256xf32>
    %414 = arith.addf %406, %413 : vector<8x256xf32>
    %415 = vector.extract_strided_slice %367 {offsets = [0, 33], sizes = [8, 256], strides = [1, 1]} : vector<8x290xbf16> to vector<8x256xbf16>
    %c400 = arith.constant 400 : index
    %c0_162 = arith.constant 0 : index
    %416 = vector.load %arg2[%c400, %c0_162] : memref<552x128xbf16, #tpu.memory_space<vmem>>, vector<8x8xbf16>
    %cst_163 = arith.constant dense<0.000000e+00> : vector<8x256xf32>
    %417 = tpu.matmul %416, %415, %cst_163 {dimension_numbers = #tpu.dot_dimension_numbers<[1], [0], [0], [1], [0, 0, 1, 1], [], []>} : vector<8x8xbf16>, vector<8x256xbf16>, vector<8x256xf32> -> vector<8x256xf32>
    %418 = arith.addf %414, %417 : vector<8x256xf32>
    %419 = vector.extract_strided_slice %367 {offsets = [0, 34], sizes = [8, 256], strides = [1, 1]} : vector<8x290xbf16> to vector<8x256xbf16>
    %cst_164 = arith.constant 0.000000e+00 : bf16
    %420 = vector.shape_cast %18 : vector<1x256xi1> to vector<1x256xi1>
    %421 = vector.broadcast %420 : vector<1x256xi1> to vector<8x256xi1>
    %422 = vector.broadcast %cst_164 : bf16 to vector<8x256xbf16>
    %423 = arith.select %421, %419, %422 : vector<8x256xi1>, vector<8x256xbf16>
    %c408 = arith.constant 408 : index
    %c0_165 = arith.constant 0 : index
    %424 = vector.load %arg2[%c408, %c0_165] : memref<552x128xbf16, #tpu.memory_space<vmem>>, vector<8x8xbf16>
    %cst_166 = arith.constant dense<0.000000e+00> : vector<8x256xf32>
    %425 = tpu.matmul %424, %423, %cst_166 {dimension_numbers = #tpu.dot_dimension_numbers<[1], [0], [0], [1], [0, 0, 1, 1], [], []>} : vector<8x8xbf16>, vector<8x256xbf16>, vector<8x256xf32> -> vector<8x256xf32>
    %426 = arith.addf %418, %425 : vector<8x256xf32>
    %427 = vector.broadcast %365 : vector<8x1xf32> to vector<8x256xf32>
    %428 = arith.addf %426, %427 : vector<8x256xf32>
    %429 = arith.negf %428 : vector<8x256xf32>
    %430 = math.exp %429 : vector<8x256xf32>
    %cst_167 = arith.constant 1.000000e+00 : f32
    %431 = vector.broadcast %cst_167 : f32 to vector<8x256xf32>
    %432 = arith.addf %431, %430 : vector<8x256xf32>
    %433 = arith.divf %431, %432 : vector<8x256xf32>
    %434 = arith.mulf %428, %433 : vector<8x256xf32>
    %435 = arith.addf %290, %434 : vector<8x256xf32>
    %c416 = arith.constant 416 : index
    %c0_168 = arith.constant 0 : index
    %436 = vector.load %arg2[%c416, %c0_168] : memref<552x128xbf16, #tpu.memory_space<vmem>>, vector<8x8xbf16>
    %437 = arith.truncf %435 : vector<8x256xf32> to vector<8x256xbf16>
    %cst_169 = arith.constant dense<0.000000e+00> : vector<8x256xf32>
    %438 = tpu.matmul %436, %437, %cst_169 {dimension_numbers = #tpu.dot_dimension_numbers<[1], [0], [0], [1], [0, 0, 1, 1], [], []>} : vector<8x8xbf16>, vector<8x256xbf16>, vector<8x256xf32> -> vector<8x256xf32>
    %c424 = arith.constant 424 : index
    %c0_170 = arith.constant 0 : index
    %439 = vector.load %arg2[%c424, %c0_170] : memref<552x128xbf16, #tpu.memory_space<vmem>>, vector<8x8xbf16>
    %cst_171 = arith.constant dense<0.000000e+00> : vector<8x256xf32>
    %440 = tpu.matmul %439, %292, %cst_171 {dimension_numbers = #tpu.dot_dimension_numbers<[1], [0], [0], [1], [0, 0, 1, 1], [], []>} : vector<8x8xbf16>, vector<8x256xbf16>, vector<8x256xf32> -> vector<8x256xf32>
    %441 = arith.addf %438, %440 : vector<8x256xf32>
    %c88_172 = arith.constant 88 : index
    %c0_173 = arith.constant 0 : index
    %442 = vector.load %arg3[%c88_172, %c0_173] : memref<120x1xf32, #tpu.memory_space<vmem>>, vector<8x1xf32>
    %443 = vector.broadcast %442 : vector<8x1xf32> to vector<8x256xf32>
    %444 = arith.addf %441, %443 : vector<8x256xf32>
    %445 = arith.negf %444 : vector<8x256xf32>
    %446 = math.exp %445 : vector<8x256xf32>
    %cst_174 = arith.constant 1.000000e+00 : f32
    %447 = vector.broadcast %cst_174 : f32 to vector<8x256xf32>
    %448 = arith.addf %447, %446 : vector<8x256xf32>
    %449 = arith.divf %447, %448 : vector<8x256xf32>
    %450 = arith.mulf %444, %449 : vector<8x256xf32>
    %451 = arith.truncf %450 : vector<8x256xf32> to vector<8x256xbf16>
    %c96_175 = arith.constant 96 : index
    %c0_176 = arith.constant 0 : index
    %452 = vector.load %arg3[%c96_175, %c0_176] : memref<120x1xf32, #tpu.memory_space<vmem>>, vector<8x1xf32>
    %cst_177 = arith.constant 0.000000e+00 : bf16
    %453 = vector.broadcast %cst_177 : bf16 to vector<8x17xbf16>
    %454 = tpu.concatenate %453, %451, %453 in 1 : vector<8x17xbf16>, vector<8x256xbf16>, vector<8x17xbf16> -> vector<8x290xbf16>
    %455 = vector.extract_strided_slice %454 {offsets = [0, 0], sizes = [8, 256], strides = [1, 1]} : vector<8x290xbf16> to vector<8x256xbf16>
    %cst_178 = arith.constant 0.000000e+00 : bf16
    %456 = vector.shape_cast %20 : vector<1x256xi1> to vector<1x256xi1>
    %457 = vector.broadcast %456 : vector<1x256xi1> to vector<8x256xi1>
    %458 = vector.broadcast %cst_178 : bf16 to vector<8x256xbf16>
    %459 = arith.select %457, %455, %458 : vector<8x256xi1>, vector<8x256xbf16>
    %c432 = arith.constant 432 : index
    %c0_179 = arith.constant 0 : index
    %460 = vector.load %arg2[%c432, %c0_179] : memref<552x128xbf16, #tpu.memory_space<vmem>>, vector<8x8xbf16>
    %cst_180 = arith.constant dense<0.000000e+00> : vector<8x256xf32>
    %461 = tpu.matmul %460, %459, %cst_180 {dimension_numbers = #tpu.dot_dimension_numbers<[1], [0], [0], [1], [0, 0, 1, 1], [], []>} : vector<8x8xbf16>, vector<8x256xbf16>, vector<8x256xf32> -> vector<8x256xf32>
    %462 = vector.extract_strided_slice %454 {offsets = [0, 1], sizes = [8, 256], strides = [1, 1]} : vector<8x290xbf16> to vector<8x256xbf16>
    %c440 = arith.constant 440 : index
    %c0_181 = arith.constant 0 : index
    %463 = vector.load %arg2[%c440, %c0_181] : memref<552x128xbf16, #tpu.memory_space<vmem>>, vector<8x8xbf16>
    %cst_182 = arith.constant dense<0.000000e+00> : vector<8x256xf32>
    %464 = tpu.matmul %463, %462, %cst_182 {dimension_numbers = #tpu.dot_dimension_numbers<[1], [0], [0], [1], [0, 0, 1, 1], [], []>} : vector<8x8xbf16>, vector<8x256xbf16>, vector<8x256xf32> -> vector<8x256xf32>
    %465 = arith.addf %461, %464 : vector<8x256xf32>
    %466 = vector.extract_strided_slice %454 {offsets = [0, 2], sizes = [8, 256], strides = [1, 1]} : vector<8x290xbf16> to vector<8x256xbf16>
    %cst_183 = arith.constant 0.000000e+00 : bf16
    %467 = vector.shape_cast %18 : vector<1x256xi1> to vector<1x256xi1>
    %468 = vector.broadcast %467 : vector<1x256xi1> to vector<8x256xi1>
    %469 = vector.broadcast %cst_183 : bf16 to vector<8x256xbf16>
    %470 = arith.select %468, %466, %469 : vector<8x256xi1>, vector<8x256xbf16>
    %c448 = arith.constant 448 : index
    %c0_184 = arith.constant 0 : index
    %471 = vector.load %arg2[%c448, %c0_184] : memref<552x128xbf16, #tpu.memory_space<vmem>>, vector<8x8xbf16>
    %cst_185 = arith.constant dense<0.000000e+00> : vector<8x256xf32>
    %472 = tpu.matmul %471, %470, %cst_185 {dimension_numbers = #tpu.dot_dimension_numbers<[1], [0], [0], [1], [0, 0, 1, 1], [], []>} : vector<8x8xbf16>, vector<8x256xbf16>, vector<8x256xf32> -> vector<8x256xf32>
    %473 = arith.addf %465, %472 : vector<8x256xf32>
    %474 = vector.extract_strided_slice %454 {offsets = [0, 16], sizes = [8, 256], strides = [1, 1]} : vector<8x290xbf16> to vector<8x256xbf16>
    %cst_186 = arith.constant 0.000000e+00 : bf16
    %475 = vector.shape_cast %20 : vector<1x256xi1> to vector<1x256xi1>
    %476 = vector.broadcast %475 : vector<1x256xi1> to vector<8x256xi1>
    %477 = vector.broadcast %cst_186 : bf16 to vector<8x256xbf16>
    %478 = arith.select %476, %474, %477 : vector<8x256xi1>, vector<8x256xbf16>
    %c456 = arith.constant 456 : index
    %c0_187 = arith.constant 0 : index
    %479 = vector.load %arg2[%c456, %c0_187] : memref<552x128xbf16, #tpu.memory_space<vmem>>, vector<8x8xbf16>
    %cst_188 = arith.constant dense<0.000000e+00> : vector<8x256xf32>
    %480 = tpu.matmul %479, %478, %cst_188 {dimension_numbers = #tpu.dot_dimension_numbers<[1], [0], [0], [1], [0, 0, 1, 1], [], []>} : vector<8x8xbf16>, vector<8x256xbf16>, vector<8x256xf32> -> vector<8x256xf32>
    %481 = arith.addf %473, %480 : vector<8x256xf32>
    %482 = vector.extract_strided_slice %454 {offsets = [0, 17], sizes = [8, 256], strides = [1, 1]} : vector<8x290xbf16> to vector<8x256xbf16>
    %c464 = arith.constant 464 : index
    %c0_189 = arith.constant 0 : index
    %483 = vector.load %arg2[%c464, %c0_189] : memref<552x128xbf16, #tpu.memory_space<vmem>>, vector<8x8xbf16>
    %cst_190 = arith.constant dense<0.000000e+00> : vector<8x256xf32>
    %484 = tpu.matmul %483, %482, %cst_190 {dimension_numbers = #tpu.dot_dimension_numbers<[1], [0], [0], [1], [0, 0, 1, 1], [], []>} : vector<8x8xbf16>, vector<8x256xbf16>, vector<8x256xf32> -> vector<8x256xf32>
    %485 = arith.addf %481, %484 : vector<8x256xf32>
    %486 = vector.extract_strided_slice %454 {offsets = [0, 18], sizes = [8, 256], strides = [1, 1]} : vector<8x290xbf16> to vector<8x256xbf16>
    %cst_191 = arith.constant 0.000000e+00 : bf16
    %487 = vector.shape_cast %18 : vector<1x256xi1> to vector<1x256xi1>
    %488 = vector.broadcast %487 : vector<1x256xi1> to vector<8x256xi1>
    %489 = vector.broadcast %cst_191 : bf16 to vector<8x256xbf16>
    %490 = arith.select %488, %486, %489 : vector<8x256xi1>, vector<8x256xbf16>
    %c472 = arith.constant 472 : index
    %c0_192 = arith.constant 0 : index
    %491 = vector.load %arg2[%c472, %c0_192] : memref<552x128xbf16, #tpu.memory_space<vmem>>, vector<8x8xbf16>
    %cst_193 = arith.constant dense<0.000000e+00> : vector<8x256xf32>
    %492 = tpu.matmul %491, %490, %cst_193 {dimension_numbers = #tpu.dot_dimension_numbers<[1], [0], [0], [1], [0, 0, 1, 1], [], []>} : vector<8x8xbf16>, vector<8x256xbf16>, vector<8x256xf32> -> vector<8x256xf32>
    %493 = arith.addf %485, %492 : vector<8x256xf32>
    %494 = vector.extract_strided_slice %454 {offsets = [0, 32], sizes = [8, 256], strides = [1, 1]} : vector<8x290xbf16> to vector<8x256xbf16>
    %cst_194 = arith.constant 0.000000e+00 : bf16
    %495 = vector.shape_cast %20 : vector<1x256xi1> to vector<1x256xi1>
    %496 = vector.broadcast %495 : vector<1x256xi1> to vector<8x256xi1>
    %497 = vector.broadcast %cst_194 : bf16 to vector<8x256xbf16>
    %498 = arith.select %496, %494, %497 : vector<8x256xi1>, vector<8x256xbf16>
    %c480 = arith.constant 480 : index
    %c0_195 = arith.constant 0 : index
    %499 = vector.load %arg2[%c480, %c0_195] : memref<552x128xbf16, #tpu.memory_space<vmem>>, vector<8x8xbf16>
    %cst_196 = arith.constant dense<0.000000e+00> : vector<8x256xf32>
    %500 = tpu.matmul %499, %498, %cst_196 {dimension_numbers = #tpu.dot_dimension_numbers<[1], [0], [0], [1], [0, 0, 1, 1], [], []>} : vector<8x8xbf16>, vector<8x256xbf16>, vector<8x256xf32> -> vector<8x256xf32>
    %501 = arith.addf %493, %500 : vector<8x256xf32>
    %502 = vector.extract_strided_slice %454 {offsets = [0, 33], sizes = [8, 256], strides = [1, 1]} : vector<8x290xbf16> to vector<8x256xbf16>
    %c488 = arith.constant 488 : index
    %c0_197 = arith.constant 0 : index
    %503 = vector.load %arg2[%c488, %c0_197] : memref<552x128xbf16, #tpu.memory_space<vmem>>, vector<8x8xbf16>
    %cst_198 = arith.constant dense<0.000000e+00> : vector<8x256xf32>
    %504 = tpu.matmul %503, %502, %cst_198 {dimension_numbers = #tpu.dot_dimension_numbers<[1], [0], [0], [1], [0, 0, 1, 1], [], []>} : vector<8x8xbf16>, vector<8x256xbf16>, vector<8x256xf32> -> vector<8x256xf32>
    %505 = arith.addf %501, %504 : vector<8x256xf32>
    %506 = vector.extract_strided_slice %454 {offsets = [0, 34], sizes = [8, 256], strides = [1, 1]} : vector<8x290xbf16> to vector<8x256xbf16>
    %cst_199 = arith.constant 0.000000e+00 : bf16
    %507 = vector.shape_cast %18 : vector<1x256xi1> to vector<1x256xi1>
    %508 = vector.broadcast %507 : vector<1x256xi1> to vector<8x256xi1>
    %509 = vector.broadcast %cst_199 : bf16 to vector<8x256xbf16>
    %510 = arith.select %508, %506, %509 : vector<8x256xi1>, vector<8x256xbf16>
    %c496 = arith.constant 496 : index
    %c0_200 = arith.constant 0 : index
    %511 = vector.load %arg2[%c496, %c0_200] : memref<552x128xbf16, #tpu.memory_space<vmem>>, vector<8x8xbf16>
    %cst_201 = arith.constant dense<0.000000e+00> : vector<8x256xf32>
    %512 = tpu.matmul %511, %510, %cst_201 {dimension_numbers = #tpu.dot_dimension_numbers<[1], [0], [0], [1], [0, 0, 1, 1], [], []>} : vector<8x8xbf16>, vector<8x256xbf16>, vector<8x256xf32> -> vector<8x256xf32>
    %513 = arith.addf %505, %512 : vector<8x256xf32>
    %514 = vector.broadcast %452 : vector<8x1xf32> to vector<8x256xf32>
    %515 = arith.addf %513, %514 : vector<8x256xf32>
    %516 = arith.negf %515 : vector<8x256xf32>
    %517 = math.exp %516 : vector<8x256xf32>
    %cst_202 = arith.constant 1.000000e+00 : f32
    %518 = vector.broadcast %cst_202 : f32 to vector<8x256xf32>
    %519 = arith.addf %518, %517 : vector<8x256xf32>
    %520 = arith.divf %518, %519 : vector<8x256xf32>
    %521 = arith.mulf %515, %520 : vector<8x256xf32>
    %522 = arith.truncf %521 : vector<8x256xf32> to vector<8x256xbf16>
    %c504 = arith.constant 504 : index
    %c0_203 = arith.constant 0 : index
    %523 = vector.load %arg2[%c504, %c0_203] : memref<552x128xbf16, #tpu.memory_space<vmem>>, vector<16x8xbf16>
    %cst_204 = arith.constant dense<0.000000e+00> : vector<16x256xf32>
    %524 = tpu.matmul %523, %34, %cst_204 {dimension_numbers = #tpu.dot_dimension_numbers<[1], [0], [0], [1], [0, 0, 1, 1], [], []>} : vector<16x8xbf16>, vector<8x256xbf16>, vector<16x256xf32> -> vector<16x256xf32>
    %c520 = arith.constant 520 : index
    %c0_205 = arith.constant 0 : index
    %525 = vector.load %arg2[%c520, %c0_205] : memref<552x128xbf16, #tpu.memory_space<vmem>>, vector<16x8xbf16>
    %cst_206 = arith.constant dense<0.000000e+00> : vector<16x256xf32>
    %526 = tpu.matmul %525, %278, %cst_206 {dimension_numbers = #tpu.dot_dimension_numbers<[1], [0], [0], [1], [0, 0, 1, 1], [], []>} : vector<16x8xbf16>, vector<8x256xbf16>, vector<16x256xf32> -> vector<16x256xf32>
    %527 = arith.addf %524, %526 : vector<16x256xf32>
    %c536 = arith.constant 536 : index
    %c0_207 = arith.constant 0 : index
    %528 = vector.load %arg2[%c536, %c0_207] : memref<552x128xbf16, #tpu.memory_space<vmem>>, vector<16x8xbf16>
    %cst_208 = arith.constant dense<0.000000e+00> : vector<16x256xf32>
    %529 = tpu.matmul %528, %522, %cst_208 {dimension_numbers = #tpu.dot_dimension_numbers<[1], [0], [0], [1], [0, 0, 1, 1], [], []>} : vector<16x8xbf16>, vector<8x256xbf16>, vector<16x256xf32> -> vector<16x256xf32>
    %530 = arith.addf %527, %529 : vector<16x256xf32>
    %c104_209 = arith.constant 104 : index
    %c0_210 = arith.constant 0 : index
    %531 = vector.load %arg3[%c104_209, %c0_210] : memref<120x1xf32, #tpu.memory_space<vmem>>, vector<16x1xf32>
    %532 = vector.broadcast %531 : vector<16x1xf32> to vector<16x256xf32>
    %533 = arith.addf %530, %532 : vector<16x256xf32>
    %534 = arith.negf %533 : vector<16x256xf32>
    %535 = math.exp %534 : vector<16x256xf32>
    %cst_211 = arith.constant 1.000000e+00 : f32
    %536 = vector.broadcast %cst_211 : f32 to vector<16x256xf32>
    %537 = arith.addf %536, %535 : vector<16x256xf32>
    %538 = arith.divf %536, %537 : vector<16x256xf32>
    %539 = arith.mulf %533, %538 : vector<16x256xf32>
    %c0_212 = arith.constant 0 : index
    %c0_213 = arith.constant 0 : index
    %c0_214 = arith.constant 0 : index
    %540 = vector.load %arg4[%c0_212, %c0_213, %c0_214] : memref<1x16x256xf32, #tpu.memory_space<vmem>>, vector<1x16x256xf32>
    %541 = vector.shape_cast %540 : vector<1x16x256xf32> to vector<16x256xf32>
    %542 = vector.shape_cast %539 : vector<16x256xf32> to vector<1x16x256xf32>
    tpu.vector_store %arg4[%c0_212, %c0_213, %c0_214], %542 {strides = array<i32>} : memref<1x16x256xf32, #tpu.memory_space<vmem>>, vector<1x16x256xf32>,
    return
  }
  func.func @transform_0(%arg0: i32) -> (i32, i32, i32) {
    %c0_i32 = arith.constant 0 : i32
    %c0_i32_0 = arith.constant 0 : i32
    %c0_i32_1 = arith.constant 0 : i32
    return %arg0, %c0_i32, %c0_i32_0 : i32, i32, i32
  }
  func.func @transform_1(%arg0: i32) -> (i32, i32) {
    %c0_i32 = arith.constant 0 : i32
    %c0_i32_0 = arith.constant 0 : i32
    %c0_i32_1 = arith.constant 0 : i32
    return %c0_i32, %c0_i32_0 : i32, i32
  }
  func.func @transform_2(%arg0: i32) -> (i32, i32) {
    %c0_i32 = arith.constant 0 : i32
    %c0_i32_0 = arith.constant 0 : i32
    %c0_i32_1 = arith.constant 0 : i32
    return %c0_i32, %c0_i32_0 : i32, i32
  }
  func.func @transform_3(%arg0: i32) -> (i32, i32, i32) {
    %c0_i32 = arith.constant 0 : i32
    %c0_i32_0 = arith.constant 0 : i32
    %c0_i32_1 = arith.constant 0 : i32
    return %arg0, %c0_i32, %c0_i32_0 : i32, i32, i32
  }
}

</mosaic_0001>

<llo_original>
// kernel: repncspelan4.1
$region0: #{repncspelan4.1}
  #allocation0 [shape = 'u32[]', space=smem, size = 0x4, offset = 0x4, fixed_abs, tag = 'smem constant byte address 0x4 - core index']
  #allocation1 [shape = 'u32[144,128]{1,0:T(1,128)}', space=vmem, size = 0x12000, scoped, tag = 'internal scratch']
  %s0 = inlined_call_operand.vmem [shape: bf16[2,4,256], index: 0, kind: input, shape index: {}]
  %s1 = inlined_call_operand.vmem [shape: bf16[552,128], index: 1, kind: input, shape index: {}]
  %s2 = inlined_call_operand.vmem [shape: f32[120,1], index: 2, kind: input, shape index: {}]
  %s3 = inlined_call_operand.vmem [shape: f32[2,16,256], index: 3, kind: output, shape index: {}]
  %s4 = sld [smem:[#allocation0]]
  $region45: #{repncspelan4.1} parent=0
    _
  %s6 = ssub.s32 1, %s4
  %s7 = scalar_select 0, %s6, %s4
  loop: start=0, step=1, limit=4
  $region2: #{repncspelan4.1} parent=0 // loop_pre_header
    _
  $region3: #{repncspelan4.1} parent=0 // loop_header
    %s9 = sphi 0, %s13
    %p10 = scmp.ge.s32.totalorder %s9, 4
    %s19 = sphi 0, %s21
    %s22 = sphi 0, %s19
    %s23 = sphi 0, %s22
    %s39 = sphi 0, %s23
    %s43 = sphi 0, %s43
    %s45 = sphi 0, %s43
    %s46 = sphi 0, %s45
    %s60 = sphi 0, %s46
    %s64 = sphi 0, %s64
    %s66 = sphi 0, %s64
    %s67 = sphi 0, %s66
    %s81 = sphi 0, %s67
    %s87 = sphi 0, %s89
    %s90 = sphi 0, %s87
    %s91 = sphi 0, %s90
    %s107 = sphi 0, %s91
  $region4: #{repncspelan4.1} parent=0 // loop_header_branch
    %12 = sbr.rel (%p10) target = $region8
  $region5: #{repncspelan4.1} parent=0 // loop_body
    %s14 = ssub.s32 %s9, 1
    %s15 = ssub.s32 %s9, 2
    %s16 = sadd.s32 %s9, 1
    %s17 = ssub.s32 %s9, %s16
    %p18 = scmp.eq.s32.totalorder %s17, 0
    %s20 = sadd.s32 %s19, 1
    %s21 = scalar_select %p18, %s19, %s20
    %p24 = pneg %p18
    %p25 = scmp.eq.s32.totalorder %s9, 1
    %p26 = por %p24, %p25
    %p27 = scmp.ne.s32.totalorder %s19, %s22
    %p28 = scmp.eq.s32.totalorder %s9, 0
    %p29 = por %p27, %p28
    %p30 = scmp.ne.s32.totalorder %s19, %s22
    %p31 = scmp.eq.s32.totalorder %s14, 1
    %p32 = por %p30, %p31
    %p33 = scmp.ne.s32.totalorder %s22, %s23
    %p34 = scmp.eq.s32.totalorder %s14, 0
    %p35 = por %p33, %p34
    %p36 = scmp.ne.s32.totalorder %s22, %s23
    %p37 = scmp.eq.s32.totalorder %s15, 1
    %p38 = por %p36, %p37
    %p40 = scmp.ne.s32.totalorder %s23, %s39
    %p41 = scmp.eq.s32.totalorder %s15, 0
    %p42 = por %p40, %p41
    %s44 = sadd.s32 %s43, 1
    %p47 = scmp.eq.s32.totalorder %s9, 1
    %p48 = scmp.ne.s32.totalorder %s43, %s45
    %p49 = scmp.eq.s32.totalorder %s9, 0
    %p50 = por %p48, %p49
    %p51 = scmp.ne.s32.totalorder %s43, %s45
    %p52 = scmp.eq.s32.totalorder %s14, 1
    %p53 = por %p51, %p52
    %p54 = scmp.ne.s32.totalorder %s45, %s46
    %p55 = scmp.eq.s32.totalorder %s14, 0
    %p56 = por %p54, %p55
    %p57 = scmp.ne.s32.totalorder %s45, %s46
    %p58 = scmp.eq.s32.totalorder %s15, 1
    %p59 = por %p57, %p58
    %p61 = scmp.ne.s32.totalorder %s46, %s60
    %p62 = scmp.eq.s32.totalorder %s15, 0
    %p63 = por %p61, %p62
    %s65 = sadd.s32 %s64, 1
    %p68 = scmp.eq.s32.totalorder %s9, 1
    %p69 = scmp.ne.s32.totalorder %s64, %s66
    %p70 = scmp.eq.s32.totalorder %s9, 0
    %p71 = por %p69, %p70
    %p72 = scmp.ne.s32.totalorder %s64, %s66
    %p73 = scmp.eq.s32.totalorder %s14, 1
    %p74 = por %p72, %p73
    %p75 = scmp.ne.s32.totalorder %s66, %s67
    %p76 = scmp.eq.s32.totalorder %s14, 0
    %p77 = por %p75, %p76
    %p78 = scmp.ne.s32.totalorder %s66, %s67
    %p79 = scmp.eq.s32.totalorder %s15, 1
    %p80 = por %p78, %p79
    %p82 = scmp.ne.s32.totalorder %s67, %s81
    %p83 = scmp.eq.s32.totalorder %s15, 0
    %p84 = por %p82, %p83
    %s85 = ssub.s32 %s9, %s16
    %p86 = scmp.eq.s32.totalorder %s85, 0
    %s88 = sadd.s32 %s87, 1
    %s89 = scalar_select %p86, %s87, %s88
    %p92 = pneg %p86
    %p93 = scmp.eq.s32.totalorder %s9, 1
    %p94 = por %p92, %p93
    %p95 = scmp.ne.s32.totalorder %s87, %s90
    %p96 = scmp.eq.s32.totalorder %s9, 0
    %p97 = por %p95, %p96
    %p98 = scmp.ne.s32.totalorder %s87, %s90
    %p99 = scmp.eq.s32.totalorder %s14, 1
    %p100 = por %p98, %p99
    %p101 = scmp.ne.s32.totalorder %s90, %s91
    %p102 = scmp.eq.s32.totalorder %s14, 0
    %p103 = por %p101, %p102
    %p104 = scmp.ne.s32.totalorder %s90, %s91
    %p105 = scmp.eq.s32.totalorder %s15, 1
    %p106 = por %p104, %p105
    %p108 = scmp.ne.s32.totalorder %s91, %s107
    %p109 = scmp.eq.s32.totalorder %s15, 0
    %p110 = por %p108, %p109
    %p111 = scmp.le.s32.totalorder 1, %s9
    %p112 = scmp.lt.s32.totalorder %s9, 3
    %p113 = pnand %p111, %p112
    %p114 = pneg %p113
    // Predicated region
    $region9: #{repncspelan4.1} parent=5 // pred_check
      _
    $region10: #{repncspelan4.1} parent=5 // pred_check_branch
      %116 = sbr.rel (%p113) target = $region12
    $region11: #{repncspelan4.1} parent=5 // pred_region
      %s117 = ssub.s32 %s9, 1
      // Predicated region
      $region13: #{repncspelan4.1} parent=11 // pred_check
        %p118 = pneg %p56
      $region14: #{repncspelan4.1} parent=11 // pred_check_branch
        %120 = sbr.rel (%p118) target = $region16
      $region15: #{repncspelan4.1} parent=11 // pred_region
        _
      $region16: #{repncspelan4.1} parent=11 // pred_fallthru
        _
      // Predicated region
      $region17: #{repncspelan4.1} parent=11 // pred_check
        %p121 = pneg %p77
      $region18: #{repncspelan4.1} parent=11 // pred_check_branch
        %123 = sbr.rel (%p121) target = $region20
      $region19: #{repncspelan4.1} parent=11 // pred_region
        _
      $region20: #{repncspelan4.1} parent=11 // pred_fallthru
        _
    $region12: #{repncspelan4.1} parent=5 // pred_fallthru
      _
    %p124 = scmp.lt.s32.totalorder %s9, 2
    // Predicated region
    $region21: #{repncspelan4.1} parent=5 // pred_check
      %p125 = pneg %p124
    $region22: #{repncspelan4.1} parent=5 // pred_check_branch
      %127 = sbr.rel (%p125) target = $region24
    $region23: #{repncspelan4.1} parent=5 // pred_region
      // Predicated region
      $region25: #{repncspelan4.1} parent=23 // pred_check
        %p128 = pneg %p29
      $region26: #{repncspelan4.1} parent=23 // pred_check_branch
        %130 = sbr.rel (%p128) target = $region28
      $region27: #{repncspelan4.1} parent=23 // pred_region
        %p131 = scmp.lt.s32.totalorder %s9, 1
        %s132 = scalar_select %p131, %s9, 1
        %s133 = smul.addr %s132, 2
        %s134 = smul.addr %s133, 2
        %s135 = scalar_lea.vmem %s0, %s134
      $region28: #{repncspelan4.1} parent=23 // pred_fallthru
        _
    $region24: #{repncspelan4.1} parent=5 // pred_fallthru
      _
    %p136 = scmp.le.s32.totalorder 1, %s9
    %p137 = scmp.lt.s32.totalorder %s9, 3
    %p138 = pnand %p136, %p137
    %p139 = pneg %p138
    // Predicated region
    $region29: #{repncspelan4.1} parent=5 // pred_check
      _
    $region30: #{repncspelan4.1} parent=5 // pred_check_branch
      %141 = sbr.rel (%p138) target = $region32
    $region31: #{repncspelan4.1} parent=5 // pred_region
      %s142 = ssub.s32 %s9, 1
      %p143 = scmp.lt.s32.totalorder %s14, 1
      %s144 = scalar_select %p143, %s14, 1
      %s145 = smul.addr %s144, 2
      %s146 = smul.addr %s145, 2
      %s147 = scalar_lea.vmem %s0, %s146
      %p148 = pneg %p35
      %p149 = pneg %p32
      %p150 = pneg %p56
      %p151 = pneg %p53
      %p152 = pneg %p77
      %p153 = pneg %p74
      %p154 = pneg %p103
      %p155 = pneg %p100
      %p156 = scmp.lt.s32.totalorder %s14, 1
      %s157 = scalar_select %p156, %s14, 1
      %s158 = smul.addr %s157, 4
      %s159 = smul.addr %s158, 8
      %s160 = scalar_lea.vmem %s3, %s159
      %p161 = scmp.lt.s32.totalorder %s14, 1
      %s162 = scalar_select %p161, %s14, 1
      %s163 = smul.addr %s162, 2
      %s164 = smul.addr %s163, 2
      %s165 = scalar_lea.vmem %s0, %s164
      %p166 = scmp.lt.s32.totalorder %s14, 1
      %s167 = scalar_select %p166, %s14, 1
      %s168 = smul.addr %s167, 4
      %s169 = smul.addr %s168, 8
      %s170 = scalar_lea.vmem %s3, %s169
      %v174 = vlaneseq
      %v175 = vand.u32 %v174, 127
      %v176 = vadd.s32 %v175, 128
      %vm177 = vcmp.lt.s32.totalorder %v175, 0
      %v178 = vsub.s32 0, %v175
      %v179 = vsel %vm177, %v178, %v175
      %v180 = vshrl.u32 %v179, 4
      %v181 = vand.u32 %v179, 15
      %v182 = vsub.s32 0, %v181
      %v183 = vsel %vm177, %v182, %v181
      %vm184 = vcmp.lt.s32.totalorder %v176, 0
      %v185 = vsub.s32 0, %v176
      %v186 = vsel %vm184, %v185, %v176
      %v187 = vshrl.u32 %v186, 4
      %v188 = vand.u32 %v186, 15
      %v189 = vsub.s32 0, %v188
      %v190 = vsel %vm184, %v189, %v188
      %vm191 = vcmp.ne.s32.totalorder %v183, 0
      %vm192 = vcmp.ne.s32.totalorder %v190, 0
      %vm193 = vcmp.lt.s32.totalorder %v183, 0
      %vm194 = vcmp.lt.s32.totalorder %v190, 0
      %vm195 = vmand %vm193, %vm191
      %vm196 = vmand %vm194, %vm192
      %v197 = vadd.s32 %v183, 16
      %v198 = vadd.s32 %v190, 16
      %v199 = vsel %vm195, %v197, %v183
      %v200 = vsel %vm196, %v198, %v190
      %vm201 = vcmp.lt.s32.totalorder %v199, 15
      %vm202 = vcmp.lt.s32.totalorder %v200, 15
      %vm203 = vcmp.ge.s32.totalorder %v199, 1
      %vm204 = vcmp.ge.s32.totalorder %v200, 1
      %v205 = vld [vmem:[%s165] sm:$0xf]
      %v206 = vld [vmem:[%s1] sm:$0xf]
      %v207 = vld [vmem:[%s2] sm:$0xff]
      %209 = vset.pattern.permute.xlu0 0
      %210 = vperm.xlu0 %209, %v207
      %v211 = vpop.permute.xlu0 %210
      %v215 = vunpack.c.l.s4 1983009808
      %v216 = vunpack.c.0.s8 %v215
      %v217 = vlaneseq
      %v218 = vshrl.u32 %v217, 7
      %v219 = vsub.s32 %v216, %v218
      %v220 = vrot.slane %v205, %v219
      %v221 = vcombine.high %v220, %v220
      %vm222 = vcmask 31744
      %v224 = vsel %vm222, %v206, 0
      %vm226 = vcmask 1041408
      %v228 = vsel %vm226, %v220, 0
      %v231 = vsel %vm226, %v221, 0
      %233 = vmatprep.subr.bf16.mxu0 %v231
      %234 = vmatpush1.bf16.msra.mxu0 %v228
      %235 = vmatprep.subr.bf16.mxu0 0
      %236 = vmatpush1.bf16.msra.mxu0 0
      %237 = vmatprep.subr.bf16.mxu0 0
      %238 = vmatpush1.bf16.msra.mxu0 0
      %239 = vmatprep.subr.bf16.mxu0 0
      %240 = vmatpush1.bf16.msra.mxu0 0
      %241 = vmatprep.subr.bf16.mxu0 0
      %242 = vmatpush1.bf16.msra.mxu0 0
      %243 = vmatprep.subr.bf16.mxu0 0
      %244 = vmatpush1.bf16.msra.mxu0 0
      %245 = vmatprep.subr.bf16.mxu0 0
      %246 = vmatpush1.bf16.msra.mxu0 0
      %247 = vmatprep.subr.bf16.mxu0 0
      %248 = vmatpush1.bf16.msra.mxu0 0
      %249 = vmatprep.subr.bf16.mxu0 0
      %250 = vmatpush1.bf16.msra.mxu0 0
      %251 = vmatprep.subr.bf16.mxu0 0
      %252 = vmatpush1.bf16.msra.mxu0 0
      %253 = vmatprep.subr.bf16.mxu0 0
      %254 = vmatpush1.bf16.msra.mxu0 0
      %255 = vmatprep.subr.bf16.mxu0 0
      %256 = vmatpush1.bf16.msra.mxu0 0
      %257 = vmatprep.subr.bf16.mxu0 0
      %258 = vmatpush1.bf16.msra.mxu0 0
      %259 = vmatprep.subr.bf16.mxu0 0
      %260 = vmatpush1.bf16.msra.mxu0 0
      %261 = vmatprep.subr.bf16.mxu0 0
      %262 = vmatpush1.bf16.msra.mxu0 0
      %263 = vmatprep.subr.bf16.mxu0 0
      %264 = vmatpush1.bf16.msra.mxu0 0
      %265 = vmatprep.mubr.bf16.mxu0 0
      %266 = vmatmul.mubr.bf16.gmra.mrb[0].mxu0 %v224
      %v267 = vpop.f32.mrb[0].mxu0
      %v268 = vadd.f32 %v211, %v267
      %v269 = vpop.f32.mrb[0].mxu0
      %v270 = vadd.f32 %v211, %v269
      %v271 = vpop.f32.mrb[0].mxu0
      %v272 = vpop.f32.mrb[0].mxu0
      %273 = vdwg.mxu0
      %v274 = vxor.u32 %v268, 2147483648
      %v275 = vxor.u32 %v270, 2147483648
      %v276 = vmul.f32 %v274, 1.442695
      %v277 = vpow.pop %v276
      %v278 = vmul.f32 %v275, 1.442695
      %v279 = vpow.pop %v278
      %v280 = vadd.f32 %v277, 1.0
      %v281 = vadd.f32 %v279, 1.0
      %v282 = vrcp.pop %v280
      %v283 = vmul.f32 1.0, %v282
      %v284 = vrcp.pop %v281
      %v285 = vmul.f32 1.0, %v284
      %v286 = vmul.f32 %v268, %v283
      %v287 = vmul.f32 %v270, %v285
      %v288 = vpack.c.bf16 %v286, %v286
      %v289 = vpack.c.bf16 %v287, %v287
      %v290 = vld [vmem:[%s1 + $0x4] sm:$0xf]
      %v291 = vld [vmem:[%s1 + $0x8] sm:$0xf]
      %v292 = vld [vmem:[%s2 + $0x8] sm:$0xff]
      %v293 = vld [vmem:[%s2 + $0x10] sm:$0xff]
      %295 = vset.pattern.permute.xlu0 0
      %296 = vperm.xlu0 %295, %v292
      %v297 = vpop.permute.xlu0 %296
      %300 = vset.pattern.permute.xlu0 0
      %301 = vperm.xlu0 %300, %v293
      %v302 = vpop.permute.xlu0 %301
      %v306 = vunpack.c.l.b16 %v290
      %v307 = vunpack.c.l.b16 %v291
      %v308 = vpack.c.b16 %v307, %v306
      %vm309 = vcmask 64512
      %v311 = vsel %vm309, %v308, 0
      %vm313 = vcmask 1043456
      %v315 = vsel %vm313, %v288, 0
      %v318 = vsel %vm313, %v289, 0
      %320 = vmatprep.subr.bf16.mxu0 %v318
      %321 = vmatpush1.bf16.msra.mxu0 %v315
      %322 = vmatprep.subr.bf16.mxu0 0
      %323 = vmatpush1.bf16.msra.mxu0 0
      %324 = vmatprep.subr.bf16.mxu0 0
      %325 = vmatpush1.bf16.msra.mxu0 0
      %326 = vmatprep.subr.bf16.mxu0 0
      %327 = vmatpush1.bf16.msra.mxu0 0
      %328 = vmatprep.subr.bf16.mxu0 0
      %329 = vmatpush1.bf16.msra.mxu0 0
      %330 = vmatprep.subr.bf16.mxu0 0
      %331 = vmatpush1.bf16.msra.mxu0 0
      %332 = vmatprep.subr.bf16.mxu0 0
      %333 = vmatpush1.bf16.msra.mxu0 0
      %334 = vmatprep.subr.bf16.mxu0 0
      %335 = vmatpush1.bf16.msra.mxu0 0
      %336 = vmatprep.subr.bf16.mxu0 0
      %337 = vmatpush1.bf16.msra.mxu0 0
      %338 = vmatprep.subr.bf16.mxu0 0
      %339 = vmatpush1.bf16.msra.mxu0 0
      %340 = vmatprep.subr.bf16.mxu0 0
      %341 = vmatpush1.bf16.msra.mxu0 0
      %342 = vmatprep.subr.bf16.mxu0 0
      %343 = vmatpush1.bf16.msra.mxu0 0
      %344 = vmatprep.subr.bf16.mxu0 0
      %345 = vmatpush1.bf16.msra.mxu0 0
      %346 = vmatprep.subr.bf16.mxu0 0
      %347 = vmatpush1.bf16.msra.mxu0 0
      %348 = vmatprep.subr.bf16.mxu0 0
      %349 = vmatpush1.bf16.msra.mxu0 0
      %350 = vmatprep.subr.bf16.mxu0 0
      %351 = vmatpush1.bf16.msra.mxu0 0
      %352 = vmatprep.mubr.bf16.mxu0 0
      %353 = vmatmul.mubr.bf16.gmra.mrb[0].mxu0 %v311
      %v354 = vpop.f32.mrb[0].mxu0
      %v355 = vadd.f32 %v297, %v354
      %v356 = vpop.f32.mrb[0].mxu0
      %v357 = vadd.f32 %v297, %v356
      %v358 = vpop.f32.mrb[0].mxu0
      %v359 = vadd.f32 %v302, %v358
      %v360 = vpop.f32.mrb[0].mxu0
      %v361 = vadd.f32 %v302, %v360
      %362 = vdwg.mxu0
      %v363 = vxor.u32 %v355, 2147483648
      %v364 = vxor.u32 %v357, 2147483648
      %v365 = vxor.u32 %v359, 2147483648
      %v366 = vxor.u32 %v361, 2147483648
      %v367 = vmul.f32 %v363, 1.442695
      %v368 = vpow.pop %v367
      %v369 = vmul.f32 %v364, 1.442695
      %v370 = vpow.pop %v369
      %v371 = vmul.f32 %v365, 1.442695
      %v372 = vpow.pop %v371
      %v373 = vmul.f32 %v366, 1.442695
      %v374 = vpow.pop %v373
      %v375 = vadd.f32 %v368, 1.0
      %v376 = vadd.f32 %v370, 1.0
      %v377 = vadd.f32 %v372, 1.0
      %v378 = vadd.f32 %v374, 1.0
      %v379 = vrcp.pop %v375
      %v380 = vmul.f32 1.0, %v379
      %v381 = vrcp.pop %v376
      %v382 = vmul.f32 1.0, %v381
      %v383 = vrcp.pop %v377
      %v384 = vmul.f32 1.0, %v383
      %v385 = vrcp.pop %v378
      %v386 = vmul.f32 1.0, %v385
      %v387 = vmul.f32 %v355, %v380
      %v388 = vmul.f32 %v357, %v382
      %v389 = vmul.f32 %v359, %v384
      %v390 = vmul.f32 %v361, %v386
      %v391 = vpack.c.bf16 %v389, %v389
      %v392 = vpack.c.bf16 %v390, %v390
      %v393 = vpack.c.bf16 %v387, %v387
      %v394 = vpack.c.bf16 %v388, %v388
      %v395 = vld [vmem:[%s2 + $0x18] sm:$0xff]
      %398 = vrot.lane.b32.xlu0 %v393, 17
      %v399 = vpop.permute.xlu0 %398
      %400 = vrot.lane.b32.xlu0 %v394, 17
      %v401 = vpop.permute.xlu0 %400
      %vm402 = vcmask 138240
      %v403 = vsel %vm402, %v399, %v401
      %vm405 = vcmask 138240
      %v408 = vsel %vm405, 0, %v399
      %v411 = vsel %vm405, %v401, 0
      %v413 = vsel %vm203, 1, 0
      %v414 = vsel %vm204, 1, 0
      %vm415 = vcmp.eq.s32.totalorder %v413, 1
      %vm416 = vcmp.eq.s32.totalorder %v414, 1
      %vm417 = vmpackc.low %vm416, %vm415
      %v418 = vsel %vm417, 65537, 0
      %v419 = vlaneseq
      %v420 = vshrl.u32 %v419, 7
      %v421 = vsub.s32 0, %v420
      %v422 = vrot.slane %v418, %v421
      %v423 = vlaneseq
      %v424 = vshrl.u32 %v423, 7
      %v425 = vsub.s32 4, %v424
      %v426 = vrot.slane %v418, %v425
      %vm427 = vcmp.ne.s16.totalorder %v422, 0
      %vm428 = vcmp.ne.s16.totalorder %v426, 0
      %v429 = vsel %vm427, %v408, 0
      %v430 = vsel %vm428, %v403, 0
      %v431 = vld [vmem:[%s1 + $0xc] sm:$0xf]
      %v432 = vld [vmem:[%s1 + $0x10] sm:$0xf]
      %435 = vrot.lane.b32.xlu0 %v408, 127
      %v436 = vpop.permute.xlu0 %435
      %437 = vrot.lane.b32.xlu0 %v403, 127
      %v438 = vpop.permute.xlu0 %437
      %439 = vrot.lane.b32.xlu0 %v411, 127
      %v440 = vpop.permute.xlu0 %439
      %vm441 = vcmask 1039360
      %v442 = vsel %vm441, %v436, %v438
      %v443 = vsel %vm441, %v438, %v440
      %v445 = vsel %vm309, %v432, 0
      %v448 = vsel %vm313, %v442, 0
      %v451 = vsel %vm313, %v443, 0
      %453 = vmatprep.subr.bf16.mxu0 %v451
      %454 = vmatpush1.bf16.msra.mxu0 %v448
      %455 = vmatprep.subr.bf16.mxu0 0
      %456 = vmatpush1.bf16.msra.mxu0 0
      %457 = vmatprep.subr.bf16.mxu0 0
      %458 = vmatpush1.bf16.msra.mxu0 0
      %459 = vmatprep.subr.bf16.mxu0 0
      %460 = vmatpush1.bf16.msra.mxu0 0
      %461 = vmatprep.subr.bf16.mxu0 0
      %462 = vmatpush1.bf16.msra.mxu0 0
      %463 = vmatprep.subr.bf16.mxu0 0
      %464 = vmatpush1.bf16.msra.mxu0 0
      %465 = vmatprep.subr.bf16.mxu0 0
      %466 = vmatpush1.bf16.msra.mxu0 0
      %467 = vmatprep.subr.bf16.mxu0 0
      %468 = vmatpush1.bf16.msra.mxu0 0
      %469 = vmatprep.subr.bf16.mxu0 0
      %470 = vmatpush1.bf16.msra.mxu0 0
      %471 = vmatprep.subr.bf16.mxu0 0
      %472 = vmatpush1.bf16.msra.mxu0 0
      %473 = vmatprep.subr.bf16.mxu0 0
      %474 = vmatpush1.bf16.msra.mxu0 0
      %475 = vmatprep.subr.bf16.mxu0 0
      %476 = vmatpush1.bf16.msra.mxu0 0
      %477 = vmatprep.subr.bf16.mxu0 0
      %478 = vmatpush1.bf16.msra.mxu0 0
      %479 = vmatprep.subr.bf16.mxu0 0
      %480 = vmatpush1.bf16.msra.mxu0 0
      %481 = vmatprep.subr.bf16.mxu0 0
      %482 = vmatpush1.bf16.msra.mxu0 0
      %483 = vmatprep.subr.bf16.mxu0 0
      %484 = vmatpush1.bf16.msra.mxu0 0
      %485 = vmatprep.mubr.bf16.mxu0 0
      %486 = vmatmul.mubr.bf16.gmra.mrb[0].mxu0 %v445
      %v487 = vpop.f32.mrb[0].mxu0
      %v488 = vadd.f32 0.0, %v487
      %v489 = vpop.f32.mrb[0].mxu0
      %v490 = vadd.f32 0.0, %v489
      %v491 = vpop.f32.mrb[0].mxu0
      %v492 = vpop.f32.mrb[0].mxu0
      %493 = vdwg.mxu0
      %v495 = vsel %vm309, %v431, 0
      %v498 = vsel %vm313, %v429, 0
      %v501 = vsel %vm313, %v430, 0
      %503 = vmatprep.subr.bf16.mxu0 %v501
      %504 = vmatpush1.bf16.msra.mxu0 %v498
      %505 = vmatprep.subr.bf16.mxu0 0
      %506 = vmatpush1.bf16.msra.mxu0 0
      %507 = vmatprep.subr.bf16.mxu0 0
      %508 = vmatpush1.bf16.msra.mxu0 0
      %509 = vmatprep.subr.bf16.mxu0 0
      %510 = vmatpush1.bf16.msra.mxu0 0
      %511 = vmatprep.subr.bf16.mxu0 0
      %512 = vmatpush1.bf16.msra.mxu0 0
      %513 = vmatprep.subr.bf16.mxu0 0
      %514 = vmatpush1.bf16.msra.mxu0 0
      %515 = vmatprep.subr.bf16.mxu0 0
      %516 = vmatpush1.bf16.msra.mxu0 0
      %517 = vmatprep.subr.bf16.mxu0 0
      %518 = vmatpush1.bf16.msra.mxu0 0
      %519 = vmatprep.subr.bf16.mxu0 0
      %520 = vmatpush1.bf16.msra.mxu0 0
      %521 = vmatprep.subr.bf16.mxu0 0
      %522 = vmatpush1.bf16.msra.mxu0 0
      %523 = vmatprep.subr.bf16.mxu0 0
      %524 = vmatpush1.bf16.msra.mxu0 0
      %525 = vmatprep.subr.bf16.mxu0 0
      %526 = vmatpush1.bf16.msra.mxu0 0
      %527 = vmatprep.subr.bf16.mxu0 0
      %528 = vmatpush1.bf16.msra.mxu0 0
      %529 = vmatprep.subr.bf16.mxu0 0
      %530 = vmatpush1.bf16.msra.mxu0 0
      %531 = vmatprep.subr.bf16.mxu0 0
      %532 = vmatpush1.bf16.msra.mxu0 0
      %533 = vmatprep.subr.bf16.mxu0 0
      %534 = vmatpush1.bf16.msra.mxu0 0
      %535 = vmatprep.mubr.bf16.mxu0 0
      %536 = vmatmul.mubr.bf16.gmra.mrb[0].mxu0 %v495
      %v537 = vpop.f32.mrb[0].mxu0
      %v538 = vadd.f32 %v488, %v537
      %v539 = vpop.f32.mrb[0].mxu0
      %v540 = vadd.f32 %v490, %v539
      %v541 = vpop.f32.mrb[0].mxu0
      %v542 = vpop.f32.mrb[0].mxu0
      %543 = vdwg.mxu0
      %v544 = vsel %vm201, 1, 0
      %v545 = vsel %vm202, 1, 0
      %vm546 = vcmp.eq.s32.totalorder %v544, 1
      %vm547 = vcmp.eq.s32.totalorder %v545, 1
      %vm548 = vmpackc.low %vm547, %vm546
      %v549 = vsel %vm548, 65537, 0
      %v550 = vlaneseq
      %v551 = vshrl.u32 %v550, 7
      %v552 = vsub.s32 0, %v551
      %v553 = vrot.slane %v549, %v552
      %v554 = vlaneseq
      %v555 = vshrl.u32 %v554, 7
      %v556 = vsub.s32 4, %v555
      %v557 = vrot.slane %v549, %v556
      %558 = vrot.lane.b32.xlu0 %v553, 2
      %v559 = vpop.permute.xlu0 %558
      %560 = vrot.lane.b32.xlu0 %v557, 2
      %v561 = vpop.permute.xlu0 %560
      %vm562 = vcmask 15360
      %v563 = vsel %vm562, %v559, %v561
      %vm564 = vcmp.ne.s16.totalorder %v559, 0
      %vm565 = vcmp.ne.s16.totalorder %v563, 0
      %vm566 = vcmp.ne.s16.totalorder %v561, 0
      %v567 = vsel %vm564, %v408, 0
      %v568 = vsel %vm565, %v403, 0
      %v569 = vsel %vm566, %v411, 0
      %v570 = vld [vmem:[%s1 + $0x14] sm:$0xf]
      %574 = vrot.lane.b32.xlu0 %v567, 126
      %v575 = vpop.permute.xlu0 %574
      %576 = vrot.lane.b32.xlu0 %v568, 126
      %v577 = vpop.permute.xlu0 %576
      %578 = vrot.lane.b32.xlu0 %v569, 126
      %v579 = vpop.permute.xlu0 %578
      %vm580 = vcmask 1031168
      %v581 = vsel %vm580, %v575, %v577
      %v582 = vsel %vm580, %v577, %v579
      %v584 = vsel %vm309, %v570, 0
      %v587 = vsel %vm313, %v581, 0
      %v590 = vsel %vm313, %v582, 0
      %592 = vmatprep.subr.bf16.mxu0 %v590
      %593 = vmatpush1.bf16.msra.mxu0 %v587
      %594 = vmatprep.subr.bf16.mxu0 0
      %595 = vmatpush1.bf16.msra.mxu0 0
      %596 = vmatprep.subr.bf16.mxu0 0
      %597 = vmatpush1.bf16.msra.mxu0 0
      %598 = vmatprep.subr.bf16.mxu0 0
      %599 = vmatpush1.bf16.msra.mxu0 0
      %600 = vmatprep.subr.bf16.mxu0 0
      %601 = vmatpush1.bf16.msra.mxu0 0
      %602 = vmatprep.subr.bf16.mxu0 0
      %603 = vmatpush1.bf16.msra.mxu0 0
      %604 = vmatprep.subr.bf16.mxu0 0
      %605 = vmatpush1.bf16.msra.mxu0 0
      %606 = vmatprep.subr.bf16.mxu0 0
      %607 = vmatpush1.bf16.msra.mxu0 0
      %608 = vmatprep.subr.bf16.mxu0 0
      %609 = vmatpush1.bf16.msra.mxu0 0
      %610 = vmatprep.subr.bf16.mxu0 0
      %611 = vmatpush1.bf16.msra.mxu0 0
      %612 = vmatprep.subr.bf16.mxu0 0
      %613 = vmatpush1.bf16.msra.mxu0 0
      %614 = vmatprep.subr.bf16.mxu0 0
      %615 = vmatpush1.bf16.msra.mxu0 0
      %616 = vmatprep.subr.bf16.mxu0 0
      %617 = vmatpush1.bf16.msra.mxu0 0
      %618 = vmatprep.subr.bf16.mxu0 0
      %619 = vmatpush1.bf16.msra.mxu0 0
      %620 = vmatprep.subr.bf16.mxu0 0
      %621 = vmatpush1.bf16.msra.mxu0 0
      %622 = vmatprep.subr.bf16.mxu0 0
      %623 = vmatpush1.bf16.msra.mxu0 0
      %624 = vmatprep.mubr.bf16.mxu0 0
      %625 = vmatmul.mubr.bf16.gmra.mrb[0].mxu0 %v584
      %v626 = vpop.f32.mrb[0].mxu0
      %v627 = vadd.f32 0.0, %v626
      %v628 = vpop.f32.mrb[0].mxu0
      %v629 = vadd.f32 0.0, %v628
      %v630 = vpop.f32.mrb[0].mxu0
      %v631 = vpop.f32.mrb[0].mxu0
      %632 = vdwg.mxu0
      %v633 = vadd.f32 %v538, %v627
      %v634 = vadd.f32 %v540, %v629
      %635 = vrot.lane.b32.xlu0 %v422, 16
      %v636 = vpop.permute.xlu0 %635
      %637 = vrot.lane.b32.xlu0 %v426, 16
      %v638 = vpop.permute.xlu0 %637
      %vm639 = vcmask 130048
      %v640 = vsel %vm639, %v636, %v638
      %vm641 = vcmp.ne.s16.totalorder %v636, 0
      %vm642 = vcmp.ne.s16.totalorder %v640, 0
      %vm643 = vcmp.ne.s16.totalorder %v638, 0
      %v644 = vsel %vm641, %v408, 0
      %v645 = vsel %vm642, %v403, 0
      %v646 = vsel %vm643, %v411, 0
      %v647 = vld [vmem:[%s1 + $0x18] sm:$0xf]
      %651 = vrot.lane.b32.xlu0 %v644, 112
      %v652 = vpop.permute.xlu0 %651
      %653 = vrot.lane.b32.xlu0 %v645, 112
      %v654 = vpop.permute.xlu0 %653
      %655 = vrot.lane.b32.xlu0 %v646, 112
      %v656 = vpop.permute.xlu0 %655
      %vm657 = vcmask 916480
      %v658 = vsel %vm657, %v652, %v654
      %v659 = vsel %vm657, %v654, %v656
      %v661 = vsel %vm309, %v647, 0
      %v664 = vsel %vm313, %v658, 0
      %v667 = vsel %vm313, %v659, 0
      %669 = vmatprep.subr.bf16.mxu0 %v667
      %670 = vmatpush1.bf16.msra.mxu0 %v664
      %671 = vmatprep.subr.bf16.mxu0 0
      %672 = vmatpush1.bf16.msra.mxu0 0
      %673 = vmatprep.subr.bf16.mxu0 0
      %674 = vmatpush1.bf16.msra.mxu0 0
      %675 = vmatprep.subr.bf16.mxu0 0
      %676 = vmatpush1.bf16.msra.mxu0 0
      %677 = vmatprep.subr.bf16.mxu0 0
      %678 = vmatpush1.bf16.msra.mxu0 0
      %679 = vmatprep.subr.bf16.mxu0 0
      %680 = vmatpush1.bf16.msra.mxu0 0
      %681 = vmatprep.subr.bf16.mxu0 0
      %682 = vmatpush1.bf16.msra.mxu0 0
      %683 = vmatprep.subr.bf16.mxu0 0
      %684 = vmatpush1.bf16.msra.mxu0 0
      %685 = vmatprep.subr.bf16.mxu0 0
      %686 = vmatpush1.bf16.msra.mxu0 0
      %687 = vmatprep.subr.bf16.mxu0 0
      %688 = vmatpush1.bf16.msra.mxu0 0
      %689 = vmatprep.subr.bf16.mxu0 0
      %690 = vmatpush1.bf16.msra.mxu0 0
      %691 = vmatprep.subr.bf16.mxu0 0
      %692 = vmatpush1.bf16.msra.mxu0 0
      %693 = vmatprep.subr.bf16.mxu0 0
      %694 = vmatpush1.bf16.msra.mxu0 0
      %695 = vmatprep.subr.bf16.mxu0 0
      %696 = vmatpush1.bf16.msra.mxu0 0
      %697 = vmatprep.subr.bf16.mxu0 0
      %698 = vmatpush1.bf16.msra.mxu0 0
      %699 = vmatprep.subr.bf16.mxu0 0
      %700 = vmatpush1.bf16.msra.mxu0 0
      %701 = vmatprep.mubr.bf16.mxu0 0
      %702 = vmatmul.mubr.bf16.gmra.mrb[0].mxu0 %v661
      %v703 = vpop.f32.mrb[0].mxu0
      %v704 = vadd.f32 0.0, %v703
      %v705 = vpop.f32.mrb[0].mxu0
      %v706 = vadd.f32 0.0, %v705
      %v707 = vpop.f32.mrb[0].mxu0
      %v708 = vpop.f32.mrb[0].mxu0
      %709 = vdwg.mxu0
      %v710 = vadd.f32 %v633, %v704
      %v711 = vadd.f32 %v634, %v706
      %v712 = vld [vmem:[%s1 + $0x1c] sm:$0xf]
      %713 = vrot.lane.b32.xlu0 %v408, 111
      %v714 = vpop.permute.xlu0 %713
      %715 = vrot.lane.b32.xlu0 %v403, 111
      %v716 = vpop.permute.xlu0 %715
      %717 = vrot.lane.b32.xlu0 %v411, 111
      %v718 = vpop.permute.xlu0 %717
      %vm719 = vcmask 908288
      %v720 = vsel %vm719, %v714, %v716
      %v721 = vsel %vm719, %v716, %v718
      %v723 = vsel %vm309, %v712, 0
      %v726 = vsel %vm313, %v720, 0
      %v729 = vsel %vm313, %v721, 0
      %731 = vmatprep.subr.bf16.mxu0 %v729
      %732 = vmatpush1.bf16.msra.mxu0 %v726
      %733 = vmatprep.subr.bf16.mxu0 0
      %734 = vmatpush1.bf16.msra.mxu0 0
      %735 = vmatprep.subr.bf16.mxu0 0
      %736 = vmatpush1.bf16.msra.mxu0 0
      %737 = vmatprep.subr.bf16.mxu0 0
      %738 = vmatpush1.bf16.msra.mxu0 0
      %739 = vmatprep.subr.bf16.mxu0 0
      %740 = vmatpush1.bf16.msra.mxu0 0
      %741 = vmatprep.subr.bf16.mxu0 0
      %742 = vmatpush1.bf16.msra.mxu0 0
      %743 = vmatprep.subr.bf16.mxu0 0
      %744 = vmatpush1.bf16.msra.mxu0 0
      %745 = vmatprep.subr.bf16.mxu0 0
      %746 = vmatpush1.bf16.msra.mxu0 0
      %747 = vmatprep.subr.bf16.mxu0 0
      %748 = vmatpush1.bf16.msra.mxu0 0
      %749 = vmatprep.subr.bf16.mxu0 0
      %750 = vmatpush1.bf16.msra.mxu0 0
      %751 = vmatprep.subr.bf16.mxu0 0
      %752 = vmatpush1.bf16.msra.mxu0 0
      %753 = vmatprep.subr.bf16.mxu0 0
      %754 = vmatpush1.bf16.msra.mxu0 0
      %755 = vmatprep.subr.bf16.mxu0 0
      %756 = vmatpush1.bf16.msra.mxu0 0
      %757 = vmatprep.subr.bf16.mxu0 0
      %758 = vmatpush1.bf16.msra.mxu0 0
      %759 = vmatprep.subr.bf16.mxu0 0
      %760 = vmatpush1.bf16.msra.mxu0 0
      %761 = vmatprep.subr.bf16.mxu0 0
      %762 = vmatpush1.bf16.msra.mxu0 0
      %763 = vmatprep.mubr.bf16.mxu0 0
      %764 = vmatmul.mubr.bf16.gmra.mrb[0].mxu0 %v723
      %v765 = vpop.f32.mrb[0].mxu0
      %v766 = vadd.f32 0.0, %v765
      %v767 = vpop.f32.mrb[0].mxu0
      %v768 = vadd.f32 0.0, %v767
      %v769 = vpop.f32.mrb[0].mxu0
      %v770 = vpop.f32.mrb[0].mxu0
      %771 = vdwg.mxu0
      %v772 = vadd.f32 %v710, %v766
      %v773 = vadd.f32 %v711, %v768
      %774 = vrot.lane.b32.xlu0 %v553, 18
      %v775 = vpop.permute.xlu0 %774
      %776 = vrot.lane.b32.xlu0 %v557, 18
      %v777 = vpop.permute.xlu0 %776
      %vm778 = vcmask 146432
      %v779 = vsel %vm778, %v775, %v777
      %vm780 = vcmp.ne.s16.totalorder %v775, 0
      %vm781 = vcmp.ne.s16.totalorder %v779, 0
      %vm782 = vcmp.ne.s16.totalorder %v777, 0
      %v783 = vsel %vm780, %v408, 0
      %v784 = vsel %vm781, %v403, 0
      %v785 = vsel %vm782, %v411, 0
      %v786 = vld [vmem:[%s1 + $0x20] sm:$0xf]
      %790 = vrot.lane.b32.xlu0 %v783, 110
      %v791 = vpop.permute.xlu0 %790
      %792 = vrot.lane.b32.xlu0 %v784, 110
      %v793 = vpop.permute.xlu0 %792
      %794 = vrot.lane.b32.xlu0 %v785, 110
      %v795 = vpop.permute.xlu0 %794
      %vm796 = vcmask 900096
      %v797 = vsel %vm796, %v791, %v793
      %v798 = vsel %vm796, %v793, %v795
      %v800 = vsel %vm309, %v786, 0
      %v803 = vsel %vm313, %v797, 0
      %v806 = vsel %vm313, %v798, 0
      %808 = vmatprep.subr.bf16.mxu0 %v806
      %809 = vmatpush1.bf16.msra.mxu0 %v803
      %810 = vmatprep.subr.bf16.mxu0 0
      %811 = vmatpush1.bf16.msra.mxu0 0
      %812 = vmatprep.subr.bf16.mxu0 0
      %813 = vmatpush1.bf16.msra.mxu0 0
      %814 = vmatprep.subr.bf16.mxu0 0
      %815 = vmatpush1.bf16.msra.mxu0 0
      %816 = vmatprep.subr.bf16.mxu0 0
      %817 = vmatpush1.bf16.msra.mxu0 0
      %818 = vmatprep.subr.bf16.mxu0 0
      %819 = vmatpush1.bf16.msra.mxu0 0
      %820 = vmatprep.subr.bf16.mxu0 0
      %821 = vmatpush1.bf16.msra.mxu0 0
      %822 = vmatprep.subr.bf16.mxu0 0
      %823 = vmatpush1.bf16.msra.mxu0 0
      %824 = vmatprep.subr.bf16.mxu0 0
      %825 = vmatpush1.bf16.msra.mxu0 0
      %826 = vmatprep.subr.bf16.mxu0 0
      %827 = vmatpush1.bf16.msra.mxu0 0
      %828 = vmatprep.subr.bf16.mxu0 0
      %829 = vmatpush1.bf16.msra.mxu0 0
      %830 = vmatprep.subr.bf16.mxu0 0
      %831 = vmatpush1.bf16.msra.mxu0 0
      %832 = vmatprep.subr.bf16.mxu0 0
      %833 = vmatpush1.bf16.msra.mxu0 0
      %834 = vmatprep.subr.bf16.mxu0 0
      %835 = vmatpush1.bf16.msra.mxu0 0
      %836 = vmatprep.subr.bf16.mxu0 0
      %837 = vmatpush1.bf16.msra.mxu0 0
      %838 = vmatprep.subr.bf16.mxu0 0
      %839 = vmatpush1.bf16.msra.mxu0 0
      %840 = vmatprep.mubr.bf16.mxu0 0
      %841 = vmatmul.mubr.bf16.gmra.mrb[0].mxu0 %v800
      %v842 = vpop.f32.mrb[0].mxu0
      %v843 = vadd.f32 0.0, %v842
      %v844 = vpop.f32.mrb[0].mxu0
      %v845 = vadd.f32 0.0, %v844
      %v846 = vpop.f32.mrb[0].mxu0
      %v847 = vpop.f32.mrb[0].mxu0
      %848 = vdwg.mxu0
      %v849 = vadd.f32 %v772, %v843
      %v850 = vadd.f32 %v773, %v845
      %851 = vrot.lane.b32.xlu0 %v422, 32
      %v852 = vpop.permute.xlu0 %851
      %853 = vrot.lane.b32.xlu0 %v426, 32
      %v854 = vpop.permute.xlu0 %853
      %vm855 = vcmask 261120
      %v856 = vsel %vm855, %v852, %v854
      %vm857 = vcmp.ne.s16.totalorder %v852, 0
      %vm858 = vcmp.ne.s16.totalorder %v856, 0
      %vm859 = vcmp.ne.s16.totalorder %v854, 0
      %v860 = vsel %vm857, %v408, 0
      %v861 = vsel %vm858, %v403, 0
      %v862 = vsel %vm859, %v411, 0
      %v863 = vld [vmem:[%s1 + $0x24] sm:$0xf]
      %867 = vrot.lane.b32.xlu0 %v860, 96
      %v868 = vpop.permute.xlu0 %867
      %869 = vrot.lane.b32.xlu0 %v861, 96
      %v870 = vpop.permute.xlu0 %869
      %871 = vrot.lane.b32.xlu0 %v862, 96
      %v872 = vpop.permute.xlu0 %871
      %vm873 = vcmask 785408
      %v874 = vsel %vm873, %v868, %v870
      %v875 = vsel %vm873, %v870, %v872
      %v877 = vsel %vm309, %v863, 0
      %v880 = vsel %vm313, %v874, 0
      %v883 = vsel %vm313, %v875, 0
      %885 = vmatprep.subr.bf16.mxu0 %v883
      %886 = vmatpush1.bf16.msra.mxu0 %v880
      %887 = vmatprep.subr.bf16.mxu0 0
      %888 = vmatpush1.bf16.msra.mxu0 0
      %889 = vmatprep.subr.bf16.mxu0 0
      %890 = vmatpush1.bf16.msra.mxu0 0
      %891 = vmatprep.subr.bf16.mxu0 0
      %892 = vmatpush1.bf16.msra.mxu0 0
      %893 = vmatprep.subr.bf16.mxu0 0
      %894 = vmatpush1.bf16.msra.mxu0 0
      %895 = vmatprep.subr.bf16.mxu0 0
      %896 = vmatpush1.bf16.msra.mxu0 0
      %897 = vmatprep.subr.bf16.mxu0 0
      %898 = vmatpush1.bf16.msra.mxu0 0
      %899 = vmatprep.subr.bf16.mxu0 0
      %900 = vmatpush1.bf16.msra.mxu0 0
      %901 = vmatprep.subr.bf16.mxu0 0
      %902 = vmatpush1.bf16.msra.mxu0 0
      %903 = vmatprep.subr.bf16.mxu0 0
      %904 = vmatpush1.bf16.msra.mxu0 0
      %905 = vmatprep.subr.bf16.mxu0 0
      %906 = vmatpush1.bf16.msra.mxu0 0
      %907 = vmatprep.subr.bf16.mxu0 0
      %908 = vmatpush1.bf16.msra.mxu0 0
      %909 = vmatprep.subr.bf16.mxu0 0
      %910 = vmatpush1.bf16.msra.mxu0 0
      %911 = vmatprep.subr.bf16.mxu0 0
      %912 = vmatpush1.bf16.msra.mxu0 0
      %913 = vmatprep.subr.bf16.mxu0 0
      %914 = vmatpush1.bf16.msra.mxu0 0
      %915 = vmatprep.subr.bf16.mxu0 0
      %916 = vmatpush1.bf16.msra.mxu0 0
      %917 = vmatprep.mubr.bf16.mxu0 0
      %918 = vmatmul.mubr.bf16.gmra.mrb[0].mxu0 %v877
      %v919 = vpop.f32.mrb[0].mxu0
      %v920 = vadd.f32 0.0, %v919
      %v921 = vpop.f32.mrb[0].mxu0
      %v922 = vadd.f32 0.0, %v921
      %v923 = vpop.f32.mrb[0].mxu0
      %v924 = vpop.f32.mrb[0].mxu0
      %925 = vdwg.mxu0
      %v926 = vadd.f32 %v849, %v920
      %v927 = vadd.f32 %v850, %v922
      %v928 = vld [vmem:[%s1 + $0x28] sm:$0xf]
      %929 = vrot.lane.b32.xlu0 %v408, 95
      %v930 = vpop.permute.xlu0 %929
      %931 = vrot.lane.b32.xlu0 %v403, 95
      %v932 = vpop.permute.xlu0 %931
      %933 = vrot.lane.b32.xlu0 %v411, 95
      %v934 = vpop.permute.xlu0 %933
      %vm935 = vcmask 777216
      %v936 = vsel %vm935, %v930, %v932
      %v937 = vsel %vm935, %v932, %v934
      %v939 = vsel %vm309, %v928, 0
      %v942 = vsel %vm313, %v936, 0
      %v945 = vsel %vm313, %v937, 0
      %947 = vmatprep.subr.bf16.mxu0 %v945
      %948 = vmatpush1.bf16.msra.mxu0 %v942
      %949 = vmatprep.subr.bf16.mxu0 0
      %950 = vmatpush1.bf16.msra.mxu0 0
      %951 = vmatprep.subr.bf16.mxu0 0
      %952 = vmatpush1.bf16.msra.mxu0 0
      %953 = vmatprep.subr.bf16.mxu0 0
      %954 = vmatpush1.bf16.msra.mxu0 0
      %955 = vmatprep.subr.bf16.mxu0 0
      %956 = vmatpush1.bf16.msra.mxu0 0
      %957 = vmatprep.subr.bf16.mxu0 0
      %958 = vmatpush1.bf16.msra.mxu0 0
      %959 = vmatprep.subr.bf16.mxu0 0
      %960 = vmatpush1.bf16.msra.mxu0 0
      %961 = vmatprep.subr.bf16.mxu0 0
      %962 = vmatpush1.bf16.msra.mxu0 0
      %963 = vmatprep.subr.bf16.mxu0 0
      %964 = vmatpush1.bf16.msra.mxu0 0
      %965 = vmatprep.subr.bf16.mxu0 0
      %966 = vmatpush1.bf16.msra.mxu0 0
      %967 = vmatprep.subr.bf16.mxu0 0
      %968 = vmatpush1.bf16.msra.mxu0 0
      %969 = vmatprep.subr.bf16.mxu0 0
      %970 = vmatpush1.bf16.msra.mxu0 0
      %971 = vmatprep.subr.bf16.mxu0 0
      %972 = vmatpush1.bf16.msra.mxu0 0
      %973 = vmatprep.subr.bf16.mxu0 0
      %974 = vmatpush1.bf16.msra.mxu0 0
      %975 = vmatprep.subr.bf16.mxu0 0
      %976 = vmatpush1.bf16.msra.mxu0 0
      %977 = vmatprep.subr.bf16.mxu0 0
      %978 = vmatpush1.bf16.msra.mxu0 0
      %979 = vmatprep.mubr.bf16.mxu0 0
      %980 = vmatmul.mubr.bf16.gmra.mrb[0].mxu0 %v939
      %v981 = vpop.f32.mrb[0].mxu0
      %v982 = vadd.f32 0.0, %v981
      %v983 = vpop.f32.mrb[0].mxu0
      %v984 = vadd.f32 0.0, %v983
      %v985 = vpop.f32.mrb[0].mxu0
      %v986 = vpop.f32.mrb[0].mxu0
      %987 = vdwg.mxu0
      %v988 = vadd.f32 %v926, %v982
      %v989 = vadd.f32 %v927, %v984
      %990 = vrot.lane.b32.xlu0 %v553, 34
      %v991 = vpop.permute.xlu0 %990
      %992 = vrot.lane.b32.xlu0 %v557, 34
      %v993 = vpop.permute.xlu0 %992
      %vm994 = vcmask 277504
      %v995 = vsel %vm994, %v991, %v993
      %vm996 = vcmp.ne.s16.totalorder %v991, 0
      %vm997 = vcmp.ne.s16.totalorder %v995, 0
      %vm998 = vcmp.ne.s16.totalorder %v993, 0
      %v999 = vsel %vm996, %v408, 0
      %v1000 = vsel %vm997, %v403, 0
      %v1001 = vsel %vm998, %v411, 0
      %v1002 = vld [vmem:[%s1 + $0x2c] sm:$0xf]
      %1006 = vrot.lane.b32.xlu0 %v999, 94
      %v1007 = vpop.permute.xlu0 %1006
      %1008 = vrot.lane.b32.xlu0 %v1000, 94
      %v1009 = vpop.permute.xlu0 %1008
      %1010 = vrot.lane.b32.xlu0 %v1001, 94
      %v1011 = vpop.permute.xlu0 %1010
      %vm1012 = vcmask 769024
      %v1013 = vsel %vm1012, %v1007, %v1009
      %v1014 = vsel %vm1012, %v1009, %v1011
      %v1016 = vsel %vm309, %v1002, 0
      %v1019 = vsel %vm313, %v1013, 0
      %v1022 = vsel %vm313, %v1014, 0
      %1024 = vmatprep.subr.bf16.mxu0 %v1022
      %1025 = vmatpush1.bf16.msra.mxu0 %v1019
      %1026 = vmatprep.subr.bf16.mxu0 0
      %1027 = vmatpush1.bf16.msra.mxu0 0
      %1028 = vmatprep.subr.bf16.mxu0 0
      %1029 = vmatpush1.bf16.msra.mxu0 0
      %1030 = vmatprep.subr.bf16.mxu0 0
      %1031 = vmatpush1.bf16.msra.mxu0 0
      %1032 = vmatprep.subr.bf16.mxu0 0
      %1033 = vmatpush1.bf16.msra.mxu0 0
      %1034 = vmatprep.subr.bf16.mxu0 0
      %1035 = vmatpush1.bf16.msra.mxu0 0
      %1036 = vmatprep.subr.bf16.mxu0 0
      %1037 = vmatpush1.bf16.msra.mxu0 0
      %1038 = vmatprep.subr.bf16.mxu0 0
      %1039 = vmatpush1.bf16.msra.mxu0 0
      %1040 = vmatprep.subr.bf16.mxu0 0
      %1041 = vmatpush1.bf16.msra.mxu0 0
      %1042 = vmatprep.subr.bf16.mxu0 0
      %1043 = vmatpush1.bf16.msra.mxu0 0
      %1044 = vmatprep.subr.bf16.mxu0 0
      %1045 = vmatpush1.bf16.msra.mxu0 0
      %1046 = vmatprep.subr.bf16.mxu0 0
      %1047 = vmatpush1.bf16.msra.mxu0 0
      %1048 = vmatprep.subr.bf16.mxu0 0
      %1049 = vmatpush1.bf16.msra.mxu0 0
      %1050 = vmatprep.subr.bf16.mxu0 0
      %1051 = vmatpush1.bf16.msra.mxu0 0
      %1052 = vmatprep.subr.bf16.mxu0 0
      %1053 = vmatpush1.bf16.msra.mxu0 0
      %1054 = vmatprep.subr.bf16.mxu0 0
      %1055 = vmatpush1.bf16.msra.mxu0 0
      %1056 = vmatprep.mubr.bf16.mxu0 0
      %1057 = vmatmul.mubr.bf16.gmra.mrb[0].mxu0 %v1016
      %v1058 = vpop.f32.mrb[0].mxu0
      %v1059 = vadd.f32 0.0, %v1058
      %v1060 = vpop.f32.mrb[0].mxu0
      %v1061 = vadd.f32 0.0, %v1060
      %v1062 = vpop.f32.mrb[0].mxu0
      %v1063 = vpop.f32.mrb[0].mxu0
      %1064 = vdwg.mxu0
      %v1065 = vadd.f32 %v988, %v1059
      %v1066 = vadd.f32 %v989, %v1061
      %1068 = vset.pattern.permute.xlu0 0
      %1069 = vperm.xlu0 %1068, %v395
      %v1070 = vpop.permute.xlu0 %1069
      %v1072 = vadd.f32 %v1065, %v1070
      %v1073 = vadd.f32 %v1066, %v1070
      %v1074 = vxor.u32 %v1072, 2147483648
      %v1075 = vxor.u32 %v1073, 2147483648
      %v1076 = vmul.f32 %v1074, 1.442695
      %v1077 = vpow.pop %v1076
      %v1078 = vmul.f32 %v1075, 1.442695
      %v1079 = vpow.pop %v1078
      %v1080 = vadd.f32 %v1077, 1.0
      %v1081 = vadd.f32 %v1079, 1.0
      %v1082 = vrcp.pop %v1080
      %v1083 = vmul.f32 1.0, %v1082
      %v1084 = vrcp.pop %v1081
      %v1085 = vmul.f32 1.0, %v1084
      %v1086 = vmul.f32 %v1072, %v1083
      %v1087 = vmul.f32 %v1073, %v1085
      %v1088 = vpack.c.bf16 %v1086, %v1086
      %v1089 = vpack.c.bf16 %v1087, %v1087
      %v1090 = vld [vmem:[%s2 + $0x20] sm:$0xff]
      %1093 = vrot.lane.b32.xlu0 %v1088, 17
      %v1094 = vpop.permute.xlu0 %1093
      %1095 = vrot.lane.b32.xlu0 %v1089, 17
      %v1096 = vpop.permute.xlu0 %1095
      %v1097 = vsel %vm402, %v1094, %v1096
      %v1100 = vsel %vm405, 0, %v1094
      %v1103 = vsel %vm405, %v1096, 0
      %v1105 = vsel %vm427, %v1100, 0
      %v1106 = vsel %vm428, %v1097, 0
      %v1107 = vld [vmem:[%s1 + $0x30] sm:$0xf]
      %v1108 = vld [vmem:[%s1 + $0x34] sm:$0xf]
      %1111 = vrot.lane.b32.xlu0 %v1100, 127
      %v1112 = vpop.permute.xlu0 %1111
      %1113 = vrot.lane.b32.xlu0 %v1097, 127
      %v1114 = vpop.permute.xlu0 %1113
      %1115 = vrot.lane.b32.xlu0 %v1103, 127
      %v1116 = vpop.permute.xlu0 %1115
      %v1117 = vsel %vm441, %v1112, %v1114
      %v1118 = vsel %vm441, %v1114, %v1116
      %v1120 = vsel %vm309, %v1108, 0
      %v1123 = vsel %vm313, %v1117, 0
      %v1126 = vsel %vm313, %v1118, 0
      %1128 = vmatprep.subr.bf16.mxu0 %v1126
      %1129 = vmatpush1.bf16.msra.mxu0 %v1123
      %1130 = vmatprep.subr.bf16.mxu0 0
      %1131 = vmatpush1.bf16.msra.mxu0 0
      %1132 = vmatprep.subr.bf16.mxu0 0
      %1133 = vmatpush1.bf16.msra.mxu0 0
      %1134 = vmatprep.subr.bf16.mxu0 0
      %1135 = vmatpush1.bf16.msra.mxu0 0
      %1136 = vmatprep.subr.bf16.mxu0 0
      %1137 = vmatpush1.bf16.msra.mxu0 0
      %1138 = vmatprep.subr.bf16.mxu0 0
      %1139 = vmatpush1.bf16.msra.mxu0 0
      %1140 = vmatprep.subr.bf16.mxu0 0
      %1141 = vmatpush1.bf16.msra.mxu0 0
      %1142 = vmatprep.subr.bf16.mxu0 0
      %1143 = vmatpush1.bf16.msra.mxu0 0
      %1144 = vmatprep.subr.bf16.mxu0 0
      %1145 = vmatpush1.bf16.msra.mxu0 0
      %1146 = vmatprep.subr.bf16.mxu0 0
      %1147 = vmatpush1.bf16.msra.mxu0 0
      %1148 = vmatprep.subr.bf16.mxu0 0
      %1149 = vmatpush1.bf16.msra.mxu0 0
      %1150 = vmatprep.subr.bf16.mxu0 0
      %1151 = vmatpush1.bf16.msra.mxu0 0
      %1152 = vmatprep.subr.bf16.mxu0 0
      %1153 = vmatpush1.bf16.msra.mxu0 0
      %1154 = vmatprep.subr.bf16.mxu0 0
      %1155 = vmatpush1.bf16.msra.mxu0 0
      %1156 = vmatprep.subr.bf16.mxu0 0
      %1157 = vmatpush1.bf16.msra.mxu0 0
      %1158 = vmatprep.subr.bf16.mxu0 0
      %1159 = vmatpush1.bf16.msra.mxu0 0
      %1160 = vmatprep.mubr.bf16.mxu0 0
      %1161 = vmatmul.mubr.bf16.gmra.mrb[0].mxu0 %v1120
      %v1162 = vpop.f32.mrb[0].mxu0
      %v1163 = vadd.f32 0.0, %v1162
      %v1164 = vpop.f32.mrb[0].mxu0
      %v1165 = vadd.f32 0.0, %v1164
      %v1166 = vpop.f32.mrb[0].mxu0
      %v1167 = vpop.f32.mrb[0].mxu0
      %1168 = vdwg.mxu0
      %v1170 = vsel %vm309, %v1107, 0
      %v1173 = vsel %vm313, %v1105, 0
      %v1176 = vsel %vm313, %v1106, 0
      %1178 = vmatprep.subr.bf16.mxu0 %v1176
      %1179 = vmatpush1.bf16.msra.mxu0 %v1173
      %1180 = vmatprep.subr.bf16.mxu0 0
      %1181 = vmatpush1.bf16.msra.mxu0 0
      %1182 = vmatprep.subr.bf16.mxu0 0
      %1183 = vmatpush1.bf16.msra.mxu0 0
      %1184 = vmatprep.subr.bf16.mxu0 0
      %1185 = vmatpush1.bf16.msra.mxu0 0
      %1186 = vmatprep.subr.bf16.mxu0 0
      %1187 = vmatpush1.bf16.msra.mxu0 0
      %1188 = vmatprep.subr.bf16.mxu0 0
      %1189 = vmatpush1.bf16.msra.mxu0 0
      %1190 = vmatprep.subr.bf16.mxu0 0
      %1191 = vmatpush1.bf16.msra.mxu0 0
      %1192 = vmatprep.subr.bf16.mxu0 0
      %1193 = vmatpush1.bf16.msra.mxu0 0
      %1194 = vmatprep.subr.bf16.mxu0 0
      %1195 = vmatpush1.bf16.msra.mxu0 0
      %1196 = vmatprep.subr.bf16.mxu0 0
      %1197 = vmatpush1.bf16.msra.mxu0 0
      %1198 = vmatprep.subr.bf16.mxu0 0
      %1199 = vmatpush1.bf16.msra.mxu0 0
      %1200 = vmatprep.subr.bf16.mxu0 0
      %1201 = vmatpush1.bf16.msra.mxu0 0
      %1202 = vmatprep.subr.bf16.mxu0 0
      %1203 = vmatpush1.bf16.msra.mxu0 0
      %1204 = vmatprep.subr.bf16.mxu0 0
      %1205 = vmatpush1.bf16.msra.mxu0 0
      %1206 = vmatprep.subr.bf16.mxu0 0
      %1207 = vmatpush1.bf16.msra.mxu0 0
      %1208 = vmatprep.subr.bf16.mxu0 0
      %1209 = vmatpush1.bf16.msra.mxu0 0
      %1210 = vmatprep.mubr.bf16.mxu0 0
      %1211 = vmatmul.mubr.bf16.gmra.mrb[0].mxu0 %v1170
      %v1212 = vpop.f32.mrb[0].mxu0
      %v1213 = vadd.f32 %v1163, %v1212
      %v1214 = vpop.f32.mrb[0].mxu0
      %v1215 = vadd.f32 %v1165, %v1214
      %v1216 = vpop.f32.mrb[0].mxu0
      %v1217 = vpop.f32.mrb[0].mxu0
      %1218 = vdwg.mxu0
      %v1219 = vsel %vm564, %v1100, 0
      %v1220 = vsel %vm565, %v1097, 0
      %v1221 = vsel %vm566, %v1103, 0
      %v1222 = vld [vmem:[%s1 + $0x38] sm:$0xf]
      %1226 = vrot.lane.b32.xlu0 %v1219, 126
      %v1227 = vpop.permute.xlu0 %1226
      %1228 = vrot.lane.b32.xlu0 %v1220, 126
      %v1229 = vpop.permute.xlu0 %1228
      %1230 = vrot.lane.b32.xlu0 %v1221, 126
      %v1231 = vpop.permute.xlu0 %1230
      %v1232 = vsel %vm580, %v1227, %v1229
      %v1233 = vsel %vm580, %v1229, %v1231
      %v1235 = vsel %vm309, %v1222, 0
      %v1238 = vsel %vm313, %v1232, 0
      %v1241 = vsel %vm313, %v1233, 0
      %1243 = vmatprep.subr.bf16.mxu0 %v1241
      %1244 = vmatpush1.bf16.msra.mxu0 %v1238
      %1245 = vmatprep.subr.bf16.mxu0 0
      %1246 = vmatpush1.bf16.msra.mxu0 0
      %1247 = vmatprep.subr.bf16.mxu0 0
      %1248 = vmatpush1.bf16.msra.mxu0 0
      %1249 = vmatprep.subr.bf16.mxu0 0
      %1250 = vmatpush1.bf16.msra.mxu0 0
      %1251 = vmatprep.subr.bf16.mxu0 0
      %1252 = vmatpush1.bf16.msra.mxu0 0
      %1253 = vmatprep.subr.bf16.mxu0 0
      %1254 = vmatpush1.bf16.msra.mxu0 0
      %1255 = vmatprep.subr.bf16.mxu0 0
      %1256 = vmatpush1.bf16.msra.mxu0 0
      %1257 = vmatprep.subr.bf16.mxu0 0
      %1258 = vmatpush1.bf16.msra.mxu0 0
      %1259 = vmatprep.subr.bf16.mxu0 0
      %1260 = vmatpush1.bf16.msra.mxu0 0
      %1261 = vmatprep.subr.bf16.mxu0 0
      %1262 = vmatpush1.bf16.msra.mxu0 0
      %1263 = vmatprep.subr.bf16.mxu0 0
      %1264 = vmatpush1.bf16.msra.mxu0 0
      %1265 = vmatprep.subr.bf16.mxu0 0
      %1266 = vmatpush1.bf16.msra.mxu0 0
      %1267 = vmatprep.subr.bf16.mxu0 0
      %1268 = vmatpush1.bf16.msra.mxu0 0
      %1269 = vmatprep.subr.bf16.mxu0 0
      %1270 = vmatpush1.bf16.msra.mxu0 0
      %1271 = vmatprep.subr.bf16.mxu0 0
      %1272 = vmatpush1.bf16.msra.mxu0 0
      %1273 = vmatprep.subr.bf16.mxu0 0
      %1274 = vmatpush1.bf16.msra.mxu0 0
      %1275 = vmatprep.mubr.bf16.mxu0 0
      %1276 = vmatmul.mubr.bf16.gmra.mrb[0].mxu0 %v1235
      %v1277 = vpop.f32.mrb[0].mxu0
      %v1278 = vadd.f32 0.0, %v1277
      %v1279 = vpop.f32.mrb[0].mxu0
      %v1280 = vadd.f32 0.0, %v1279
      %v1281 = vpop.f32.mrb[0].mxu0
      %v1282 = vpop.f32.mrb[0].mxu0
      %1283 = vdwg.mxu0
      %v1284 = vadd.f32 %v1213, %v1278
      %v1285 = vadd.f32 %v1215, %v1280
      %v1286 = vsel %vm641, %v1100, 0
      %v1287 = vsel %vm642, %v1097, 0
      %v1288 = vsel %vm643, %v1103, 0
      %v1289 = vld [vmem:[%s1 + $0x3c] sm:$0xf]
      %1293 = vrot.lane.b32.xlu0 %v1286, 112
      %v1294 = vpop.permute.xlu0 %1293
      %1295 = vrot.lane.b32.xlu0 %v1287, 112
      %v1296 = vpop.permute.xlu0 %1295
      %1297 = vrot.lane.b32.xlu0 %v1288, 112
      %v1298 = vpop.permute.xlu0 %1297
      %v1299 = vsel %vm657, %v1294, %v1296
      %v1300 = vsel %vm657, %v1296, %v1298
      %v1302 = vsel %vm309, %v1289, 0
      %v1305 = vsel %vm313, %v1299, 0
      %v1308 = vsel %vm313, %v1300, 0
      %1310 = vmatprep.subr.bf16.mxu0 %v1308
      %1311 = vmatpush1.bf16.msra.mxu0 %v1305
      %1312 = vmatprep.subr.bf16.mxu0 0
      %1313 = vmatpush1.bf16.msra.mxu0 0
      %1314 = vmatprep.subr.bf16.mxu0 0
      %1315 = vmatpush1.bf16.msra.mxu0 0
      %1316 = vmatprep.subr.bf16.mxu0 0
      %1317 = vmatpush1.bf16.msra.mxu0 0
      %1318 = vmatprep.subr.bf16.mxu0 0
      %1319 = vmatpush1.bf16.msra.mxu0 0
      %1320 = vmatprep.subr.bf16.mxu0 0
      %1321 = vmatpush1.bf16.msra.mxu0 0
      %1322 = vmatprep.subr.bf16.mxu0 0
      %1323 = vmatpush1.bf16.msra.mxu0 0
      %1324 = vmatprep.subr.bf16.mxu0 0
      %1325 = vmatpush1.bf16.msra.mxu0 0
      %1326 = vmatprep.subr.bf16.mxu0 0
      %1327 = vmatpush1.bf16.msra.mxu0 0
      %1328 = vmatprep.subr.bf16.mxu0 0
      %1329 = vmatpush1.bf16.msra.mxu0 0
      %1330 = vmatprep.subr.bf16.mxu0 0
      %1331 = vmatpush1.bf16.msra.mxu0 0
      %1332 = vmatprep.subr.bf16.mxu0 0
      %1333 = vmatpush1.bf16.msra.mxu0 0
      %1334 = vmatprep.subr.bf16.mxu0 0
      %1335 = vmatpush1.bf16.msra.mxu0 0
      %1336 = vmatprep.subr.bf16.mxu0 0
      %1337 = vmatpush1.bf16.msra.mxu0 0
      %1338 = vmatprep.subr.bf16.mxu0 0
      %1339 = vmatpush1.bf16.msra.mxu0 0
      %1340 = vmatprep.subr.bf16.mxu0 0
      %1341 = vmatpush1.bf16.msra.mxu0 0
      %1342 = vmatprep.mubr.bf16.mxu0 0
      %1343 = vmatmul.mubr.bf16.gmra.mrb[0].mxu0 %v1302
      %v1344 = vpop.f32.mrb[0].mxu0
      %v1345 = vadd.f32 0.0, %v1344
      %v1346 = vpop.f32.mrb[0].mxu0
      %v1347 = vadd.f32 0.0, %v1346
      %v1348 = vpop.f32.mrb[0].mxu0
      %v1349 = vpop.f32.mrb[0].mxu0
      %1350 = vdwg.mxu0
      %v1351 = vadd.f32 %v1284, %v1345
      %v1352 = vadd.f32 %v1285, %v1347
      %v1353 = vld [vmem:[%s1 + $0x40] sm:$0xf]
      %1354 = vrot.lane.b32.xlu0 %v1100, 111
      %v1355 = vpop.permute.xlu0 %1354
      %1356 = vrot.lane.b32.xlu0 %v1097, 111
      %v1357 = vpop.permute.xlu0 %1356
      %1358 = vrot.lane.b32.xlu0 %v1103, 111
      %v1359 = vpop.permute.xlu0 %1358
      %v1360 = vsel %vm719, %v1355, %v1357
      %v1361 = vsel %vm719, %v1357, %v1359
      %v1363 = vsel %vm309, %v1353, 0
      %v1366 = vsel %vm313, %v1360, 0
      %v1369 = vsel %vm313, %v1361, 0
      %1371 = vmatprep.subr.bf16.mxu0 %v1369
      %1372 = vmatpush1.bf16.msra.mxu0 %v1366
      %1373 = vmatprep.subr.bf16.mxu0 0
      %1374 = vmatpush1.bf16.msra.mxu0 0
      %1375 = vmatprep.subr.bf16.mxu0 0
      %1376 = vmatpush1.bf16.msra.mxu0 0
      %1377 = vmatprep.subr.bf16.mxu0 0
      %1378 = vmatpush1.bf16.msra.mxu0 0
      %1379 = vmatprep.subr.bf16.mxu0 0
      %1380 = vmatpush1.bf16.msra.mxu0 0
      %1381 = vmatprep.subr.bf16.mxu0 0
      %1382 = vmatpush1.bf16.msra.mxu0 0
      %1383 = vmatprep.subr.bf16.mxu0 0
      %1384 = vmatpush1.bf16.msra.mxu0 0
      %1385 = vmatprep.subr.bf16.mxu0 0
      %1386 = vmatpush1.bf16.msra.mxu0 0
      %1387 = vmatprep.subr.bf16.mxu0 0
      %1388 = vmatpush1.bf16.msra.mxu0 0
      %1389 = vmatprep.subr.bf16.mxu0 0
      %1390 = vmatpush1.bf16.msra.mxu0 0
      %1391 = vmatprep.subr.bf16.mxu0 0
      %1392 = vmatpush1.bf16.msra.mxu0 0
      %1393 = vmatprep.subr.bf16.mxu0 0
      %1394 = vmatpush1.bf16.msra.mxu0 0
      %1395 = vmatprep.subr.bf16.mxu0 0
      %1396 = vmatpush1.bf16.msra.mxu0 0
      %1397 = vmatprep.subr.bf16.mxu0 0
      %1398 = vmatpush1.bf16.msra.mxu0 0
      %1399 = vmatprep.subr.bf16.mxu0 0
      %1400 = vmatpush1.bf16.msra.mxu0 0
      %1401 = vmatprep.subr.bf16.mxu0 0
      %1402 = vmatpush1.bf16.msra.mxu0 0
      %1403 = vmatprep.mubr.bf16.mxu0 0
      %1404 = vmatmul.mubr.bf16.gmra.mrb[0].mxu0 %v1363
      %v1405 = vpop.f32.mrb[0].mxu0
      %v1406 = vadd.f32 0.0, %v1405
      %v1407 = vpop.f32.mrb[0].mxu0
      %v1408 = vadd.f32 0.0, %v1407
      %v1409 = vpop.f32.mrb[0].mxu0
      %v1410 = vpop.f32.mrb[0].mxu0
      %1411 = vdwg.mxu0
      %v1412 = vadd.f32 %v1351, %v1406
      %v1413 = vadd.f32 %v1352, %v1408
      %v1414 = vsel %vm780, %v1100, 0
      %v1415 = vsel %vm781, %v1097, 0
      %v1416 = vsel %vm782, %v1103, 0
      %v1417 = vld [vmem:[%s1 + $0x44] sm:$0xf]
      %1421 = vrot.lane.b32.xlu0 %v1414, 110
      %v1422 = vpop.permute.xlu0 %1421
      %1423 = vrot.lane.b32.xlu0 %v1415, 110
      %v1424 = vpop.permute.xlu0 %1423
      %1425 = vrot.lane.b32.xlu0 %v1416, 110
      %v1426 = vpop.permute.xlu0 %1425
      %v1427 = vsel %vm796, %v1422, %v1424
      %v1428 = vsel %vm796, %v1424, %v1426
      %v1430 = vsel %vm309, %v1417, 0
      %v1433 = vsel %vm313, %v1427, 0
      %v1436 = vsel %vm313, %v1428, 0
      %1438 = vmatprep.subr.bf16.mxu0 %v1436
      %1439 = vmatpush1.bf16.msra.mxu0 %v1433
      %1440 = vmatprep.subr.bf16.mxu0 0
      %1441 = vmatpush1.bf16.msra.mxu0 0
      %1442 = vmatprep.subr.bf16.mxu0 0
      %1443 = vmatpush1.bf16.msra.mxu0 0
      %1444 = vmatprep.subr.bf16.mxu0 0
      %1445 = vmatpush1.bf16.msra.mxu0 0
      %1446 = vmatprep.subr.bf16.mxu0 0
      %1447 = vmatpush1.bf16.msra.mxu0 0
      %1448 = vmatprep.subr.bf16.mxu0 0
      %1449 = vmatpush1.bf16.msra.mxu0 0
      %1450 = vmatprep.subr.bf16.mxu0 0
      %1451 = vmatpush1.bf16.msra.mxu0 0
      %1452 = vmatprep.subr.bf16.mxu0 0
      %1453 = vmatpush1.bf16.msra.mxu0 0
      %1454 = vmatprep.subr.bf16.mxu0 0
      %1455 = vmatpush1.bf16.msra.mxu0 0
      %1456 = vmatprep.subr.bf16.mxu0 0
      %1457 = vmatpush1.bf16.msra.mxu0 0
      %1458 = vmatprep.subr.bf16.mxu0 0
      %1459 = vmatpush1.bf16.msra.mxu0 0
      %1460 = vmatprep.subr.bf16.mxu0 0
      %1461 = vmatpush1.bf16.msra.mxu0 0
      %1462 = vmatprep.subr.bf16.mxu0 0
      %1463 = vmatpush1.bf16.msra.mxu0 0
      %1464 = vmatprep.subr.bf16.mxu0 0
      %1465 = vmatpush1.bf16.msra.mxu0 0
      %1466 = vmatprep.subr.bf16.mxu0 0
      %1467 = vmatpush1.bf16.msra.mxu0 0
      %1468 = vmatprep.subr.bf16.mxu0 0
      %1469 = vmatpush1.bf16.msra.mxu0 0
      %1470 = vmatprep.mubr.bf16.mxu0 0
      %1471 = vmatmul.mubr.bf16.gmra.mrb[0].mxu0 %v1430
      %v1472 = vpop.f32.mrb[0].mxu0
      %v1473 = vadd.f32 0.0, %v1472
      %v1474 = vpop.f32.mrb[0].mxu0
      %v1475 = vadd.f32 0.0, %v1474
      %v1476 = vpop.f32.mrb[0].mxu0
      %v1477 = vpop.f32.mrb[0].mxu0
      %1478 = vdwg.mxu0
      %v1479 = vadd.f32 %v1412, %v1473
      %v1480 = vadd.f32 %v1413, %v1475
      %v1481 = vsel %vm857, %v1100, 0
      %v1482 = vsel %vm858, %v1097, 0
      %v1483 = vsel %vm859, %v1103, 0
      %v1484 = vld [vmem:[%s1 + $0x48] sm:$0xf]
      %1488 = vrot.lane.b32.xlu0 %v1481, 96
      %v1489 = vpop.permute.xlu0 %1488
      %1490 = vrot.lane.b32.xlu0 %v1482, 96
      %v1491 = vpop.permute.xlu0 %1490
      %1492 = vrot.lane.b32.xlu0 %v1483, 96
      %v1493 = vpop.permute.xlu0 %1492
      %v1494 = vsel %vm873, %v1489, %v1491
      %v1495 = vsel %vm873, %v1491, %v1493
      %v1497 = vsel %vm309, %v1484, 0
      %v1500 = vsel %vm313, %v1494, 0
      %v1503 = vsel %vm313, %v1495, 0
      %1505 = vmatprep.subr.bf16.mxu0 %v1503
      %1506 = vmatpush1.bf16.msra.mxu0 %v1500
      %1507 = vmatprep.subr.bf16.mxu0 0
      %1508 = vmatpush1.bf16.msra.mxu0 0
      %1509 = vmatprep.subr.bf16.mxu0 0
      %1510 = vmatpush1.bf16.msra.mxu0 0
      %1511 = vmatprep.subr.bf16.mxu0 0
      %1512 = vmatpush1.bf16.msra.mxu0 0
      %1513 = vmatprep.subr.bf16.mxu0 0
      %1514 = vmatpush1.bf16.msra.mxu0 0
      %1515 = vmatprep.subr.bf16.mxu0 0
      %1516 = vmatpush1.bf16.msra.mxu0 0
      %1517 = vmatprep.subr.bf16.mxu0 0
      %1518 = vmatpush1.bf16.msra.mxu0 0
      %1519 = vmatprep.subr.bf16.mxu0 0
      %1520 = vmatpush1.bf16.msra.mxu0 0
      %1521 = vmatprep.subr.bf16.mxu0 0
      %1522 = vmatpush1.bf16.msra.mxu0 0
      %1523 = vmatprep.subr.bf16.mxu0 0
      %1524 = vmatpush1.bf16.msra.mxu0 0
      %1525 = vmatprep.subr.bf16.mxu0 0
      %1526 = vmatpush1.bf16.msra.mxu0 0
      %1527 = vmatprep.subr.bf16.mxu0 0
      %1528 = vmatpush1.bf16.msra.mxu0 0
      %1529 = vmatprep.subr.bf16.mxu0 0
      %1530 = vmatpush1.bf16.msra.mxu0 0
      %1531 = vmatprep.subr.bf16.mxu0 0
      %1532 = vmatpush1.bf16.msra.mxu0 0
      %1533 = vmatprep.subr.bf16.mxu0 0
      %1534 = vmatpush1.bf16.msra.mxu0 0
      %1535 = vmatprep.subr.bf16.mxu0 0
      %1536 = vmatpush1.bf16.msra.mxu0 0
      %1537 = vmatprep.mubr.bf16.mxu0 0
      %1538 = vmatmul.mubr.bf16.gmra.mrb[0].mxu0 %v1497
      %v1539 = vpop.f32.mrb[0].mxu0
      %v1540 = vadd.f32 0.0, %v1539
      %v1541 = vpop.f32.mrb[0].mxu0
      %v1542 = vadd.f32 0.0, %v1541
      %v1543 = vpop.f32.mrb[0].mxu0
      %v1544 = vpop.f32.mrb[0].mxu0
      %1545 = vdwg.mxu0
      %v1546 = vadd.f32 %v1479, %v1540
      %v1547 = vadd.f32 %v1480, %v1542
      %v1548 = vld [vmem:[%s1 + $0x4c] sm:$0xf]
      %1549 = vrot.lane.b32.xlu0 %v1100, 95
      %v1550 = vpop.permute.xlu0 %1549
      %1551 = vrot.lane.b32.xlu0 %v1097, 95
      %v1552 = vpop.permute.xlu0 %1551
      %1553 = vrot.lane.b32.xlu0 %v1103, 95
      %v1554 = vpop.permute.xlu0 %1553
      %v1555 = vsel %vm935, %v1550, %v1552
      %v1556 = vsel %vm935, %v1552, %v1554
      %v1558 = vsel %vm309, %v1548, 0
      %v1561 = vsel %vm313, %v1555, 0
      %v1564 = vsel %vm313, %v1556, 0
      %1566 = vmatprep.subr.bf16.mxu0 %v1564
      %1567 = vmatpush1.bf16.msra.mxu0 %v1561
      %1568 = vmatprep.subr.bf16.mxu0 0
      %1569 = vmatpush1.bf16.msra.mxu0 0
      %1570 = vmatprep.subr.bf16.mxu0 0
      %1571 = vmatpush1.bf16.msra.mxu0 0
      %1572 = vmatprep.subr.bf16.mxu0 0
      %1573 = vmatpush1.bf16.msra.mxu0 0
      %1574 = vmatprep.subr.bf16.mxu0 0
      %1575 = vmatpush1.bf16.msra.mxu0 0
      %1576 = vmatprep.subr.bf16.mxu0 0
      %1577 = vmatpush1.bf16.msra.mxu0 0
      %1578 = vmatprep.subr.bf16.mxu0 0
      %1579 = vmatpush1.bf16.msra.mxu0 0
      %1580 = vmatprep.subr.bf16.mxu0 0
      %1581 = vmatpush1.bf16.msra.mxu0 0
      %1582 = vmatprep.subr.bf16.mxu0 0
      %1583 = vmatpush1.bf16.msra.mxu0 0
      %1584 = vmatprep.subr.bf16.mxu0 0
      %1585 = vmatpush1.bf16.msra.mxu0 0
      %1586 = vmatprep.subr.bf16.mxu0 0
      %1587 = vmatpush1.bf16.msra.mxu0 0
      %1588 = vmatprep.subr.bf16.mxu0 0
      %1589 = vmatpush1.bf16.msra.mxu0 0
      %1590 = vmatprep.subr.bf16.mxu0 0
      %1591 = vmatpush1.bf16.msra.mxu0 0
      %1592 = vmatprep.subr.bf16.mxu0 0
      %1593 = vmatpush1.bf16.msra.mxu0 0
      %1594 = vmatprep.subr.bf16.mxu0 0
      %1595 = vmatpush1.bf16.msra.mxu0 0
      %1596 = vmatprep.subr.bf16.mxu0 0
      %1597 = vmatpush1.bf16.msra.mxu0 0
      %1598 = vmatprep.mubr.bf16.mxu0 0
      %1599 = vmatmul.mubr.bf16.gmra.mrb[0].mxu0 %v1558
      %v1600 = vpop.f32.mrb[0].mxu0
      %v1601 = vadd.f32 0.0, %v1600
      %v1602 = vpop.f32.mrb[0].mxu0
      %v1603 = vadd.f32 0.0, %v1602
      %v1604 = vpop.f32.mrb[0].mxu0
      %v1605 = vpop.f32.mrb[0].mxu0
      %1606 = vdwg.mxu0
      %v1607 = vadd.f32 %v1546, %v1601
      %v1608 = vadd.f32 %v1547, %v1603
      %v1609 = vsel %vm996, %v1100, 0
      %v1610 = vsel %vm997, %v1097, 0
      %v1611 = vsel %vm998, %v1103, 0
      %v1612 = vld [vmem:[%s1 + $0x50] sm:$0xf]
      %1616 = vrot.lane.b32.xlu0 %v1609, 94
      %v1617 = vpop.permute.xlu0 %1616
      %1618 = vrot.lane.b32.xlu0 %v1610, 94
      %v1619 = vpop.permute.xlu0 %1618
      %1620 = vrot.lane.b32.xlu0 %v1611, 94
      %v1621 = vpop.permute.xlu0 %1620
      %v1622 = vsel %vm1012, %v1617, %v1619
      %v1623 = vsel %vm1012, %v1619, %v1621
      %v1625 = vsel %vm309, %v1612, 0
      %v1628 = vsel %vm313, %v1622, 0
      %v1631 = vsel %vm313, %v1623, 0
      %1633 = vmatprep.subr.bf16.mxu0 %v1631
      %1634 = vmatpush1.bf16.msra.mxu0 %v1628
      %1635 = vmatprep.subr.bf16.mxu0 0
      %1636 = vmatpush1.bf16.msra.mxu0 0
      %1637 = vmatprep.subr.bf16.mxu0 0
      %1638 = vmatpush1.bf16.msra.mxu0 0
      %1639 = vmatprep.subr.bf16.mxu0 0
      %1640 = vmatpush1.bf16.msra.mxu0 0
      %1641 = vmatprep.subr.bf16.mxu0 0
      %1642 = vmatpush1.bf16.msra.mxu0 0
      %1643 = vmatprep.subr.bf16.mxu0 0
      %1644 = vmatpush1.bf16.msra.mxu0 0
      %1645 = vmatprep.subr.bf16.mxu0 0
      %1646 = vmatpush1.bf16.msra.mxu0 0
      %1647 = vmatprep.subr.bf16.mxu0 0
      %1648 = vmatpush1.bf16.msra.mxu0 0
      %1649 = vmatprep.subr.bf16.mxu0 0
      %1650 = vmatpush1.bf16.msra.mxu0 0
      %1651 = vmatprep.subr.bf16.mxu0 0
      %1652 = vmatpush1.bf16.msra.mxu0 0
      %1653 = vmatprep.subr.bf16.mxu0 0
      %1654 = vmatpush1.bf16.msra.mxu0 0
      %1655 = vmatprep.subr.bf16.mxu0 0
      %1656 = vmatpush1.bf16.msra.mxu0 0
      %1657 = vmatprep.subr.bf16.mxu0 0
      %1658 = vmatpush1.bf16.msra.mxu0 0
      %1659 = vmatprep.subr.bf16.mxu0 0
      %1660 = vmatpush1.bf16.msra.mxu0 0
      %1661 = vmatprep.subr.bf16.mxu0 0
      %1662 = vmatpush1.bf16.msra.mxu0 0
      %1663 = vmatprep.subr.bf16.mxu0 0
      %1664 = vmatpush1.bf16.msra.mxu0 0
      %1665 = vmatprep.mubr.bf16.mxu0 0
      %1666 = vmatmul.mubr.bf16.gmra.mrb[0].mxu0 %v1625
      %v1667 = vpop.f32.mrb[0].mxu0
      %v1668 = vadd.f32 0.0, %v1667
      %v1669 = vpop.f32.mrb[0].mxu0
      %v1670 = vadd.f32 0.0, %v1669
      %v1671 = vpop.f32.mrb[0].mxu0
      %v1672 = vpop.f32.mrb[0].mxu0
      %1673 = vdwg.mxu0
      %v1674 = vadd.f32 %v1607, %v1668
      %v1675 = vadd.f32 %v1608, %v1670
      %1677 = vset.pattern.permute.xlu0 0
      %1678 = vperm.xlu0 %1677, %v1090
      %v1679 = vpop.permute.xlu0 %1678
      %v1681 = vadd.f32 %v1674, %v1679
      %v1682 = vadd.f32 %v1675, %v1679
      %v1683 = vxor.u32 %v1681, 2147483648
      %v1684 = vxor.u32 %v1682, 2147483648
      %v1685 = vmul.f32 %v1683, 1.442695
      %v1686 = vpow.pop %v1685
      %v1687 = vmul.f32 %v1684, 1.442695
      %v1688 = vpow.pop %v1687
      %v1689 = vadd.f32 %v1686, 1.0
      %v1690 = vadd.f32 %v1688, 1.0
      %v1691 = vrcp.pop %v1689
      %v1692 = vmul.f32 1.0, %v1691
      %v1693 = vrcp.pop %v1690
      %v1694 = vmul.f32 1.0, %v1693
      %v1695 = vmul.f32 %v1681, %v1692
      %v1696 = vmul.f32 %v1682, %v1694
      %v1697 = vadd.f32 %v387, %v1695
      %v1698 = vadd.f32 %v388, %v1696
      %v1699 = vld [vmem:[%s1 + $0x54] sm:$0xf]
      %v1700 = vpack.c.bf16 %v1697, %v1697
      %v1701 = vpack.c.bf16 %v1698, %v1698
      %v1702 = vld [vmem:[%s1 + $0x58] sm:$0xf]
      %v1704 = vsel %vm309, %v1702, 0
      %v1707 = vsel %vm313, %v391, 0
      %v1710 = vsel %vm313, %v392, 0
      %1712 = vmatprep.subr.bf16.mxu0 %v1710
      %1713 = vmatpush1.bf16.msra.mxu0 %v1707
      %1714 = vmatprep.subr.bf16.mxu0 0
      %1715 = vmatpush1.bf16.msra.mxu0 0
      %1716 = vmatprep.subr.bf16.mxu0 0
      %1717 = vmatpush1.bf16.msra.mxu0 0
      %1718 = vmatprep.subr.bf16.mxu0 0
      %1719 = vmatpush1.bf16.msra.mxu0 0
      %1720 = vmatprep.subr.bf16.mxu0 0
      %1721 = vmatpush1.bf16.msra.mxu0 0
      %1722 = vmatprep.subr.bf16.mxu0 0
      %1723 = vmatpush1.bf16.msra.mxu0 0
      %1724 = vmatprep.subr.bf16.mxu0 0
      %1725 = vmatpush1.bf16.msra.mxu0 0
      %1726 = vmatprep.subr.bf16.mxu0 0
      %1727 = vmatpush1.bf16.msra.mxu0 0
      %1728 = vmatprep.subr.bf16.mxu0 0
      %1729 = vmatpush1.bf16.msra.mxu0 0
      %1730 = vmatprep.subr.bf16.mxu0 0
      %1731 = vmatpush1.bf16.msra.mxu0 0
      %1732 = vmatprep.subr.bf16.mxu0 0
      %1733 = vmatpush1.bf16.msra.mxu0 0
      %1734 = vmatprep.subr.bf16.mxu0 0
      %1735 = vmatpush1.bf16.msra.mxu0 0
      %1736 = vmatprep.subr.bf16.mxu0 0
      %1737 = vmatpush1.bf16.msra.mxu0 0
      %1738 = vmatprep.subr.bf16.mxu0 0
      %1739 = vmatpush1.bf16.msra.mxu0 0
      %1740 = vmatprep.subr.bf16.mxu0 0
      %1741 = vmatpush1.bf16.msra.mxu0 0
      %1742 = vmatprep.subr.bf16.mxu0 0
      %1743 = vmatpush1.bf16.msra.mxu0 0
      %1744 = vmatprep.mubr.bf16.mxu0 0
      %1745 = vmatmul.mubr.bf16.gmra.mrb[0].mxu0 %v1704
      %v1746 = vpop.f32.mrb[0].mxu0
      %v1747 = vadd.f32 0.0, %v1746
      %v1748 = vpop.f32.mrb[0].mxu0
      %v1749 = vadd.f32 0.0, %v1748
      %v1750 = vpop.f32.mrb[0].mxu0
      %v1751 = vpop.f32.mrb[0].mxu0
      %1752 = vdwg.mxu0
      %v1754 = vsel %vm309, %v1699, 0
      %v1757 = vsel %vm313, %v1700, 0
      %v1760 = vsel %vm313, %v1701, 0
      %1762 = vmatprep.subr.bf16.mxu0 %v1760
      %1763 = vmatpush1.bf16.msra.mxu0 %v1757
      %1764 = vmatprep.subr.bf16.mxu0 0
      %1765 = vmatpush1.bf16.msra.mxu0 0
      %1766 = vmatprep.subr.bf16.mxu0 0
      %1767 = vmatpush1.bf16.msra.mxu0 0
      %1768 = vmatprep.subr.bf16.mxu0 0
      %1769 = vmatpush1.bf16.msra.mxu0 0
      %1770 = vmatprep.subr.bf16.mxu0 0
      %1771 = vmatpush1.bf16.msra.mxu0 0
      %1772 = vmatprep.subr.bf16.mxu0 0
      %1773 = vmatpush1.bf16.msra.mxu0 0
      %1774 = vmatprep.subr.bf16.mxu0 0
      %1775 = vmatpush1.bf16.msra.mxu0 0
      %1776 = vmatprep.subr.bf16.mxu0 0
      %1777 = vmatpush1.bf16.msra.mxu0 0
      %1778 = vmatprep.subr.bf16.mxu0 0
      %1779 = vmatpush1.bf16.msra.mxu0 0
      %1780 = vmatprep.subr.bf16.mxu0 0
      %1781 = vmatpush1.bf16.msra.mxu0 0
      %1782 = vmatprep.subr.bf16.mxu0 0
      %1783 = vmatpush1.bf16.msra.mxu0 0
      %1784 = vmatprep.subr.bf16.mxu0 0
      %1785 = vmatpush1.bf16.msra.mxu0 0
      %1786 = vmatprep.subr.bf16.mxu0 0
      %1787 = vmatpush1.bf16.msra.mxu0 0
      %1788 = vmatprep.subr.bf16.mxu0 0
      %1789 = vmatpush1.bf16.msra.mxu0 0
      %1790 = vmatprep.subr.bf16.mxu0 0
      %1791 = vmatpush1.bf16.msra.mxu0 0
      %1792 = vmatprep.subr.bf16.mxu0 0
      %1793 = vmatpush1.bf16.msra.mxu0 0
      %1794 = vmatprep.mubr.bf16.mxu0 0
      %1795 = vmatmul.mubr.bf16.gmra.mrb[0].mxu0 %v1754
      %v1796 = vpop.f32.mrb[0].mxu0
      %v1797 = vadd.f32 %v1747, %v1796
      %v1798 = vpop.f32.mrb[0].mxu0
      %v1799 = vadd.f32 %v1749, %v1798
      %v1800 = vpop.f32.mrb[0].mxu0
      %v1801 = vpop.f32.mrb[0].mxu0
      %1802 = vdwg.mxu0
      %v1803 = vld [vmem:[%s2 + $0x28] sm:$0xff]
      %1805 = vset.pattern.permute.xlu0 0
      %1806 = vperm.xlu0 %1805, %v1803
      %v1807 = vpop.permute.xlu0 %1806
      %v1809 = vadd.f32 %v1797, %v1807
      %v1810 = vadd.f32 %v1799, %v1807
      %v1811 = vxor.u32 %v1809, 2147483648
      %v1812 = vxor.u32 %v1810, 2147483648
      %v1813 = vmul.f32 %v1811, 1.442695
      %v1814 = vpow.pop %v1813
      %v1815 = vmul.f32 %v1812, 1.442695
      %v1816 = vpow.pop %v1815
      %v1817 = vadd.f32 %v1814, 1.0
      %v1818 = vadd.f32 %v1816, 1.0
      %v1819 = vrcp.pop %v1817
      %v1820 = vmul.f32 1.0, %v1819
      %v1821 = vrcp.pop %v1818
      %v1822 = vmul.f32 1.0, %v1821
      %v1823 = vmul.f32 %v1809, %v1820
      %v1824 = vmul.f32 %v1810, %v1822
      %v1825 = vpack.c.bf16 %v1823, %v1823
      %v1826 = vpack.c.bf16 %v1824, %v1824
      %v1827 = vld [vmem:[%s2 + $0x30] sm:$0xff]
      %1830 = vrot.lane.b32.xlu0 %v1825, 17
      %v1831 = vpop.permute.xlu0 %1830
      %1832 = vrot.lane.b32.xlu0 %v1826, 17
      %v1833 = vpop.permute.xlu0 %1832
      %v1834 = vsel %vm402, %v1831, %v1833
      %v1837 = vsel %vm405, 0, %v1831
      %v1840 = vsel %vm405, %v1833, 0
      %v1842 = vsel %vm427, %v1837, 0
      %v1843 = vsel %vm428, %v1834, 0
      %v1844 = vld [vmem:[%s1 + $0x5c] sm:$0xf]
      %v1845 = vld [vmem:[%s1 + $0x60] sm:$0xf]
      %1848 = vrot.lane.b32.xlu0 %v1837, 127
      %v1849 = vpop.permute.xlu0 %1848
      %1850 = vrot.lane.b32.xlu0 %v1834, 127
      %v1851 = vpop.permute.xlu0 %1850
      %1852 = vrot.lane.b32.xlu0 %v1840, 127
      %v1853 = vpop.permute.xlu0 %1852
      %v1854 = vsel %vm441, %v1849, %v1851
      %v1855 = vsel %vm441, %v1851, %v1853
      %v1857 = vsel %vm309, %v1845, 0
      %v1860 = vsel %vm313, %v1854, 0
      %v1863 = vsel %vm313, %v1855, 0
      %1865 = vmatprep.subr.bf16.mxu0 %v1863
      %1866 = vmatpush1.bf16.msra.mxu0 %v1860
      %1867 = vmatprep.subr.bf16.mxu0 0
      %1868 = vmatpush1.bf16.msra.mxu0 0
      %1869 = vmatprep.subr.bf16.mxu0 0
      %1870 = vmatpush1.bf16.msra.mxu0 0
      %1871 = vmatprep.subr.bf16.mxu0 0
      %1872 = vmatpush1.bf16.msra.mxu0 0
      %1873 = vmatprep.subr.bf16.mxu0 0
      %1874 = vmatpush1.bf16.msra.mxu0 0
      %1875 = vmatprep.subr.bf16.mxu0 0
      %1876 = vmatpush1.bf16.msra.mxu0 0
      %1877 = vmatprep.subr.bf16.mxu0 0
      %1878 = vmatpush1.bf16.msra.mxu0 0
      %1879 = vmatprep.subr.bf16.mxu0 0
      %1880 = vmatpush1.bf16.msra.mxu0 0
      %1881 = vmatprep.subr.bf16.mxu0 0
      %1882 = vmatpush1.bf16.msra.mxu0 0
      %1883 = vmatprep.subr.bf16.mxu0 0
      %1884 = vmatpush1.bf16.msra.mxu0 0
      %1885 = vmatprep.subr.bf16.mxu0 0
      %1886 = vmatpush1.bf16.msra.mxu0 0
      %1887 = vmatprep.subr.bf16.mxu0 0
      %1888 = vmatpush1.bf16.msra.mxu0 0
      %1889 = vmatprep.subr.bf16.mxu0 0
      %1890 = vmatpush1.bf16.msra.mxu0 0
      %1891 = vmatprep.subr.bf16.mxu0 0
      %1892 = vmatpush1.bf16.msra.mxu0 0
      %1893 = vmatprep.subr.bf16.mxu0 0
      %1894 = vmatpush1.bf16.msra.mxu0 0
      %1895 = vmatprep.subr.bf16.mxu0 0
      %1896 = vmatpush1.bf16.msra.mxu0 0
      %1897 = vmatprep.mubr.bf16.mxu0 0
      %1898 = vmatmul.mubr.bf16.gmra.mrb[0].mxu0 %v1857
      %v1899 = vpop.f32.mrb[0].mxu0
      %v1900 = vadd.f32 0.0, %v1899
      %v1901 = vpop.f32.mrb[0].mxu0
      %v1902 = vadd.f32 0.0, %v1901
      %v1903 = vpop.f32.mrb[0].mxu0
      %v1904 = vpop.f32.mrb[0].mxu0
      %1905 = vdwg.mxu0
      %v1907 = vsel %vm309, %v1844, 0
      %v1910 = vsel %vm313, %v1842, 0
      %v1913 = vsel %vm313, %v1843, 0
      %1915 = vmatprep.subr.bf16.mxu0 %v1913
      %1916 = vmatpush1.bf16.msra.mxu0 %v1910
      %1917 = vmatprep.subr.bf16.mxu0 0
      %1918 = vmatpush1.bf16.msra.mxu0 0
      %1919 = vmatprep.subr.bf16.mxu0 0
      %1920 = vmatpush1.bf16.msra.mxu0 0
      %1921 = vmatprep.subr.bf16.mxu0 0
      %1922 = vmatpush1.bf16.msra.mxu0 0
      %1923 = vmatprep.subr.bf16.mxu0 0
      %1924 = vmatpush1.bf16.msra.mxu0 0
      %1925 = vmatprep.subr.bf16.mxu0 0
      %1926 = vmatpush1.bf16.msra.mxu0 0
      %1927 = vmatprep.subr.bf16.mxu0 0
      %1928 = vmatpush1.bf16.msra.mxu0 0
      %1929 = vmatprep.subr.bf16.mxu0 0
      %1930 = vmatpush1.bf16.msra.mxu0 0
      %1931 = vmatprep.subr.bf16.mxu0 0
      %1932 = vmatpush1.bf16.msra.mxu0 0
      %1933 = vmatprep.subr.bf16.mxu0 0
      %1934 = vmatpush1.bf16.msra.mxu0 0
      %1935 = vmatprep.subr.bf16.mxu0 0
      %1936 = vmatpush1.bf16.msra.mxu0 0
      %1937 = vmatprep.subr.bf16.mxu0 0
      %1938 = vmatpush1.bf16.msra.mxu0 0
      %1939 = vmatprep.subr.bf16.mxu0 0
      %1940 = vmatpush1.bf16.msra.mxu0 0
      %1941 = vmatprep.subr.bf16.mxu0 0
      %1942 = vmatpush1.bf16.msra.mxu0 0
      %1943 = vmatprep.subr.bf16.mxu0 0
      %1944 = vmatpush1.bf16.msra.mxu0 0
      %1945 = vmatprep.subr.bf16.mxu0 0
      %1946 = vmatpush1.bf16.msra.mxu0 0
      %1947 = vmatprep.mubr.bf16.mxu0 0
      %1948 = vmatmul.mubr.bf16.gmra.mrb[0].mxu0 %v1907
      %v1949 = vpop.f32.mrb[0].mxu0
      %v1950 = vadd.f32 %v1900, %v1949
      %v1951 = vpop.f32.mrb[0].mxu0
      %v1952 = vadd.f32 %v1902, %v1951
      %v1953 = vpop.f32.mrb[0].mxu0
      %v1954 = vpop.f32.mrb[0].mxu0
      %1955 = vdwg.mxu0
      %v1956 = vsel %vm564, %v1837, 0
      %v1957 = vsel %vm565, %v1834, 0
      %v1958 = vsel %vm566, %v1840, 0
      %v1959 = vld [vmem:[%s1 + $0x64] sm:$0xf]
      %1963 = vrot.lane.b32.xlu0 %v1956, 126
      %v1964 = vpop.permute.xlu0 %1963
      %1965 = vrot.lane.b32.xlu0 %v1957, 126
      %v1966 = vpop.permute.xlu0 %1965
      %1967 = vrot.lane.b32.xlu0 %v1958, 126
      %v1968 = vpop.permute.xlu0 %1967
      %v1969 = vsel %vm580, %v1964, %v1966
      %v1970 = vsel %vm580, %v1966, %v1968
      %v1972 = vsel %vm309, %v1959, 0
      %v1975 = vsel %vm313, %v1969, 0
      %v1978 = vsel %vm313, %v1970, 0
      %1980 = vmatprep.subr.bf16.mxu0 %v1978
      %1981 = vmatpush1.bf16.msra.mxu0 %v1975
      %1982 = vmatprep.subr.bf16.mxu0 0
      %1983 = vmatpush1.bf16.msra.mxu0 0
      %1984 = vmatprep.subr.bf16.mxu0 0
      %1985 = vmatpush1.bf16.msra.mxu0 0
      %1986 = vmatprep.subr.bf16.mxu0 0
      %1987 = vmatpush1.bf16.msra.mxu0 0
      %1988 = vmatprep.subr.bf16.mxu0 0
      %1989 = vmatpush1.bf16.msra.mxu0 0
      %1990 = vmatprep.subr.bf16.mxu0 0
      %1991 = vmatpush1.bf16.msra.mxu0 0
      %1992 = vmatprep.subr.bf16.mxu0 0
      %1993 = vmatpush1.bf16.msra.mxu0 0
      %1994 = vmatprep.subr.bf16.mxu0 0
      %1995 = vmatpush1.bf16.msra.mxu0 0
      %1996 = vmatprep.subr.bf16.mxu0 0
      %1997 = vmatpush1.bf16.msra.mxu0 0
      %1998 = vmatprep.subr.bf16.mxu0 0
      %1999 = vmatpush1.bf16.msra.mxu0 0
      %2000 = vmatprep.subr.bf16.mxu0 0
      %2001 = vmatpush1.bf16.msra.mxu0 0
      %2002 = vmatprep.subr.bf16.mxu0 0
      %2003 = vmatpush1.bf16.msra.mxu0 0
      %2004 = vmatprep.subr.bf16.mxu0 0
      %2005 = vmatpush1.bf16.msra.mxu0 0
      %2006 = vmatprep.subr.bf16.mxu0 0
      %2007 = vmatpush1.bf16.msra.mxu0 0
      %2008 = vmatprep.subr.bf16.mxu0 0
      %2009 = vmatpush1.bf16.msra.mxu0 0
      %2010 = vmatprep.subr.bf16.mxu0 0
      %2011 = vmatpush1.bf16.msra.mxu0 0
      %2012 = vmatprep.mubr.bf16.mxu0 0
      %2013 = vmatmul.mubr.bf16.gmra.mrb[0].mxu0 %v1972
      %v2014 = vpop.f32.mrb[0].mxu0
      %v2015 = vadd.f32 0.0, %v2014
      %v2016 = vpop.f32.mrb[0].mxu0
      %v2017 = vadd.f32 0.0, %v2016
      %v2018 = vpop.f32.mrb[0].mxu0
      %v2019 = vpop.f32.mrb[0].mxu0
      %2020 = vdwg.mxu0
      %v2021 = vadd.f32 %v1950, %v2015
      %v2022 = vadd.f32 %v1952, %v2017
      %v2023 = vsel %vm641, %v1837, 0
      %v2024 = vsel %vm642, %v1834, 0
      %v2025 = vsel %vm643, %v1840, 0
      %v2026 = vld [vmem:[%s1 + $0x68] sm:$0xf]
      %2030 = vrot.lane.b32.xlu0 %v2023, 112
      %v2031 = vpop.permute.xlu0 %2030
      %2032 = vrot.lane.b32.xlu0 %v2024, 112
      %v2033 = vpop.permute.xlu0 %2032
      %2034 = vrot.lane.b32.xlu0 %v2025, 112
      %v2035 = vpop.permute.xlu0 %2034
      %v2036 = vsel %vm657, %v2031, %v2033
      %v2037 = vsel %vm657, %v2033, %v2035
      %v2039 = vsel %vm309, %v2026, 0
      %v2042 = vsel %vm313, %v2036, 0
      %v2045 = vsel %vm313, %v2037, 0
      %2047 = vmatprep.subr.bf16.mxu0 %v2045
      %2048 = vmatpush1.bf16.msra.mxu0 %v2042
      %2049 = vmatprep.subr.bf16.mxu0 0
      %2050 = vmatpush1.bf16.msra.mxu0 0
      %2051 = vmatprep.subr.bf16.mxu0 0
      %2052 = vmatpush1.bf16.msra.mxu0 0
      %2053 = vmatprep.subr.bf16.mxu0 0
      %2054 = vmatpush1.bf16.msra.mxu0 0
      %2055 = vmatprep.subr.bf16.mxu0 0
      %2056 = vmatpush1.bf16.msra.mxu0 0
      %2057 = vmatprep.subr.bf16.mxu0 0
      %2058 = vmatpush1.bf16.msra.mxu0 0
      %2059 = vmatprep.subr.bf16.mxu0 0
      %2060 = vmatpush1.bf16.msra.mxu0 0
      %2061 = vmatprep.subr.bf16.mxu0 0
      %2062 = vmatpush1.bf16.msra.mxu0 0
      %2063 = vmatprep.subr.bf16.mxu0 0
      %2064 = vmatpush1.bf16.msra.mxu0 0
      %2065 = vmatprep.subr.bf16.mxu0 0
      %2066 = vmatpush1.bf16.msra.mxu0 0
      %2067 = vmatprep.subr.bf16.mxu0 0
      %2068 = vmatpush1.bf16.msra.mxu0 0
      %2069 = vmatprep.subr.bf16.mxu0 0
      %2070 = vmatpush1.bf16.msra.mxu0 0
      %2071 = vmatprep.subr.bf16.mxu0 0
      %2072 = vmatpush1.bf16.msra.mxu0 0
      %2073 = vmatprep.subr.bf16.mxu0 0
      %2074 = vmatpush1.bf16.msra.mxu0 0
      %2075 = vmatprep.subr.bf16.mxu0 0
      %2076 = vmatpush1.bf16.msra.mxu0 0
      %2077 = vmatprep.subr.bf16.mxu0 0
      %2078 = vmatpush1.bf16.msra.mxu0 0
      %2079 = vmatprep.mubr.bf16.mxu0 0
      %2080 = vmatmul.mubr.bf16.gmra.mrb[0].mxu0 %v2039
      %v2081 = vpop.f32.mrb[0].mxu0
      %v2082 = vadd.f32 0.0, %v2081
      %v2083 = vpop.f32.mrb[0].mxu0
      %v2084 = vadd.f32 0.0, %v2083
      %v2085 = vpop.f32.mrb[0].mxu0
      %v2086 = vpop.f32.mrb[0].mxu0
      %2087 = vdwg.mxu0
      %v2088 = vadd.f32 %v2021, %v2082
      %v2089 = vadd.f32 %v2022, %v2084
      %v2090 = vld [vmem:[%s1 + $0x6c] sm:$0xf]
      %2091 = vrot.lane.b32.xlu0 %v1837, 111
      %v2092 = vpop.permute.xlu0 %2091
      %2093 = vrot.lane.b32.xlu0 %v1834, 111
      %v2094 = vpop.permute.xlu0 %2093
      %2095 = vrot.lane.b32.xlu0 %v1840, 111
      %v2096 = vpop.permute.xlu0 %2095
      %v2097 = vsel %vm719, %v2092, %v2094
      %v2098 = vsel %vm719, %v2094, %v2096
      %v2100 = vsel %vm309, %v2090, 0
      %v2103 = vsel %vm313, %v2097, 0
      %v2106 = vsel %vm313, %v2098, 0
      %2108 = vmatprep.subr.bf16.mxu0 %v2106
      %2109 = vmatpush1.bf16.msra.mxu0 %v2103
      %2110 = vmatprep.subr.bf16.mxu0 0
      %2111 = vmatpush1.bf16.msra.mxu0 0
      %2112 = vmatprep.subr.bf16.mxu0 0
      %2113 = vmatpush1.bf16.msra.mxu0 0
      %2114 = vmatprep.subr.bf16.mxu0 0
      %2115 = vmatpush1.bf16.msra.mxu0 0
      %2116 = vmatprep.subr.bf16.mxu0 0
      %2117 = vmatpush1.bf16.msra.mxu0 0
      %2118 = vmatprep.subr.bf16.mxu0 0
      %2119 = vmatpush1.bf16.msra.mxu0 0
      %2120 = vmatprep.subr.bf16.mxu0 0
      %2121 = vmatpush1.bf16.msra.mxu0 0
      %2122 = vmatprep.subr.bf16.mxu0 0
      %2123 = vmatpush1.bf16.msra.mxu0 0
      %2124 = vmatprep.subr.bf16.mxu0 0
      %2125 = vmatpush1.bf16.msra.mxu0 0
      %2126 = vmatprep.subr.bf16.mxu0 0
      %2127 = vmatpush1.bf16.msra.mxu0 0
      %2128 = vmatprep.subr.bf16.mxu0 0
      %2129 = vmatpush1.bf16.msra.mxu0 0
      %2130 = vmatprep.subr.bf16.mxu0 0
      %2131 = vmatpush1.bf16.msra.mxu0 0
      %2132 = vmatprep.subr.bf16.mxu0 0
      %2133 = vmatpush1.bf16.msra.mxu0 0
      %2134 = vmatprep.subr.bf16.mxu0 0
      %2135 = vmatpush1.bf16.msra.mxu0 0
      %2136 = vmatprep.subr.bf16.mxu0 0
      %2137 = vmatpush1.bf16.msra.mxu0 0
      %2138 = vmatprep.subr.bf16.mxu0 0
      %2139 = vmatpush1.bf16.msra.mxu0 0
      %2140 = vmatprep.mubr.bf16.mxu0 0
      %2141 = vmatmul.mubr.bf16.gmra.mrb[0].mxu0 %v2100
      %v2142 = vpop.f32.mrb[0].mxu0
      %v2143 = vadd.f32 0.0, %v2142
      %v2144 = vpop.f32.mrb[0].mxu0
      %v2145 = vadd.f32 0.0, %v2144
      %v2146 = vpop.f32.mrb[0].mxu0
      %v2147 = vpop.f32.mrb[0].mxu0
      %2148 = vdwg.mxu0
      %v2149 = vadd.f32 %v2088, %v2143
      %v2150 = vadd.f32 %v2089, %v2145
      %v2151 = vsel %vm780, %v1837, 0
      %v2152 = vsel %vm781, %v1834, 0
      %v2153 = vsel %vm782, %v1840, 0
      %v2154 = vld [vmem:[%s1 + $0x70] sm:$0xf]
      %2158 = vrot.lane.b32.xlu0 %v2151, 110
      %v2159 = vpop.permute.xlu0 %2158
      %2160 = vrot.lane.b32.xlu0 %v2152, 110
      %v2161 = vpop.permute.xlu0 %2160
      %2162 = vrot.lane.b32.xlu0 %v2153, 110
      %v2163 = vpop.permute.xlu0 %2162
      %v2164 = vsel %vm796, %v2159, %v2161
      %v2165 = vsel %vm796, %v2161, %v2163
      %v2167 = vsel %vm309, %v2154, 0
      %v2170 = vsel %vm313, %v2164, 0
      %v2173 = vsel %vm313, %v2165, 0
      %2175 = vmatprep.subr.bf16.mxu0 %v2173
      %2176 = vmatpush1.bf16.msra.mxu0 %v2170
      %2177 = vmatprep.subr.bf16.mxu0 0
      %2178 = vmatpush1.bf16.msra.mxu0 0
      %2179 = vmatprep.subr.bf16.mxu0 0
      %2180 = vmatpush1.bf16.msra.mxu0 0
      %2181 = vmatprep.subr.bf16.mxu0 0
      %2182 = vmatpush1.bf16.msra.mxu0 0
      %2183 = vmatprep.subr.bf16.mxu0 0
      %2184 = vmatpush1.bf16.msra.mxu0 0
      %2185 = vmatprep.subr.bf16.mxu0 0
      %2186 = vmatpush1.bf16.msra.mxu0 0
      %2187 = vmatprep.subr.bf16.mxu0 0
      %2188 = vmatpush1.bf16.msra.mxu0 0
      %2189 = vmatprep.subr.bf16.mxu0 0
      %2190 = vmatpush1.bf16.msra.mxu0 0
      %2191 = vmatprep.subr.bf16.mxu0 0
      %2192 = vmatpush1.bf16.msra.mxu0 0
      %2193 = vmatprep.subr.bf16.mxu0 0
      %2194 = vmatpush1.bf16.msra.mxu0 0
      %2195 = vmatprep.subr.bf16.mxu0 0
      %2196 = vmatpush1.bf16.msra.mxu0 0
      %2197 = vmatprep.subr.bf16.mxu0 0
      %2198 = vmatpush1.bf16.msra.mxu0 0
      %2199 = vmatprep.subr.bf16.mxu0 0
      %2200 = vmatpush1.bf16.msra.mxu0 0
      %2201 = vmatprep.subr.bf16.mxu0 0
      %2202 = vmatpush1.bf16.msra.mxu0 0
      %2203 = vmatprep.subr.bf16.mxu0 0
      %2204 = vmatpush1.bf16.msra.mxu0 0
      %2205 = vmatprep.subr.bf16.mxu0 0
      %2206 = vmatpush1.bf16.msra.mxu0 0
      %2207 = vmatprep.mubr.bf16.mxu0 0
      %2208 = vmatmul.mubr.bf16.gmra.mrb[0].mxu0 %v2167
      %v2209 = vpop.f32.mrb[0].mxu0
      %v2210 = vadd.f32 0.0, %v2209
      %v2211 = vpop.f32.mrb[0].mxu0
      %v2212 = vadd.f32 0.0, %v2211
      %v2213 = vpop.f32.mrb[0].mxu0
      %v2214 = vpop.f32.mrb[0].mxu0
      %2215 = vdwg.mxu0
      %v2216 = vadd.f32 %v2149, %v2210
      %v2217 = vadd.f32 %v2150, %v2212
      %v2218 = vsel %vm857, %v1837, 0
      %v2219 = vsel %vm858, %v1834, 0
      %v2220 = vsel %vm859, %v1840, 0
      %v2221 = vld [vmem:[%s1 + $0x74] sm:$0xf]
      %2225 = vrot.lane.b32.xlu0 %v2218, 96
      %v2226 = vpop.permute.xlu0 %2225
      %2227 = vrot.lane.b32.xlu0 %v2219, 96
      %v2228 = vpop.permute.xlu0 %2227
      %2229 = vrot.lane.b32.xlu0 %v2220, 96
      %v2230 = vpop.permute.xlu0 %2229
      %v2231 = vsel %vm873, %v2226, %v2228
      %v2232 = vsel %vm873, %v2228, %v2230
      %v2234 = vsel %vm309, %v2221, 0
      %v2237 = vsel %vm313, %v2231, 0
      %v2240 = vsel %vm313, %v2232, 0
      %2242 = vmatprep.subr.bf16.mxu0 %v2240
      %2243 = vmatpush1.bf16.msra.mxu0 %v2237
      %2244 = vmatprep.subr.bf16.mxu0 0
      %2245 = vmatpush1.bf16.msra.mxu0 0
      %2246 = vmatprep.subr.bf16.mxu0 0
      %2247 = vmatpush1.bf16.msra.mxu0 0
      %2248 = vmatprep.subr.bf16.mxu0 0
      %2249 = vmatpush1.bf16.msra.mxu0 0
      %2250 = vmatprep.subr.bf16.mxu0 0
      %2251 = vmatpush1.bf16.msra.mxu0 0
      %2252 = vmatprep.subr.bf16.mxu0 0
      %2253 = vmatpush1.bf16.msra.mxu0 0
      %2254 = vmatprep.subr.bf16.mxu0 0
      %2255 = vmatpush1.bf16.msra.mxu0 0
      %2256 = vmatprep.subr.bf16.mxu0 0
      %2257 = vmatpush1.bf16.msra.mxu0 0
      %2258 = vmatprep.subr.bf16.mxu0 0
      %2259 = vmatpush1.bf16.msra.mxu0 0
      %2260 = vmatprep.subr.bf16.mxu0 0
      %2261 = vmatpush1.bf16.msra.mxu0 0
      %2262 = vmatprep.subr.bf16.mxu0 0
      %2263 = vmatpush1.bf16.msra.mxu0 0
      %2264 = vmatprep.subr.bf16.mxu0 0
      %2265 = vmatpush1.bf16.msra.mxu0 0
      %2266 = vmatprep.subr.bf16.mxu0 0
      %2267 = vmatpush1.bf16.msra.mxu0 0
      %2268 = vmatprep.subr.bf16.mxu0 0
      %2269 = vmatpush1.bf16.msra.mxu0 0
      %2270 = vmatprep.subr.bf16.mxu0 0
      %2271 = vmatpush1.bf16.msra.mxu0 0
      %2272 = vmatprep.subr.bf16.mxu0 0
      %2273 = vmatpush1.bf16.msra.mxu0 0
      %2274 = vmatprep.mubr.bf16.mxu0 0
      %2275 = vmatmul.mubr.bf16.gmra.mrb[0].mxu0 %v2234
      %v2276 = vpop.f32.mrb[0].mxu0
      %v2277 = vadd.f32 0.0, %v2276
      %v2278 = vpop.f32.mrb[0].mxu0
      %v2279 = vadd.f32 0.0, %v2278
      %v2280 = vpop.f32.mrb[0].mxu0
      %v2281 = vpop.f32.mrb[0].mxu0
      %2282 = vdwg.mxu0
      %v2283 = vadd.f32 %v2216, %v2277
      %v2284 = vadd.f32 %v2217, %v2279
      %v2285 = vld [vmem:[%s1 + $0x78] sm:$0xf]
      %2286 = vrot.lane.b32.xlu0 %v1837, 95
      %v2287 = vpop.permute.xlu0 %2286
      %2288 = vrot.lane.b32.xlu0 %v1834, 95
      %v2289 = vpop.permute.xlu0 %2288
      %2290 = vrot.lane.b32.xlu0 %v1840, 95
      %v2291 = vpop.permute.xlu0 %2290
      %v2292 = vsel %vm935, %v2287, %v2289
      %v2293 = vsel %vm935, %v2289, %v2291
      %v2295 = vsel %vm309, %v2285, 0
      %v2298 = vsel %vm313, %v2292, 0
      %v2301 = vsel %vm313, %v2293, 0
      %2303 = vmatprep.subr.bf16.mxu0 %v2301
      %2304 = vmatpush1.bf16.msra.mxu0 %v2298
      %2305 = vmatprep.subr.bf16.mxu0 0
      %2306 = vmatpush1.bf16.msra.mxu0 0
      %2307 = vmatprep.subr.bf16.mxu0 0
      %2308 = vmatpush1.bf16.msra.mxu0 0
      %2309 = vmatprep.subr.bf16.mxu0 0
      %2310 = vmatpush1.bf16.msra.mxu0 0
      %2311 = vmatprep.subr.bf16.mxu0 0
      %2312 = vmatpush1.bf16.msra.mxu0 0
      %2313 = vmatprep.subr.bf16.mxu0 0
      %2314 = vmatpush1.bf16.msra.mxu0 0
      %2315 = vmatprep.subr.bf16.mxu0 0
      %2316 = vmatpush1.bf16.msra.mxu0 0
      %2317 = vmatprep.subr.bf16.mxu0 0
      %2318 = vmatpush1.bf16.msra.mxu0 0
      %2319 = vmatprep.subr.bf16.mxu0 0
      %2320 = vmatpush1.bf16.msra.mxu0 0
      %2321 = vmatprep.subr.bf16.mxu0 0
      %2322 = vmatpush1.bf16.msra.mxu0 0
      %2323 = vmatprep.subr.bf16.mxu0 0
      %2324 = vmatpush1.bf16.msra.mxu0 0
      %2325 = vmatprep.subr.bf16.mxu0 0
      %2326 = vmatpush1.bf16.msra.mxu0 0
      %2327 = vmatprep.subr.bf16.mxu0 0
      %2328 = vmatpush1.bf16.msra.mxu0 0
      %2329 = vmatprep.subr.bf16.mxu0 0
      %2330 = vmatpush1.bf16.msra.mxu0 0
      %2331 = vmatprep.subr.bf16.mxu0 0
      %2332 = vmatpush1.bf16.msra.mxu0 0
      %2333 = vmatprep.subr.bf16.mxu0 0
      %2334 = vmatpush1.bf16.msra.mxu0 0
      %2335 = vmatprep.mubr.bf16.mxu0 0
      %2336 = vmatmul.mubr.bf16.gmra.mrb[0].mxu0 %v2295
      %v2337 = vpop.f32.mrb[0].mxu0
      %v2338 = vadd.f32 0.0, %v2337
      %v2339 = vpop.f32.mrb[0].mxu0
      %v2340 = vadd.f32 0.0, %v2339
      %v2341 = vpop.f32.mrb[0].mxu0
      %v2342 = vpop.f32.mrb[0].mxu0
      %2343 = vdwg.mxu0
      %v2344 = vadd.f32 %v2283, %v2338
      %v2345 = vadd.f32 %v2284, %v2340
      %v2346 = vsel %vm996, %v1837, 0
      %v2347 = vsel %vm997, %v1834, 0
      %v2348 = vsel %vm998, %v1840, 0
      %v2349 = vld [vmem:[%s1 + $0x7c] sm:$0xf]
      %2353 = vrot.lane.b32.xlu0 %v2346, 94
      %v2354 = vpop.permute.xlu0 %2353
      %2355 = vrot.lane.b32.xlu0 %v2347, 94
      %v2356 = vpop.permute.xlu0 %2355
      %2357 = vrot.lane.b32.xlu0 %v2348, 94
      %v2358 = vpop.permute.xlu0 %2357
      %v2359 = vsel %vm1012, %v2354, %v2356
      %v2360 = vsel %vm1012, %v2356, %v2358
      %v2362 = vsel %vm309, %v2349, 0
      %v2365 = vsel %vm313, %v2359, 0
      %v2368 = vsel %vm313, %v2360, 0
      %2370 = vmatprep.subr.bf16.mxu0 %v2368
      %2371 = vmatpush1.bf16.msra.mxu0 %v2365
      %2372 = vmatprep.subr.bf16.mxu0 0
      %2373 = vmatpush1.bf16.msra.mxu0 0
      %2374 = vmatprep.subr.bf16.mxu0 0
      %2375 = vmatpush1.bf16.msra.mxu0 0
      %2376 = vmatprep.subr.bf16.mxu0 0
      %2377 = vmatpush1.bf16.msra.mxu0 0
      %2378 = vmatprep.subr.bf16.mxu0 0
      %2379 = vmatpush1.bf16.msra.mxu0 0
      %2380 = vmatprep.subr.bf16.mxu0 0
      %2381 = vmatpush1.bf16.msra.mxu0 0
      %2382 = vmatprep.subr.bf16.mxu0 0
      %2383 = vmatpush1.bf16.msra.mxu0 0
      %2384 = vmatprep.subr.bf16.mxu0 0
      %2385 = vmatpush1.bf16.msra.mxu0 0
      %2386 = vmatprep.subr.bf16.mxu0 0
      %2387 = vmatpush1.bf16.msra.mxu0 0
      %2388 = vmatprep.subr.bf16.mxu0 0
      %2389 = vmatpush1.bf16.msra.mxu0 0
      %2390 = vmatprep.subr.bf16.mxu0 0
      %2391 = vmatpush1.bf16.msra.mxu0 0
      %2392 = vmatprep.subr.bf16.mxu0 0
      %2393 = vmatpush1.bf16.msra.mxu0 0
      %2394 = vmatprep.subr.bf16.mxu0 0
      %2395 = vmatpush1.bf16.msra.mxu0 0
      %2396 = vmatprep.subr.bf16.mxu0 0
      %2397 = vmatpush1.bf16.msra.mxu0 0
      %2398 = vmatprep.subr.bf16.mxu0 0
      %2399 = vmatpush1.bf16.msra.mxu0 0
      %2400 = vmatprep.subr.bf16.mxu0 0
      %2401 = vmatpush1.bf16.msra.mxu0 0
      %2402 = vmatprep.mubr.bf16.mxu0 0
      %2403 = vmatmul.mubr.bf16.gmra.mrb[0].mxu0 %v2362
      %v2404 = vpop.f32.mrb[0].mxu0
      %v2405 = vadd.f32 0.0, %v2404
      %v2406 = vpop.f32.mrb[0].mxu0
      %v2407 = vadd.f32 0.0, %v2406
      %v2408 = vpop.f32.mrb[0].mxu0
      %v2409 = vpop.f32.mrb[0].mxu0
      %2410 = vdwg.mxu0
      %v2411 = vadd.f32 %v2344, %v2405
      %v2412 = vadd.f32 %v2345, %v2407
      %2414 = vset.pattern.permute.xlu0 0
      %2415 = vperm.xlu0 %2414, %v1827
      %v2416 = vpop.permute.xlu0 %2415
      %v2418 = vadd.f32 %v2411, %v2416
      %v2419 = vadd.f32 %v2412, %v2416
      %v2420 = vxor.u32 %v2418, 2147483648
      %v2421 = vxor.u32 %v2419, 2147483648
      %v2422 = vmul.f32 %v2420, 1.442695
      %v2423 = vpow.pop %v2422
      %v2424 = vmul.f32 %v2421, 1.442695
      %v2425 = vpow.pop %v2424
      %v2426 = vadd.f32 %v2423, 1.0
      %v2427 = vadd.f32 %v2425, 1.0
      %v2428 = vrcp.pop %v2426
      %v2429 = vmul.f32 1.0, %v2428
      %v2430 = vrcp.pop %v2427
      %v2431 = vmul.f32 1.0, %v2430
      %v2432 = vmul.f32 %v2418, %v2429
      %v2433 = vmul.f32 %v2419, %v2431
      %v2434 = vpack.c.bf16 %v2432, %v2432
      %v2435 = vpack.c.bf16 %v2433, %v2433
      %v2436 = vld [vmem:[%s1 + $0x80] sm:$0xf]
      %v2437 = vld [vmem:[%s1 + $0x84] sm:$0xf]
      %v2438 = vld [vmem:[%s2 + $0x38] sm:$0xff]
      %v2439 = vld [vmem:[%s2 + $0x40] sm:$0xff]
      %2441 = vset.pattern.permute.xlu0 0
      %2442 = vperm.xlu0 %2441, %v2438
      %v2443 = vpop.permute.xlu0 %2442
      %2446 = vset.pattern.permute.xlu0 0
      %2447 = vperm.xlu0 %2446, %v2439
      %v2448 = vpop.permute.xlu0 %2447
      %v2452 = vunpack.c.l.b16 %v2436
      %v2453 = vunpack.c.l.b16 %v2437
      %v2454 = vpack.c.b16 %v2453, %v2452
      %v2456 = vsel %vm309, %v2454, 0
      %v2459 = vsel %vm313, %v2434, 0
      %v2462 = vsel %vm313, %v2435, 0
      %2464 = vmatprep.subr.bf16.mxu0 %v2462
      %2465 = vmatpush1.bf16.msra.mxu0 %v2459
      %2466 = vmatprep.subr.bf16.mxu0 0
      %2467 = vmatpush1.bf16.msra.mxu0 0
      %2468 = vmatprep.subr.bf16.mxu0 0
      %2469 = vmatpush1.bf16.msra.mxu0 0
      %2470 = vmatprep.subr.bf16.mxu0 0
      %2471 = vmatpush1.bf16.msra.mxu0 0
      %2472 = vmatprep.subr.bf16.mxu0 0
      %2473 = vmatpush1.bf16.msra.mxu0 0
      %2474 = vmatprep.subr.bf16.mxu0 0
      %2475 = vmatpush1.bf16.msra.mxu0 0
      %2476 = vmatprep.subr.bf16.mxu0 0
      %2477 = vmatpush1.bf16.msra.mxu0 0
      %2478 = vmatprep.subr.bf16.mxu0 0
      %2479 = vmatpush1.bf16.msra.mxu0 0
      %2480 = vmatprep.subr.bf16.mxu0 0
      %2481 = vmatpush1.bf16.msra.mxu0 0
      %2482 = vmatprep.subr.bf16.mxu0 0
      %2483 = vmatpush1.bf16.msra.mxu0 0
      %2484 = vmatprep.subr.bf16.mxu0 0
      %2485 = vmatpush1.bf16.msra.mxu0 0
      %2486 = vmatprep.subr.bf16.mxu0 0
      %2487 = vmatpush1.bf16.msra.mxu0 0
      %2488 = vmatprep.subr.bf16.mxu0 0
      %2489 = vmatpush1.bf16.msra.mxu0 0
      %2490 = vmatprep.subr.bf16.mxu0 0
      %2491 = vmatpush1.bf16.msra.mxu0 0
      %2492 = vmatprep.subr.bf16.mxu0 0
      %2493 = vmatpush1.bf16.msra.mxu0 0
      %2494 = vmatprep.subr.bf16.mxu0 0
      %2495 = vmatpush1.bf16.msra.mxu0 0
      %2496 = vmatprep.mubr.bf16.mxu0 0
      %2497 = vmatmul.mubr.bf16.gmra.mrb[0].mxu0 %v2456
      %v2498 = vpop.f32.mrb[0].mxu0
      %v2499 = vadd.f32 %v2443, %v2498
      %v2500 = vpop.f32.mrb[0].mxu0
      %v2501 = vadd.f32 %v2443, %v2500
      %v2502 = vpop.f32.mrb[0].mxu0
      %v2503 = vadd.f32 %v2448, %v2502
      %v2504 = vpop.f32.mrb[0].mxu0
      %v2505 = vadd.f32 %v2448, %v2504
      %2506 = vdwg.mxu0
      %v2507 = vxor.u32 %v2499, 2147483648
      %v2508 = vxor.u32 %v2501, 2147483648
      %v2509 = vxor.u32 %v2503, 2147483648
      %v2510 = vxor.u32 %v2505, 2147483648
      %v2511 = vmul.f32 %v2507, 1.442695
      %v2512 = vpow.pop %v2511
      %v2513 = vmul.f32 %v2508, 1.442695
      %v2514 = vpow.pop %v2513
      %v2515 = vmul.f32 %v2509, 1.442695
      %v2516 = vpow.pop %v2515
      %v2517 = vmul.f32 %v2510, 1.442695
      %v2518 = vpow.pop %v2517
      %v2519 = vadd.f32 %v2512, 1.0
      %v2520 = vadd.f32 %v2514, 1.0
      %v2521 = vadd.f32 %v2516, 1.0
      %v2522 = vadd.f32 %v2518, 1.0
      %v2523 = vrcp.pop %v2519
      %v2524 = vmul.f32 1.0, %v2523
      %v2525 = vrcp.pop %v2520
      %v2526 = vmul.f32 1.0, %v2525
      %v2527 = vrcp.pop %v2521
      %v2528 = vmul.f32 1.0, %v2527
      %v2529 = vrcp.pop %v2522
      %v2530 = vmul.f32 1.0, %v2529
      %v2531 = vmul.f32 %v2499, %v2524
      %v2532 = vmul.f32 %v2501, %v2526
      %v2533 = vmul.f32 %v2503, %v2528
      %v2534 = vmul.f32 %v2505, %v2530
      %v2535 = vpack.c.bf16 %v2533, %v2533
      %v2536 = vpack.c.bf16 %v2534, %v2534
      %v2537 = vpack.c.bf16 %v2531, %v2531
      %v2538 = vpack.c.bf16 %v2532, %v2532
      %v2539 = vld [vmem:[%s2 + $0x48] sm:$0xff]
      %2542 = vrot.lane.b32.xlu0 %v2537, 17
      %v2543 = vpop.permute.xlu0 %2542
      %2544 = vrot.lane.b32.xlu0 %v2538, 17
      %v2545 = vpop.permute.xlu0 %2544
      %v2546 = vsel %vm402, %v2543, %v2545
      %v2549 = vsel %vm405, 0, %v2543
      %v2552 = vsel %vm405, %v2545, 0
      %v2554 = vsel %vm427, %v2549, 0
      %v2555 = vsel %vm428, %v2546, 0
      %v2556 = vld [vmem:[%s1 + $0x88] sm:$0xf]
      %v2557 = vld [vmem:[%s1 + $0x8c] sm:$0xf]
      %2560 = vrot.lane.b32.xlu0 %v2549, 127
      %v2561 = vpop.permute.xlu0 %2560
      %2562 = vrot.lane.b32.xlu0 %v2546, 127
      %v2563 = vpop.permute.xlu0 %2562
      %2564 = vrot.lane.b32.xlu0 %v2552, 127
      %v2565 = vpop.permute.xlu0 %2564
      %v2566 = vsel %vm441, %v2561, %v2563
      %v2567 = vsel %vm441, %v2563, %v2565
      %v2569 = vsel %vm309, %v2557, 0
      %v2572 = vsel %vm313, %v2566, 0
      %v2575 = vsel %vm313, %v2567, 0
      %2577 = vmatprep.subr.bf16.mxu0 %v2575
      %2578 = vmatpush1.bf16.msra.mxu0 %v2572
      %2579 = vmatprep.subr.bf16.mxu0 0
      %2580 = vmatpush1.bf16.msra.mxu0 0
      %2581 = vmatprep.subr.bf16.mxu0 0
      %2582 = vmatpush1.bf16.msra.mxu0 0
      %2583 = vmatprep.subr.bf16.mxu0 0
      %2584 = vmatpush1.bf16.msra.mxu0 0
      %2585 = vmatprep.subr.bf16.mxu0 0
      %2586 = vmatpush1.bf16.msra.mxu0 0
      %2587 = vmatprep.subr.bf16.mxu0 0
      %2588 = vmatpush1.bf16.msra.mxu0 0
      %2589 = vmatprep.subr.bf16.mxu0 0
      %2590 = vmatpush1.bf16.msra.mxu0 0
      %2591 = vmatprep.subr.bf16.mxu0 0
      %2592 = vmatpush1.bf16.msra.mxu0 0
      %2593 = vmatprep.subr.bf16.mxu0 0
      %2594 = vmatpush1.bf16.msra.mxu0 0
      %2595 = vmatprep.subr.bf16.mxu0 0
      %2596 = vmatpush1.bf16.msra.mxu0 0
      %2597 = vmatprep.subr.bf16.mxu0 0
      %2598 = vmatpush1.bf16.msra.mxu0 0
      %2599 = vmatprep.subr.bf16.mxu0 0
      %2600 = vmatpush1.bf16.msra.mxu0 0
      %2601 = vmatprep.subr.bf16.mxu0 0
      %2602 = vmatpush1.bf16.msra.mxu0 0
      %2603 = vmatprep.subr.bf16.mxu0 0
      %2604 = vmatpush1.bf16.msra.mxu0 0
      %2605 = vmatprep.subr.bf16.mxu0 0
      %2606 = vmatpush1.bf16.msra.mxu0 0
      %2607 = vmatprep.subr.bf16.mxu0 0
      %2608 = vmatpush1.bf16.msra.mxu0 0
      %2609 = vmatprep.mubr.bf16.mxu0 0
      %2610 = vmatmul.mubr.bf16.gmra.mrb[0].mxu0 %v2569
      %v2611 = vpop.f32.mrb[0].mxu0
      %v2612 = vadd.f32 0.0, %v2611
      %v2613 = vpop.f32.mrb[0].mxu0
      %v2614 = vadd.f32 0.0, %v2613
      %v2615 = vpop.f32.mrb[0].mxu0
      %v2616 = vpop.f32.mrb[0].mxu0
      %2617 = vdwg.mxu0
      %v2619 = vsel %vm309, %v2556, 0
      %v2622 = vsel %vm313, %v2554, 0
      %v2625 = vsel %vm313, %v2555, 0
      %2627 = vmatprep.subr.bf16.mxu0 %v2625
      %2628 = vmatpush1.bf16.msra.mxu0 %v2622
      %2629 = vmatprep.subr.bf16.mxu0 0
      %2630 = vmatpush1.bf16.msra.mxu0 0
      %2631 = vmatprep.subr.bf16.mxu0 0
      %2632 = vmatpush1.bf16.msra.mxu0 0
      %2633 = vmatprep.subr.bf16.mxu0 0
      %2634 = vmatpush1.bf16.msra.mxu0 0
      %2635 = vmatprep.subr.bf16.mxu0 0
      %2636 = vmatpush1.bf16.msra.mxu0 0
      %2637 = vmatprep.subr.bf16.mxu0 0
      %2638 = vmatpush1.bf16.msra.mxu0 0
      %2639 = vmatprep.subr.bf16.mxu0 0
      %2640 = vmatpush1.bf16.msra.mxu0 0
      %2641 = vmatprep.subr.bf16.mxu0 0
      %2642 = vmatpush1.bf16.msra.mxu0 0
      %2643 = vmatprep.subr.bf16.mxu0 0
      %2644 = vmatpush1.bf16.msra.mxu0 0
      %2645 = vmatprep.subr.bf16.mxu0 0
      %2646 = vmatpush1.bf16.msra.mxu0 0
      %2647 = vmatprep.subr.bf16.mxu0 0
      %2648 = vmatpush1.bf16.msra.mxu0 0
      %2649 = vmatprep.subr.bf16.mxu0 0
      %2650 = vmatpush1.bf16.msra.mxu0 0
      %2651 = vmatprep.subr.bf16.mxu0 0
      %2652 = vmatpush1.bf16.msra.mxu0 0
      %2653 = vmatprep.subr.bf16.mxu0 0
      %2654 = vmatpush1.bf16.msra.mxu0 0
      %2655 = vmatprep.subr.bf16.mxu0 0
      %2656 = vmatpush1.bf16.msra.mxu0 0
      %2657 = vmatprep.subr.bf16.mxu0 0
      %2658 = vmatpush1.bf16.msra.mxu0 0
      %2659 = vmatprep.mubr.bf16.mxu0 0
      %2660 = vmatmul.mubr.bf16.gmra.mrb[0].mxu0 %v2619
      %v2661 = vpop.f32.mrb[0].mxu0
      %v2662 = vadd.f32 %v2612, %v2661
      %v2663 = vpop.f32.mrb[0].mxu0
      %v2664 = vadd.f32 %v2614, %v2663
      %v2665 = vpop.f32.mrb[0].mxu0
      %v2666 = vpop.f32.mrb[0].mxu0
      %2667 = vdwg.mxu0
      %v2668 = vsel %vm564, %v2549, 0
      %v2669 = vsel %vm565, %v2546, 0
      %v2670 = vsel %vm566, %v2552, 0
      %v2671 = vld [vmem:[%s1 + $0x90] sm:$0xf]
      %2675 = vrot.lane.b32.xlu0 %v2668, 126
      %v2676 = vpop.permute.xlu0 %2675
      %2677 = vrot.lane.b32.xlu0 %v2669, 126
      %v2678 = vpop.permute.xlu0 %2677
      %2679 = vrot.lane.b32.xlu0 %v2670, 126
      %v2680 = vpop.permute.xlu0 %2679
      %v2681 = vsel %vm580, %v2676, %v2678
      %v2682 = vsel %vm580, %v2678, %v2680
      %v2684 = vsel %vm309, %v2671, 0
      %v2687 = vsel %vm313, %v2681, 0
      %v2690 = vsel %vm313, %v2682, 0
      %2692 = vmatprep.subr.bf16.mxu0 %v2690
      %2693 = vmatpush1.bf16.msra.mxu0 %v2687
      %2694 = vmatprep.subr.bf16.mxu0 0
      %2695 = vmatpush1.bf16.msra.mxu0 0
      %2696 = vmatprep.subr.bf16.mxu0 0
      %2697 = vmatpush1.bf16.msra.mxu0 0
      %2698 = vmatprep.subr.bf16.mxu0 0
      %2699 = vmatpush1.bf16.msra.mxu0 0
      %2700 = vmatprep.subr.bf16.mxu0 0
      %2701 = vmatpush1.bf16.msra.mxu0 0
      %2702 = vmatprep.subr.bf16.mxu0 0
      %2703 = vmatpush1.bf16.msra.mxu0 0
      %2704 = vmatprep.subr.bf16.mxu0 0
      %2705 = vmatpush1.bf16.msra.mxu0 0
      %2706 = vmatprep.subr.bf16.mxu0 0
      %2707 = vmatpush1.bf16.msra.mxu0 0
      %2708 = vmatprep.subr.bf16.mxu0 0
      %2709 = vmatpush1.bf16.msra.mxu0 0
      %2710 = vmatprep.subr.bf16.mxu0 0
      %2711 = vmatpush1.bf16.msra.mxu0 0
      %2712 = vmatprep.subr.bf16.mxu0 0
      %2713 = vmatpush1.bf16.msra.mxu0 0
      %2714 = vmatprep.subr.bf16.mxu0 0
      %2715 = vmatpush1.bf16.msra.mxu0 0
      %2716 = vmatprep.subr.bf16.mxu0 0
      %2717 = vmatpush1.bf16.msra.mxu0 0
      %2718 = vmatprep.subr.bf16.mxu0 0
      %2719 = vmatpush1.bf16.msra.mxu0 0
      %2720 = vmatprep.subr.bf16.mxu0 0
      %2721 = vmatpush1.bf16.msra.mxu0 0
      %2722 = vmatprep.subr.bf16.mxu0 0
      %2723 = vmatpush1.bf16.msra.mxu0 0
      %2724 = vmatprep.mubr.bf16.mxu0 0
      %2725 = vmatmul.mubr.bf16.gmra.mrb[0].mxu0 %v2684
      %v2726 = vpop.f32.mrb[0].mxu0
      %v2727 = vadd.f32 0.0, %v2726
      %v2728 = vpop.f32.mrb[0].mxu0
      %v2729 = vadd.f32 0.0, %v2728
      %v2730 = vpop.f32.mrb[0].mxu0
      %v2731 = vpop.f32.mrb[0].mxu0
      %2732 = vdwg.mxu0
      %v2733 = vadd.f32 %v2662, %v2727
      %v2734 = vadd.f32 %v2664, %v2729
      %v2735 = vsel %vm641, %v2549, 0
      %v2736 = vsel %vm642, %v2546, 0
      %v2737 = vsel %vm643, %v2552, 0
      %v2738 = vld [vmem:[%s1 + $0x94] sm:$0xf]
      %2742 = vrot.lane.b32.xlu0 %v2735, 112
      %v2743 = vpop.permute.xlu0 %2742
      %2744 = vrot.lane.b32.xlu0 %v2736, 112
      %v2745 = vpop.permute.xlu0 %2744
      %2746 = vrot.lane.b32.xlu0 %v2737, 112
      %v2747 = vpop.permute.xlu0 %2746
      %v2748 = vsel %vm657, %v2743, %v2745
      %v2749 = vsel %vm657, %v2745, %v2747
      %v2751 = vsel %vm309, %v2738, 0
      %v2754 = vsel %vm313, %v2748, 0
      %v2757 = vsel %vm313, %v2749, 0
      %2759 = vmatprep.subr.bf16.mxu0 %v2757
      %2760 = vmatpush1.bf16.msra.mxu0 %v2754
      %2761 = vmatprep.subr.bf16.mxu0 0
      %2762 = vmatpush1.bf16.msra.mxu0 0
      %2763 = vmatprep.subr.bf16.mxu0 0
      %2764 = vmatpush1.bf16.msra.mxu0 0
      %2765 = vmatprep.subr.bf16.mxu0 0
      %2766 = vmatpush1.bf16.msra.mxu0 0
      %2767 = vmatprep.subr.bf16.mxu0 0
      %2768 = vmatpush1.bf16.msra.mxu0 0
      %2769 = vmatprep.subr.bf16.mxu0 0
      %2770 = vmatpush1.bf16.msra.mxu0 0
      %2771 = vmatprep.subr.bf16.mxu0 0
      %2772 = vmatpush1.bf16.msra.mxu0 0
      %2773 = vmatprep.subr.bf16.mxu0 0
      %2774 = vmatpush1.bf16.msra.mxu0 0
      %2775 = vmatprep.subr.bf16.mxu0 0
      %2776 = vmatpush1.bf16.msra.mxu0 0
      %2777 = vmatprep.subr.bf16.mxu0 0
      %2778 = vmatpush1.bf16.msra.mxu0 0
      %2779 = vmatprep.subr.bf16.mxu0 0
      %2780 = vmatpush1.bf16.msra.mxu0 0
      %2781 = vmatprep.subr.bf16.mxu0 0
      %2782 = vmatpush1.bf16.msra.mxu0 0
      %2783 = vmatprep.subr.bf16.mxu0 0
      %2784 = vmatpush1.bf16.msra.mxu0 0
      %2785 = vmatprep.subr.bf16.mxu0 0
      %2786 = vmatpush1.bf16.msra.mxu0 0
      %2787 = vmatprep.subr.bf16.mxu0 0
      %2788 = vmatpush1.bf16.msra.mxu0 0
      %2789 = vmatprep.subr.bf16.mxu0 0
      %2790 = vmatpush1.bf16.msra.mxu0 0
      %2791 = vmatprep.mubr.bf16.mxu0 0
      %2792 = vmatmul.mubr.bf16.gmra.mrb[0].mxu0 %v2751
      %v2793 = vpop.f32.mrb[0].mxu0
      %v2794 = vadd.f32 0.0, %v2793
      %v2795 = vpop.f32.mrb[0].mxu0
      %v2796 = vadd.f32 0.0, %v2795
      %v2797 = vpop.f32.mrb[0].mxu0
      %v2798 = vpop.f32.mrb[0].mxu0
      %2799 = vdwg.mxu0
      %v2800 = vadd.f32 %v2733, %v2794
      %v2801 = vadd.f32 %v2734, %v2796
      %v2802 = vld [vmem:[%s1 + $0x98] sm:$0xf]
      %2803 = vrot.lane.b32.xlu0 %v2549, 111
      %v2804 = vpop.permute.xlu0 %2803
      %2805 = vrot.lane.b32.xlu0 %v2546, 111
      %v2806 = vpop.permute.xlu0 %2805
      %2807 = vrot.lane.b32.xlu0 %v2552, 111
      %v2808 = vpop.permute.xlu0 %2807
      %v2809 = vsel %vm719, %v2804, %v2806
      %v2810 = vsel %vm719, %v2806, %v2808
      %v2812 = vsel %vm309, %v2802, 0
      %v2815 = vsel %vm313, %v2809, 0
      %v2818 = vsel %vm313, %v2810, 0
      %2820 = vmatprep.subr.bf16.mxu0 %v2818
      %2821 = vmatpush1.bf16.msra.mxu0 %v2815
      %2822 = vmatprep.subr.bf16.mxu0 0
      %2823 = vmatpush1.bf16.msra.mxu0 0
      %2824 = vmatprep.subr.bf16.mxu0 0
      %2825 = vmatpush1.bf16.msra.mxu0 0
      %2826 = vmatprep.subr.bf16.mxu0 0
      %2827 = vmatpush1.bf16.msra.mxu0 0
      %2828 = vmatprep.subr.bf16.mxu0 0
      %2829 = vmatpush1.bf16.msra.mxu0 0
      %2830 = vmatprep.subr.bf16.mxu0 0
      %2831 = vmatpush1.bf16.msra.mxu0 0
      %2832 = vmatprep.subr.bf16.mxu0 0
      %2833 = vmatpush1.bf16.msra.mxu0 0
      %2834 = vmatprep.subr.bf16.mxu0 0
      %2835 = vmatpush1.bf16.msra.mxu0 0
      %2836 = vmatprep.subr.bf16.mxu0 0
      %2837 = vmatpush1.bf16.msra.mxu0 0
      %2838 = vmatprep.subr.bf16.mxu0 0
      %2839 = vmatpush1.bf16.msra.mxu0 0
      %2840 = vmatprep.subr.bf16.mxu0 0
      %2841 = vmatpush1.bf16.msra.mxu0 0
      %2842 = vmatprep.subr.bf16.mxu0 0
      %2843 = vmatpush1.bf16.msra.mxu0 0
      %2844 = vmatprep.subr.bf16.mxu0 0
      %2845 = vmatpush1.bf16.msra.mxu0 0
      %2846 = vmatprep.subr.bf16.mxu0 0
      %2847 = vmatpush1.bf16.msra.mxu0 0
      %2848 = vmatprep.subr.bf16.mxu0 0
      %2849 = vmatpush1.bf16.msra.mxu0 0
      %2850 = vmatprep.subr.bf16.mxu0 0
      %2851 = vmatpush1.bf16.msra.mxu0 0
      %2852 = vmatprep.mubr.bf16.mxu0 0
      %2853 = vmatmul.mubr.bf16.gmra.mrb[0].mxu0 %v2812
      %v2854 = vpop.f32.mrb[0].mxu0
      %v2855 = vadd.f32 0.0, %v2854
      %v2856 = vpop.f32.mrb[0].mxu0
      %v2857 = vadd.f32 0.0, %v2856
      %v2858 = vpop.f32.mrb[0].mxu0
      %v2859 = vpop.f32.mrb[0].mxu0
      %2860 = vdwg.mxu0
      %v2861 = vadd.f32 %v2800, %v2855
      %v2862 = vadd.f32 %v2801, %v2857
      %v2863 = vsel %vm780, %v2549, 0
      %v2864 = vsel %vm781, %v2546, 0
      %v2865 = vsel %vm782, %v2552, 0
      %v2866 = vld [vmem:[%s1 + $0x9c] sm:$0xf]
      %2870 = vrot.lane.b32.xlu0 %v2863, 110
      %v2871 = vpop.permute.xlu0 %2870
      %2872 = vrot.lane.b32.xlu0 %v2864, 110
      %v2873 = vpop.permute.xlu0 %2872
      %2874 = vrot.lane.b32.xlu0 %v2865, 110
      %v2875 = vpop.permute.xlu0 %2874
      %v2876 = vsel %vm796, %v2871, %v2873
      %v2877 = vsel %vm796, %v2873, %v2875
      %v2879 = vsel %vm309, %v2866, 0
      %v2882 = vsel %vm313, %v2876, 0
      %v2885 = vsel %vm313, %v2877, 0
      %2887 = vmatprep.subr.bf16.mxu0 %v2885
      %2888 = vmatpush1.bf16.msra.mxu0 %v2882
      %2889 = vmatprep.subr.bf16.mxu0 0
      %2890 = vmatpush1.bf16.msra.mxu0 0
      %2891 = vmatprep.subr.bf16.mxu0 0
      %2892 = vmatpush1.bf16.msra.mxu0 0
      %2893 = vmatprep.subr.bf16.mxu0 0
      %2894 = vmatpush1.bf16.msra.mxu0 0
      %2895 = vmatprep.subr.bf16.mxu0 0
      %2896 = vmatpush1.bf16.msra.mxu0 0
      %2897 = vmatprep.subr.bf16.mxu0 0
      %2898 = vmatpush1.bf16.msra.mxu0 0
      %2899 = vmatprep.subr.bf16.mxu0 0
      %2900 = vmatpush1.bf16.msra.mxu0 0
      %2901 = vmatprep.subr.bf16.mxu0 0
      %2902 = vmatpush1.bf16.msra.mxu0 0
      %2903 = vmatprep.subr.bf16.mxu0 0
      %2904 = vmatpush1.bf16.msra.mxu0 0
      %2905 = vmatprep.subr.bf16.mxu0 0
      %2906 = vmatpush1.bf16.msra.mxu0 0
      %2907 = vmatprep.subr.bf16.mxu0 0
      %2908 = vmatpush1.bf16.msra.mxu0 0
      %2909 = vmatprep.subr.bf16.mxu0 0
      %2910 = vmatpush1.bf16.msra.mxu0 0
      %2911 = vmatprep.subr.bf16.mxu0 0
      %2912 = vmatpush1.bf16.msra.mxu0 0
      %2913 = vmatprep.subr.bf16.mxu0 0
      %2914 = vmatpush1.bf16.msra.mxu0 0
      %2915 = vmatprep.subr.bf16.mxu0 0
      %2916 = vmatpush1.bf16.msra.mxu0 0
      %2917 = vmatprep.subr.bf16.mxu0 0
      %2918 = vmatpush1.bf16.msra.mxu0 0
      %2919 = vmatprep.mubr.bf16.mxu0 0
      %2920 = vmatmul.mubr.bf16.gmra.mrb[0].mxu0 %v2879
      %v2921 = vpop.f32.mrb[0].mxu0
      %v2922 = vadd.f32 0.0, %v2921
      %v2923 = vpop.f32.mrb[0].mxu0
      %v2924 = vadd.f32 0.0, %v2923
      %v2925 = vpop.f32.mrb[0].mxu0
      %v2926 = vpop.f32.mrb[0].mxu0
      %2927 = vdwg.mxu0
      %v2928 = vadd.f32 %v2861, %v2922
      %v2929 = vadd.f32 %v2862, %v2924
      %v2930 = vsel %vm857, %v2549, 0
      %v2931 = vsel %vm858, %v2546, 0
      %v2932 = vsel %vm859, %v2552, 0
      %v2933 = vld [vmem:[%s1 + $0xa0] sm:$0xf]
      %2937 = vrot.lane.b32.xlu0 %v2930, 96
      %v2938 = vpop.permute.xlu0 %2937
      %2939 = vrot.lane.b32.xlu0 %v2931, 96
      %v2940 = vpop.permute.xlu0 %2939
      %2941 = vrot.lane.b32.xlu0 %v2932, 96
      %v2942 = vpop.permute.xlu0 %2941
      %v2943 = vsel %vm873, %v2938, %v2940
      %v2944 = vsel %vm873, %v2940, %v2942
      %v2946 = vsel %vm309, %v2933, 0
      %v2949 = vsel %vm313, %v2943, 0
      %v2952 = vsel %vm313, %v2944, 0
      %2954 = vmatprep.subr.bf16.mxu0 %v2952
      %2955 = vmatpush1.bf16.msra.mxu0 %v2949
      %2956 = vmatprep.subr.bf16.mxu0 0
      %2957 = vmatpush1.bf16.msra.mxu0 0
      %2958 = vmatprep.subr.bf16.mxu0 0
      %2959 = vmatpush1.bf16.msra.mxu0 0
      %2960 = vmatprep.subr.bf16.mxu0 0
      %2961 = vmatpush1.bf16.msra.mxu0 0
      %2962 = vmatprep.subr.bf16.mxu0 0
      %2963 = vmatpush1.bf16.msra.mxu0 0
      %2964 = vmatprep.subr.bf16.mxu0 0
      %2965 = vmatpush1.bf16.msra.mxu0 0
      %2966 = vmatprep.subr.bf16.mxu0 0
      %2967 = vmatpush1.bf16.msra.mxu0 0
      %2968 = vmatprep.subr.bf16.mxu0 0
      %2969 = vmatpush1.bf16.msra.mxu0 0
      %2970 = vmatprep.subr.bf16.mxu0 0
      %2971 = vmatpush1.bf16.msra.mxu0 0
      %2972 = vmatprep.subr.bf16.mxu0 0
      %2973 = vmatpush1.bf16.msra.mxu0 0
      %2974 = vmatprep.subr.bf16.mxu0 0
      %2975 = vmatpush1.bf16.msra.mxu0 0
      %2976 = vmatprep.subr.bf16.mxu0 0
      %2977 = vmatpush1.bf16.msra.mxu0 0
      %2978 = vmatprep.subr.bf16.mxu0 0
      %2979 = vmatpush1.bf16.msra.mxu0 0
      %2980 = vmatprep.subr.bf16.mxu0 0
      %2981 = vmatpush1.bf16.msra.mxu0 0
      %2982 = vmatprep.subr.bf16.mxu0 0
      %2983 = vmatpush1.bf16.msra.mxu0 0
      %2984 = vmatprep.subr.bf16.mxu0 0
      %2985 = vmatpush1.bf16.msra.mxu0 0
      %2986 = vmatprep.mubr.bf16.mxu0 0
      %2987 = vmatmul.mubr.bf16.gmra.mrb[0].mxu0 %v2946
      %v2988 = vpop.f32.mrb[0].mxu0
      %v2989 = vadd.f32 0.0, %v2988
      %v2990 = vpop.f32.mrb[0].mxu0
      %v2991 = vadd.f32 0.0, %v2990
      %v2992 = vpop.f32.mrb[0].mxu0
      %v2993 = vpop.f32.mrb[0].mxu0
      %2994 = vdwg.mxu0
      %v2995 = vadd.f32 %v2928, %v2989
      %v2996 = vadd.f32 %v2929, %v2991
      %v2997 = vld [vmem:[%s1 + $0xa4] sm:$0xf]
      %2998 = vrot.lane.b32.xlu0 %v2549, 95
      %v2999 = vpop.permute.xlu0 %2998
      %3000 = vrot.lane.b32.xlu0 %v2546, 95
      %v3001 = vpop.permute.xlu0 %3000
      %3002 = vrot.lane.b32.xlu0 %v2552, 95
      %v3003 = vpop.permute.xlu0 %3002
      %v3004 = vsel %vm935, %v2999, %v3001
      %v3005 = vsel %vm935, %v3001, %v3003
      %v3007 = vsel %vm309, %v2997, 0
      %v3010 = vsel %vm313, %v3004, 0
      %v3013 = vsel %vm313, %v3005, 0
      %3015 = vmatprep.subr.bf16.mxu0 %v3013
      %3016 = vmatpush1.bf16.msra.mxu0 %v3010
      %3017 = vmatprep.subr.bf16.mxu0 0
      %3018 = vmatpush1.bf16.msra.mxu0 0
      %3019 = vmatprep.subr.bf16.mxu0 0
      %3020 = vmatpush1.bf16.msra.mxu0 0
      %3021 = vmatprep.subr.bf16.mxu0 0
      %3022 = vmatpush1.bf16.msra.mxu0 0
      %3023 = vmatprep.subr.bf16.mxu0 0
      %3024 = vmatpush1.bf16.msra.mxu0 0
      %3025 = vmatprep.subr.bf16.mxu0 0
      %3026 = vmatpush1.bf16.msra.mxu0 0
      %3027 = vmatprep.subr.bf16.mxu0 0
      %3028 = vmatpush1.bf16.msra.mxu0 0
      %3029 = vmatprep.subr.bf16.mxu0 0
      %3030 = vmatpush1.bf16.msra.mxu0 0
      %3031 = vmatprep.subr.bf16.mxu0 0
      %3032 = vmatpush1.bf16.msra.mxu0 0
      %3033 = vmatprep.subr.bf16.mxu0 0
      %3034 = vmatpush1.bf16.msra.mxu0 0
      %3035 = vmatprep.subr.bf16.mxu0 0
      %3036 = vmatpush1.bf16.msra.mxu0 0
      %3037 = vmatprep.subr.bf16.mxu0 0
      %3038 = vmatpush1.bf16.msra.mxu0 0
      %3039 = vmatprep.subr.bf16.mxu0 0
      %3040 = vmatpush1.bf16.msra.mxu0 0
      %3041 = vmatprep.subr.bf16.mxu0 0
      %3042 = vmatpush1.bf16.msra.mxu0 0
      %3043 = vmatprep.subr.bf16.mxu0 0
      %3044 = vmatpush1.bf16.msra.mxu0 0
      %3045 = vmatprep.subr.bf16.mxu0 0
      %3046 = vmatpush1.bf16.msra.mxu0 0
      %3047 = vmatprep.mubr.bf16.mxu0 0
      %3048 = vmatmul.mubr.bf16.gmra.mrb[0].mxu0 %v3007
      %v3049 = vpop.f32.mrb[0].mxu0
      %v3050 = vadd.f32 0.0, %v3049
      %v3051 = vpop.f32.mrb[0].mxu0
      %v3052 = vadd.f32 0.0, %v3051
      %v3053 = vpop.f32.mrb[0].mxu0
      %v3054 = vpop.f32.mrb[0].mxu0
      %3055 = vdwg.mxu0
      %v3056 = vadd.f32 %v2995, %v3050
      %v3057 = vadd.f32 %v2996, %v3052
      %v3058 = vsel %vm996, %v2549, 0
      %v3059 = vsel %vm997, %v2546, 0
      %v3060 = vsel %vm998, %v2552, 0
      %v3061 = vld [vmem:[%s1 + $0xa8] sm:$0xf]
      %3065 = vrot.lane.b32.xlu0 %v3058, 94
      %v3066 = vpop.permute.xlu0 %3065
      %3067 = vrot.lane.b32.xlu0 %v3059, 94
      %v3068 = vpop.permute.xlu0 %3067
      %3069 = vrot.lane.b32.xlu0 %v3060, 94
      %v3070 = vpop.permute.xlu0 %3069
      %v3071 = vsel %vm1012, %v3066, %v3068
      %v3072 = vsel %vm1012, %v3068, %v3070
      %v3074 = vsel %vm309, %v3061, 0
      %v3077 = vsel %vm313, %v3071, 0
      %v3080 = vsel %vm313, %v3072, 0
      %3082 = vmatprep.subr.bf16.mxu0 %v3080
      %3083 = vmatpush1.bf16.msra.mxu0 %v3077
      %3084 = vmatprep.subr.bf16.mxu0 0
      %3085 = vmatpush1.bf16.msra.mxu0 0
      %3086 = vmatprep.subr.bf16.mxu0 0
      %3087 = vmatpush1.bf16.msra.mxu0 0
      %3088 = vmatprep.subr.bf16.mxu0 0
      %3089 = vmatpush1.bf16.msra.mxu0 0
      %3090 = vmatprep.subr.bf16.mxu0 0
      %3091 = vmatpush1.bf16.msra.mxu0 0
      %3092 = vmatprep.subr.bf16.mxu0 0
      %3093 = vmatpush1.bf16.msra.mxu0 0
      %3094 = vmatprep.subr.bf16.mxu0 0
      %3095 = vmatpush1.bf16.msra.mxu0 0
      %3096 = vmatprep.subr.bf16.mxu0 0
      %3097 = vmatpush1.bf16.msra.mxu0 0
      %3098 = vmatprep.subr.bf16.mxu0 0
      %3099 = vmatpush1.bf16.msra.mxu0 0
      %3100 = vmatprep.subr.bf16.mxu0 0
      %3101 = vmatpush1.bf16.msra.mxu0 0
      %3102 = vmatprep.subr.bf16.mxu0 0
      %3103 = vmatpush1.bf16.msra.mxu0 0
      %3104 = vmatprep.subr.bf16.mxu0 0
      %3105 = vmatpush1.bf16.msra.mxu0 0
      %3106 = vmatprep.subr.bf16.mxu0 0
      %3107 = vmatpush1.bf16.msra.mxu0 0
      %3108 = vmatprep.subr.bf16.mxu0 0
      %3109 = vmatpush1.bf16.msra.mxu0 0
      %3110 = vmatprep.subr.bf16.mxu0 0
      %3111 = vmatpush1.bf16.msra.mxu0 0
      %3112 = vmatprep.subr.bf16.mxu0 0
      %3113 = vmatpush1.bf16.msra.mxu0 0
      %3114 = vmatprep.mubr.bf16.mxu0 0
      %3115 = vmatmul.mubr.bf16.gmra.mrb[0].mxu0 %v3074
      %v3116 = vpop.f32.mrb[0].mxu0
      %v3117 = vadd.f32 0.0, %v3116
      %v3118 = vpop.f32.mrb[0].mxu0
      %v3119 = vadd.f32 0.0, %v3118
      %v3120 = vpop.f32.mrb[0].mxu0
      %v3121 = vpop.f32.mrb[0].mxu0
      %3122 = vdwg.mxu0
      %v3123 = vadd.f32 %v3056, %v3117
      %v3124 = vadd.f32 %v3057, %v3119
      %3126 = vset.pattern.permute.xlu0 0
      %3127 = vperm.xlu0 %3126, %v2539
      %v3128 = vpop.permute.xlu0 %3127
      %v3130 = vadd.f32 %v3123, %v3128
      %v3131 = vadd.f32 %v3124, %v3128
      %v3132 = vxor.u32 %v3130, 2147483648
      %v3133 = vxor.u32 %v3131, 2147483648
      %v3134 = vmul.f32 %v3132, 1.442695
      %v3135 = vpow.pop %v3134
      %v3136 = vmul.f32 %v3133, 1.442695
      %v3137 = vpow.pop %v3136
      %v3138 = vadd.f32 %v3135, 1.0
      %v3139 = vadd.f32 %v3137, 1.0
      %v3140 = vrcp.pop %v3138
      %v3141 = vmul.f32 1.0, %v3140
      %v3142 = vrcp.pop %v3139
      %v3143 = vmul.f32 1.0, %v3142
      %v3144 = vmul.f32 %v3130, %v3141
      %v3145 = vmul.f32 %v3131, %v3143
      %v3146 = vpack.c.bf16 %v3144, %v3144
      %v3147 = vpack.c.bf16 %v3145, %v3145
      %v3148 = vld [vmem:[%s2 + $0x50] sm:$0xff]
      %3151 = vrot.lane.b32.xlu0 %v3146, 17
      %v3152 = vpop.permute.xlu0 %3151
      %3153 = vrot.lane.b32.xlu0 %v3147, 17
      %v3154 = vpop.permute.xlu0 %3153
      %v3155 = vsel %vm402, %v3152, %v3154
      %v3158 = vsel %vm405, 0, %v3152
      %v3161 = vsel %vm405, %v3154, 0
      %v3163 = vsel %vm427, %v3158, 0
      %v3164 = vsel %vm428, %v3155, 0
      %v3165 = vld [vmem:[%s1 + $0xac] sm:$0xf]
      %v3166 = vld [vmem:[%s1 + $0xb0] sm:$0xf]
      %3169 = vrot.lane.b32.xlu0 %v3158, 127
      %v3170 = vpop.permute.xlu0 %3169
      %3171 = vrot.lane.b32.xlu0 %v3155, 127
      %v3172 = vpop.permute.xlu0 %3171
      %3173 = vrot.lane.b32.xlu0 %v3161, 127
      %v3174 = vpop.permute.xlu0 %3173
      %v3175 = vsel %vm441, %v3170, %v3172
      %v3176 = vsel %vm441, %v3172, %v3174
      %v3178 = vsel %vm309, %v3166, 0
      %v3181 = vsel %vm313, %v3175, 0
      %v3184 = vsel %vm313, %v3176, 0
      %3186 = vmatprep.subr.bf16.mxu0 %v3184
      %3187 = vmatpush1.bf16.msra.mxu0 %v3181
      %3188 = vmatprep.subr.bf16.mxu0 0
      %3189 = vmatpush1.bf16.msra.mxu0 0
      %3190 = vmatprep.subr.bf16.mxu0 0
      %3191 = vmatpush1.bf16.msra.mxu0 0
      %3192 = vmatprep.subr.bf16.mxu0 0
      %3193 = vmatpush1.bf16.msra.mxu0 0
      %3194 = vmatprep.subr.bf16.mxu0 0
      %3195 = vmatpush1.bf16.msra.mxu0 0
      %3196 = vmatprep.subr.bf16.mxu0 0
      %3197 = vmatpush1.bf16.msra.mxu0 0
      %3198 = vmatprep.subr.bf16.mxu0 0
      %3199 = vmatpush1.bf16.msra.mxu0 0
      %3200 = vmatprep.subr.bf16.mxu0 0
      %3201 = vmatpush1.bf16.msra.mxu0 0
      %3202 = vmatprep.subr.bf16.mxu0 0
      %3203 = vmatpush1.bf16.msra.mxu0 0
      %3204 = vmatprep.subr.bf16.mxu0 0
      %3205 = vmatpush1.bf16.msra.mxu0 0
      %3206 = vmatprep.subr.bf16.mxu0 0
      %3207 = vmatpush1.bf16.msra.mxu0 0
      %3208 = vmatprep.subr.bf16.mxu0 0
      %3209 = vmatpush1.bf16.msra.mxu0 0
      %3210 = vmatprep.subr.bf16.mxu0 0
      %3211 = vmatpush1.bf16.msra.mxu0 0
      %3212 = vmatprep.subr.bf16.mxu0 0
      %3213 = vmatpush1.bf16.msra.mxu0 0
      %3214 = vmatprep.subr.bf16.mxu0 0
      %3215 = vmatpush1.bf16.msra.mxu0 0
      %3216 = vmatprep.subr.bf16.mxu0 0
      %3217 = vmatpush1.bf16.msra.mxu0 0
      %3218 = vmatprep.mubr.bf16.mxu0 0
      %3219 = vmatmul.mubr.bf16.gmra.mrb[0].mxu0 %v3178
      %v3220 = vpop.f32.mrb[0].mxu0
      %v3221 = vadd.f32 0.0, %v3220
      %v3222 = vpop.f32.mrb[0].mxu0
      %v3223 = vadd.f32 0.0, %v3222
      %v3224 = vpop.f32.mrb[0].mxu0
      %v3225 = vpop.f32.mrb[0].mxu0
      %3226 = vdwg.mxu0
      %v3228 = vsel %vm309, %v3165, 0
      %v3231 = vsel %vm313, %v3163, 0
      %v3234 = vsel %vm313, %v3164, 0
      %3236 = vmatprep.subr.bf16.mxu0 %v3234
      %3237 = vmatpush1.bf16.msra.mxu0 %v3231
      %3238 = vmatprep.subr.bf16.mxu0 0
      %3239 = vmatpush1.bf16.msra.mxu0 0
      %3240 = vmatprep.subr.bf16.mxu0 0
      %3241 = vmatpush1.bf16.msra.mxu0 0
      %3242 = vmatprep.subr.bf16.mxu0 0
      %3243 = vmatpush1.bf16.msra.mxu0 0
      %3244 = vmatprep.subr.bf16.mxu0 0
      %3245 = vmatpush1.bf16.msra.mxu0 0
      %3246 = vmatprep.subr.bf16.mxu0 0
      %3247 = vmatpush1.bf16.msra.mxu0 0
      %3248 = vmatprep.subr.bf16.mxu0 0
      %3249 = vmatpush1.bf16.msra.mxu0 0
      %3250 = vmatprep.subr.bf16.mxu0 0
      %3251 = vmatpush1.bf16.msra.mxu0 0
      %3252 = vmatprep.subr.bf16.mxu0 0
      %3253 = vmatpush1.bf16.msra.mxu0 0
      %3254 = vmatprep.subr.bf16.mxu0 0
      %3255 = vmatpush1.bf16.msra.mxu0 0
      %3256 = vmatprep.subr.bf16.mxu0 0
      %3257 = vmatpush1.bf16.msra.mxu0 0
      %3258 = vmatprep.subr.bf16.mxu0 0
      %3259 = vmatpush1.bf16.msra.mxu0 0
      %3260 = vmatprep.subr.bf16.mxu0 0
      %3261 = vmatpush1.bf16.msra.mxu0 0
      %3262 = vmatprep.subr.bf16.mxu0 0
      %3263 = vmatpush1.bf16.msra.mxu0 0
      %3264 = vmatprep.subr.bf16.mxu0 0
      %3265 = vmatpush1.bf16.msra.mxu0 0
      %3266 = vmatprep.subr.bf16.mxu0 0
      %3267 = vmatpush1.bf16.msra.mxu0 0
      %3268 = vmatprep.mubr.bf16.mxu0 0
      %3269 = vmatmul.mubr.bf16.gmra.mrb[0].mxu0 %v3228
      %v3270 = vpop.f32.mrb[0].mxu0
      %v3271 = vadd.f32 %v3221, %v3270
      %v3272 = vpop.f32.mrb[0].mxu0
      %v3273 = vadd.f32 %v3223, %v3272
      %v3274 = vpop.f32.mrb[0].mxu0
      %v3275 = vpop.f32.mrb[0].mxu0
      %3276 = vdwg.mxu0
      %v3277 = vsel %vm564, %v3158, 0
      %v3278 = vsel %vm565, %v3155, 0
      %v3279 = vsel %vm566, %v3161, 0
      %v3280 = vld [vmem:[%s1 + $0xb4] sm:$0xf]
      %3284 = vrot.lane.b32.xlu0 %v3277, 126
      %v3285 = vpop.permute.xlu0 %3284
      %3286 = vrot.lane.b32.xlu0 %v3278, 126
      %v3287 = vpop.permute.xlu0 %3286
      %3288 = vrot.lane.b32.xlu0 %v3279, 126
      %v3289 = vpop.permute.xlu0 %3288
      %v3290 = vsel %vm580, %v3285, %v3287
      %v3291 = vsel %vm580, %v3287, %v3289
      %v3293 = vsel %vm309, %v3280, 0
      %v3296 = vsel %vm313, %v3290, 0
      %v3299 = vsel %vm313, %v3291, 0
      %3301 = vmatprep.subr.bf16.mxu0 %v3299
      %3302 = vmatpush1.bf16.msra.mxu0 %v3296
      %3303 = vmatprep.subr.bf16.mxu0 0
      %3304 = vmatpush1.bf16.msra.mxu0 0
      %3305 = vmatprep.subr.bf16.mxu0 0
      %3306 = vmatpush1.bf16.msra.mxu0 0
      %3307 = vmatprep.subr.bf16.mxu0 0
      %3308 = vmatpush1.bf16.msra.mxu0 0
      %3309 = vmatprep.subr.bf16.mxu0 0
      %3310 = vmatpush1.bf16.msra.mxu0 0
      %3311 = vmatprep.subr.bf16.mxu0 0
      %3312 = vmatpush1.bf16.msra.mxu0 0
      %3313 = vmatprep.subr.bf16.mxu0 0
      %3314 = vmatpush1.bf16.msra.mxu0 0
      %3315 = vmatprep.subr.bf16.mxu0 0
      %3316 = vmatpush1.bf16.msra.mxu0 0
      %3317 = vmatprep.subr.bf16.mxu0 0
      %3318 = vmatpush1.bf16.msra.mxu0 0
      %3319 = vmatprep.subr.bf16.mxu0 0
      %3320 = vmatpush1.bf16.msra.mxu0 0
      %3321 = vmatprep.subr.bf16.mxu0 0
      %3322 = vmatpush1.bf16.msra.mxu0 0
      %3323 = vmatprep.subr.bf16.mxu0 0
      %3324 = vmatpush1.bf16.msra.mxu0 0
      %3325 = vmatprep.subr.bf16.mxu0 0
      %3326 = vmatpush1.bf16.msra.mxu0 0
      %3327 = vmatprep.subr.bf16.mxu0 0
      %3328 = vmatpush1.bf16.msra.mxu0 0
      %3329 = vmatprep.subr.bf16.mxu0 0
      %3330 = vmatpush1.bf16.msra.mxu0 0
      %3331 = vmatprep.subr.bf16.mxu0 0
      %3332 = vmatpush1.bf16.msra.mxu0 0
      %3333 = vmatprep.mubr.bf16.mxu0 0
      %3334 = vmatmul.mubr.bf16.gmra.mrb[0].mxu0 %v3293
      %v3335 = vpop.f32.mrb[0].mxu0
      %v3336 = vadd.f32 0.0, %v3335
      %v3337 = vpop.f32.mrb[0].mxu0
      %v3338 = vadd.f32 0.0, %v3337
      %v3339 = vpop.f32.mrb[0].mxu0
      %v3340 = vpop.f32.mrb[0].mxu0
      %3341 = vdwg.mxu0
      %v3342 = vadd.f32 %v3271, %v3336
      %v3343 = vadd.f32 %v3273, %v3338
      %v3344 = vsel %vm641, %v3158, 0
      %v3345 = vsel %vm642, %v3155, 0
      %v3346 = vsel %vm643, %v3161, 0
      %v3347 = vld [vmem:[%s1 + $0xb8] sm:$0xf]
      %3351 = vrot.lane.b32.xlu0 %v3344, 112
      %v3352 = vpop.permute.xlu0 %3351
      %3353 = vrot.lane.b32.xlu0 %v3345, 112
      %v3354 = vpop.permute.xlu0 %3353
      %3355 = vrot.lane.b32.xlu0 %v3346, 112
      %v3356 = vpop.permute.xlu0 %3355
      %v3357 = vsel %vm657, %v3352, %v3354
      %v3358 = vsel %vm657, %v3354, %v3356
      %v3360 = vsel %vm309, %v3347, 0
      %v3363 = vsel %vm313, %v3357, 0
      %v3366 = vsel %vm313, %v3358, 0
      %3368 = vmatprep.subr.bf16.mxu0 %v3366
      %3369 = vmatpush1.bf16.msra.mxu0 %v3363
      %3370 = vmatprep.subr.bf16.mxu0 0
      %3371 = vmatpush1.bf16.msra.mxu0 0
      %3372 = vmatprep.subr.bf16.mxu0 0
      %3373 = vmatpush1.bf16.msra.mxu0 0
      %3374 = vmatprep.subr.bf16.mxu0 0
      %3375 = vmatpush1.bf16.msra.mxu0 0
      %3376 = vmatprep.subr.bf16.mxu0 0
      %3377 = vmatpush1.bf16.msra.mxu0 0
      %3378 = vmatprep.subr.bf16.mxu0 0
      %3379 = vmatpush1.bf16.msra.mxu0 0
      %3380 = vmatprep.subr.bf16.mxu0 0
      %3381 = vmatpush1.bf16.msra.mxu0 0
      %3382 = vmatprep.subr.bf16.mxu0 0
      %3383 = vmatpush1.bf16.msra.mxu0 0
      %3384 = vmatprep.subr.bf16.mxu0 0
      %3385 = vmatpush1.bf16.msra.mxu0 0
      %3386 = vmatprep.subr.bf16.mxu0 0
      %3387 = vmatpush1.bf16.msra.mxu0 0
      %3388 = vmatprep.subr.bf16.mxu0 0
      %3389 = vmatpush1.bf16.msra.mxu0 0
      %3390 = vmatprep.subr.bf16.mxu0 0
      %3391 = vmatpush1.bf16.msra.mxu0 0
      %3392 = vmatprep.subr.bf16.mxu0 0
      %3393 = vmatpush1.bf16.msra.mxu0 0
      %3394 = vmatprep.subr.bf16.mxu0 0
      %3395 = vmatpush1.bf16.msra.mxu0 0
      %3396 = vmatprep.subr.bf16.mxu0 0
      %3397 = vmatpush1.bf16.msra.mxu0 0
      %3398 = vmatprep.subr.bf16.mxu0 0
      %3399 = vmatpush1.bf16.msra.mxu0 0
      %3400 = vmatprep.mubr.bf16.mxu0 0
      %3401 = vmatmul.mubr.bf16.gmra.mrb[0].mxu0 %v3360
      %v3402 = vpop.f32.mrb[0].mxu0
      %v3403 = vadd.f32 0.0, %v3402
      %v3404 = vpop.f32.mrb[0].mxu0
      %v3405 = vadd.f32 0.0, %v3404
      %v3406 = vpop.f32.mrb[0].mxu0
      %v3407 = vpop.f32.mrb[0].mxu0
      %3408 = vdwg.mxu0
      %v3409 = vadd.f32 %v3342, %v3403
      %v3410 = vadd.f32 %v3343, %v3405
      %v3411 = vld [vmem:[%s1 + $0xbc] sm:$0xf]
      %3412 = vrot.lane.b32.xlu0 %v3158, 111
      %v3413 = vpop.permute.xlu0 %3412
      %3414 = vrot.lane.b32.xlu0 %v3155, 111
      %v3415 = vpop.permute.xlu0 %3414
      %3416 = vrot.lane.b32.xlu0 %v3161, 111
      %v3417 = vpop.permute.xlu0 %3416
      %v3418 = vsel %vm719, %v3413, %v3415
      %v3419 = vsel %vm719, %v3415, %v3417
      %v3421 = vsel %vm309, %v3411, 0
      %v3424 = vsel %vm313, %v3418, 0
      %v3427 = vsel %vm313, %v3419, 0
      %3429 = vmatprep.subr.bf16.mxu0 %v3427
      %3430 = vmatpush1.bf16.msra.mxu0 %v3424
      %3431 = vmatprep.subr.bf16.mxu0 0
      %3432 = vmatpush1.bf16.msra.mxu0 0
      %3433 = vmatprep.subr.bf16.mxu0 0
      %3434 = vmatpush1.bf16.msra.mxu0 0
      %3435 = vmatprep.subr.bf16.mxu0 0
      %3436 = vmatpush1.bf16.msra.mxu0 0
      %3437 = vmatprep.subr.bf16.mxu0 0
      %3438 = vmatpush1.bf16.msra.mxu0 0
      %3439 = vmatprep.subr.bf16.mxu0 0
      %3440 = vmatpush1.bf16.msra.mxu0 0
      %3441 = vmatprep.subr.bf16.mxu0 0
      %3442 = vmatpush1.bf16.msra.mxu0 0
      %3443 = vmatprep.subr.bf16.mxu0 0
      %3444 = vmatpush1.bf16.msra.mxu0 0
      %3445 = vmatprep.subr.bf16.mxu0 0
      %3446 = vmatpush1.bf16.msra.mxu0 0
      %3447 = vmatprep.subr.bf16.mxu0 0
      %3448 = vmatpush1.bf16.msra.mxu0 0
      %3449 = vmatprep.subr.bf16.mxu0 0
      %3450 = vmatpush1.bf16.msra.mxu0 0
      %3451 = vmatprep.subr.bf16.mxu0 0
      %3452 = vmatpush1.bf16.msra.mxu0 0
      %3453 = vmatprep.subr.bf16.mxu0 0
      %3454 = vmatpush1.bf16.msra.mxu0 0
      %3455 = vmatprep.subr.bf16.mxu0 0
      %3456 = vmatpush1.bf16.msra.mxu0 0
      %3457 = vmatprep.subr.bf16.mxu0 0
      %3458 = vmatpush1.bf16.msra.mxu0 0
      %3459 = vmatprep.subr.bf16.mxu0 0
      %3460 = vmatpush1.bf16.msra.mxu0 0
      %3461 = vmatprep.mubr.bf16.mxu0 0
      %3462 = vmatmul.mubr.bf16.gmra.mrb[0].mxu0 %v3421
      %v3463 = vpop.f32.mrb[0].mxu0
      %v3464 = vadd.f32 0.0, %v3463
      %v3465 = vpop.f32.mrb[0].mxu0
      %v3466 = vadd.f32 0.0, %v3465
      %v3467 = vpop.f32.mrb[0].mxu0
      %v3468 = vpop.f32.mrb[0].mxu0
      %3469 = vdwg.mxu0
      %v3470 = vadd.f32 %v3409, %v3464
      %v3471 = vadd.f32 %v3410, %v3466
      %v3472 = vsel %vm780, %v3158, 0
      %v3473 = vsel %vm781, %v3155, 0
      %v3474 = vsel %vm782, %v3161, 0
      %v3475 = vld [vmem:[%s1 + $0xc0] sm:$0xf]
      %3479 = vrot.lane.b32.xlu0 %v3472, 110
      %v3480 = vpop.permute.xlu0 %3479
      %3481 = vrot.lane.b32.xlu0 %v3473, 110
      %v3482 = vpop.permute.xlu0 %3481
      %3483 = vrot.lane.b32.xlu0 %v3474, 110
      %v3484 = vpop.permute.xlu0 %3483
      %v3485 = vsel %vm796, %v3480, %v3482
      %v3486 = vsel %vm796, %v3482, %v3484
      %v3488 = vsel %vm309, %v3475, 0
      %v3491 = vsel %vm313, %v3485, 0
      %v3494 = vsel %vm313, %v3486, 0
      %3496 = vmatprep.subr.bf16.mxu0 %v3494
      %3497 = vmatpush1.bf16.msra.mxu0 %v3491
      %3498 = vmatprep.subr.bf16.mxu0 0
      %3499 = vmatpush1.bf16.msra.mxu0 0
      %3500 = vmatprep.subr.bf16.mxu0 0
      %3501 = vmatpush1.bf16.msra.mxu0 0
      %3502 = vmatprep.subr.bf16.mxu0 0
      %3503 = vmatpush1.bf16.msra.mxu0 0
      %3504 = vmatprep.subr.bf16.mxu0 0
      %3505 = vmatpush1.bf16.msra.mxu0 0
      %3506 = vmatprep.subr.bf16.mxu0 0
      %3507 = vmatpush1.bf16.msra.mxu0 0
      %3508 = vmatprep.subr.bf16.mxu0 0
      %3509 = vmatpush1.bf16.msra.mxu0 0
      %3510 = vmatprep.subr.bf16.mxu0 0
      %3511 = vmatpush1.bf16.msra.mxu0 0
      %3512 = vmatprep.subr.bf16.mxu0 0
      %3513 = vmatpush1.bf16.msra.mxu0 0
      %3514 = vmatprep.subr.bf16.mxu0 0
      %3515 = vmatpush1.bf16.msra.mxu0 0
      %3516 = vmatprep.subr.bf16.mxu0 0
      %3517 = vmatpush1.bf16.msra.mxu0 0
      %3518 = vmatprep.subr.bf16.mxu0 0
      %3519 = vmatpush1.bf16.msra.mxu0 0
      %3520 = vmatprep.subr.bf16.mxu0 0
      %3521 = vmatpush1.bf16.msra.mxu0 0
      %3522 = vmatprep.subr.bf16.mxu0 0
      %3523 = vmatpush1.bf16.msra.mxu0 0
      %3524 = vmatprep.subr.bf16.mxu0 0
      %3525 = vmatpush1.bf16.msra.mxu0 0
      %3526 = vmatprep.subr.bf16.mxu0 0
      %3527 = vmatpush1.bf16.msra.mxu0 0
      %3528 = vmatprep.mubr.bf16.mxu0 0
      %3529 = vmatmul.mubr.bf16.gmra.mrb[0].mxu0 %v3488
      %v3530 = vpop.f32.mrb[0].mxu0
      %v3531 = vadd.f32 0.0, %v3530
      %v3532 = vpop.f32.mrb[0].mxu0
      %v3533 = vadd.f32 0.0, %v3532
      %v3534 = vpop.f32.mrb[0].mxu0
      %v3535 = vpop.f32.mrb[0].mxu0
      %3536 = vdwg.mxu0
      %v3537 = vadd.f32 %v3470, %v3531
      %v3538 = vadd.f32 %v3471, %v3533
      %v3539 = vsel %vm857, %v3158, 0
      %v3540 = vsel %vm858, %v3155, 0
      %v3541 = vsel %vm859, %v3161, 0
      %v3542 = vld [vmem:[%s1 + $0xc4] sm:$0xf]
      %3546 = vrot.lane.b32.xlu0 %v3539, 96
      %v3547 = vpop.permute.xlu0 %3546
      %3548 = vrot.lane.b32.xlu0 %v3540, 96
      %v3549 = vpop.permute.xlu0 %3548
      %3550 = vrot.lane.b32.xlu0 %v3541, 96
      %v3551 = vpop.permute.xlu0 %3550
      %v3552 = vsel %vm873, %v3547, %v3549
      %v3553 = vsel %vm873, %v3549, %v3551
      %v3555 = vsel %vm309, %v3542, 0
      %v3558 = vsel %vm313, %v3552, 0
      %v3561 = vsel %vm313, %v3553, 0
      %3563 = vmatprep.subr.bf16.mxu0 %v3561
      %3564 = vmatpush1.bf16.msra.mxu0 %v3558
      %3565 = vmatprep.subr.bf16.mxu0 0
      %3566 = vmatpush1.bf16.msra.mxu0 0
      %3567 = vmatprep.subr.bf16.mxu0 0
      %3568 = vmatpush1.bf16.msra.mxu0 0
      %3569 = vmatprep.subr.bf16.mxu0 0
      %3570 = vmatpush1.bf16.msra.mxu0 0
      %3571 = vmatprep.subr.bf16.mxu0 0
      %3572 = vmatpush1.bf16.msra.mxu0 0
      %3573 = vmatprep.subr.bf16.mxu0 0
      %3574 = vmatpush1.bf16.msra.mxu0 0
      %3575 = vmatprep.subr.bf16.mxu0 0
      %3576 = vmatpush1.bf16.msra.mxu0 0
      %3577 = vmatprep.subr.bf16.mxu0 0
      %3578 = vmatpush1.bf16.msra.mxu0 0
      %3579 = vmatprep.subr.bf16.mxu0 0
      %3580 = vmatpush1.bf16.msra.mxu0 0
      %3581 = vmatprep.subr.bf16.mxu0 0
      %3582 = vmatpush1.bf16.msra.mxu0 0
      %3583 = vmatprep.subr.bf16.mxu0 0
      %3584 = vmatpush1.bf16.msra.mxu0 0
      %3585 = vmatprep.subr.bf16.mxu0 0
      %3586 = vmatpush1.bf16.msra.mxu0 0
      %3587 = vmatprep.subr.bf16.mxu0 0
      %3588 = vmatpush1.bf16.msra.mxu0 0
      %3589 = vmatprep.subr.bf16.mxu0 0
      %3590 = vmatpush1.bf16.msra.mxu0 0
      %3591 = vmatprep.subr.bf16.mxu0 0
      %3592 = vmatpush1.bf16.msra.mxu0 0
      %3593 = vmatprep.subr.bf16.mxu0 0
      %3594 = vmatpush1.bf16.msra.mxu0 0
      %3595 = vmatprep.mubr.bf16.mxu0 0
      %3596 = vmatmul.mubr.bf16.gmra.mrb[0].mxu0 %v3555
      %v3597 = vpop.f32.mrb[0].mxu0
      %v3598 = vadd.f32 0.0, %v3597
      %v3599 = vpop.f32.mrb[0].mxu0
      %v3600 = vadd.f32 0.0, %v3599
      %v3601 = vpop.f32.mrb[0].mxu0
      %v3602 = vpop.f32.mrb[0].mxu0
      %3603 = vdwg.mxu0
      %v3604 = vadd.f32 %v3537, %v3598
      %v3605 = vadd.f32 %v3538, %v3600
      %v3606 = vld [vmem:[%s1 + $0xc8] sm:$0xf]
      %3607 = vrot.lane.b32.xlu0 %v3158, 95
      %v3608 = vpop.permute.xlu0 %3607
      %3609 = vrot.lane.b32.xlu0 %v3155, 95
      %v3610 = vpop.permute.xlu0 %3609
      %3611 = vrot.lane.b32.xlu0 %v3161, 95
      %v3612 = vpop.permute.xlu0 %3611
      %v3613 = vsel %vm935, %v3608, %v3610
      %v3614 = vsel %vm935, %v3610, %v3612
      %v3616 = vsel %vm309, %v3606, 0
      %v3619 = vsel %vm313, %v3613, 0
      %v3622 = vsel %vm313, %v3614, 0
      %3624 = vmatprep.subr.bf16.mxu0 %v3622
      %3625 = vmatpush1.bf16.msra.mxu0 %v3619
      %3626 = vmatprep.subr.bf16.mxu0 0
      %3627 = vmatpush1.bf16.msra.mxu0 0
      %3628 = vmatprep.subr.bf16.mxu0 0
      %3629 = vmatpush1.bf16.msra.mxu0 0
      %3630 = vmatprep.subr.bf16.mxu0 0
      %3631 = vmatpush1.bf16.msra.mxu0 0
      %3632 = vmatprep.subr.bf16.mxu0 0
      %3633 = vmatpush1.bf16.msra.mxu0 0
      %3634 = vmatprep.subr.bf16.mxu0 0
      %3635 = vmatpush1.bf16.msra.mxu0 0
      %3636 = vmatprep.subr.bf16.mxu0 0
      %3637 = vmatpush1.bf16.msra.mxu0 0
      %3638 = vmatprep.subr.bf16.mxu0 0
      %3639 = vmatpush1.bf16.msra.mxu0 0
      %3640 = vmatprep.subr.bf16.mxu0 0
      %3641 = vmatpush1.bf16.msra.mxu0 0
      %3642 = vmatprep.subr.bf16.mxu0 0
      %3643 = vmatpush1.bf16.msra.mxu0 0
      %3644 = vmatprep.subr.bf16.mxu0 0
      %3645 = vmatpush1.bf16.msra.mxu0 0
      %3646 = vmatprep.subr.bf16.mxu0 0
      %3647 = vmatpush1.bf16.msra.mxu0 0
      %3648 = vmatprep.subr.bf16.mxu0 0
      %3649 = vmatpush1.bf16.msra.mxu0 0
      %3650 = vmatprep.subr.bf16.mxu0 0
      %3651 = vmatpush1.bf16.msra.mxu0 0
      %3652 = vmatprep.subr.bf16.mxu0 0
      %3653 = vmatpush1.bf16.msra.mxu0 0
      %3654 = vmatprep.subr.bf16.mxu0 0
      %3655 = vmatpush1.bf16.msra.mxu0 0
      %3656 = vmatprep.mubr.bf16.mxu0 0
      %3657 = vmatmul.mubr.bf16.gmra.mrb[0].mxu0 %v3616
      %v3658 = vpop.f32.mrb[0].mxu0
      %v3659 = vadd.f32 0.0, %v3658
      %v3660 = vpop.f32.mrb[0].mxu0
      %v3661 = vadd.f32 0.0, %v3660
      %v3662 = vpop.f32.mrb[0].mxu0
      %v3663 = vpop.f32.mrb[0].mxu0
      %3664 = vdwg.mxu0
      %v3665 = vadd.f32 %v3604, %v3659
      %v3666 = vadd.f32 %v3605, %v3661
      %v3667 = vsel %vm996, %v3158, 0
      %v3668 = vsel %vm997, %v3155, 0
      %v3669 = vsel %vm998, %v3161, 0
      %v3670 = vld [vmem:[%s1 + $0xcc] sm:$0xf]
      %3674 = vrot.lane.b32.xlu0 %v3667, 94
      %v3675 = vpop.permute.xlu0 %3674
      %3676 = vrot.lane.b32.xlu0 %v3668, 94
      %v3677 = vpop.permute.xlu0 %3676
      %3678 = vrot.lane.b32.xlu0 %v3669, 94
      %v3679 = vpop.permute.xlu0 %3678
      %v3680 = vsel %vm1012, %v3675, %v3677
      %v3681 = vsel %vm1012, %v3677, %v3679
      %v3683 = vsel %vm309, %v3670, 0
      %v3686 = vsel %vm313, %v3680, 0
      %v3689 = vsel %vm313, %v3681, 0
      %3691 = vmatprep.subr.bf16.mxu0 %v3689
      %3692 = vmatpush1.bf16.msra.mxu0 %v3686
      %3693 = vmatprep.subr.bf16.mxu0 0
      %3694 = vmatpush1.bf16.msra.mxu0 0
      %3695 = vmatprep.subr.bf16.mxu0 0
      %3696 = vmatpush1.bf16.msra.mxu0 0
      %3697 = vmatprep.subr.bf16.mxu0 0
      %3698 = vmatpush1.bf16.msra.mxu0 0
      %3699 = vmatprep.subr.bf16.mxu0 0
      %3700 = vmatpush1.bf16.msra.mxu0 0
      %3701 = vmatprep.subr.bf16.mxu0 0
      %3702 = vmatpush1.bf16.msra.mxu0 0
      %3703 = vmatprep.subr.bf16.mxu0 0
      %3704 = vmatpush1.bf16.msra.mxu0 0
      %3705 = vmatprep.subr.bf16.mxu0 0
      %3706 = vmatpush1.bf16.msra.mxu0 0
      %3707 = vmatprep.subr.bf16.mxu0 0
      %3708 = vmatpush1.bf16.msra.mxu0 0
      %3709 = vmatprep.subr.bf16.mxu0 0
      %3710 = vmatpush1.bf16.msra.mxu0 0
      %3711 = vmatprep.subr.bf16.mxu0 0
      %3712 = vmatpush1.bf16.msra.mxu0 0
      %3713 = vmatprep.subr.bf16.mxu0 0
      %3714 = vmatpush1.bf16.msra.mxu0 0
      %3715 = vmatprep.subr.bf16.mxu0 0
      %3716 = vmatpush1.bf16.msra.mxu0 0
      %3717 = vmatprep.subr.bf16.mxu0 0
      %3718 = vmatpush1.bf16.msra.mxu0 0
      %3719 = vmatprep.subr.bf16.mxu0 0
      %3720 = vmatpush1.bf16.msra.mxu0 0
      %3721 = vmatprep.subr.bf16.mxu0 0
      %3722 = vmatpush1.bf16.msra.mxu0 0
      %3723 = vmatprep.mubr.bf16.mxu0 0
      %3724 = vmatmul.mubr.bf16.gmra.mrb[0].mxu0 %v3683
      %v3725 = vpop.f32.mrb[0].mxu0
      %v3726 = vadd.f32 0.0, %v3725
      %v3727 = vpop.f32.mrb[0].mxu0
      %v3728 = vadd.f32 0.0, %v3727
      %v3729 = vpop.f32.mrb[0].mxu0
      %v3730 = vpop.f32.mrb[0].mxu0
      %3731 = vdwg.mxu0
      %v3732 = vadd.f32 %v3665, %v3726
      %v3733 = vadd.f32 %v3666, %v3728
      %3735 = vset.pattern.permute.xlu0 0
      %3736 = vperm.xlu0 %3735, %v3148
      %v3737 = vpop.permute.xlu0 %3736
      %v3739 = vadd.f32 %v3732, %v3737
      %v3740 = vadd.f32 %v3733, %v3737
      %v3741 = vxor.u32 %v3739, 2147483648
      %v3742 = vxor.u32 %v3740, 2147483648
      %v3743 = vmul.f32 %v3741, 1.442695
      %v3744 = vpow.pop %v3743
      %v3745 = vmul.f32 %v3742, 1.442695
      %v3746 = vpow.pop %v3745
      %v3747 = vadd.f32 %v3744, 1.0
      %v3748 = vadd.f32 %v3746, 1.0
      %v3749 = vrcp.pop %v3747
      %v3750 = vmul.f32 1.0, %v3749
      %v3751 = vrcp.pop %v3748
      %v3752 = vmul.f32 1.0, %v3751
      %v3753 = vmul.f32 %v3739, %v3750
      %v3754 = vmul.f32 %v3740, %v3752
      %v3755 = vadd.f32 %v2531, %v3753
      %v3756 = vadd.f32 %v2532, %v3754
      %v3757 = vld [vmem:[%s1 + $0xd0] sm:$0xf]
      %v3758 = vpack.c.bf16 %v3755, %v3755
      %v3759 = vpack.c.bf16 %v3756, %v3756
      %v3760 = vld [vmem:[%s1 + $0xd4] sm:$0xf]
      %v3762 = vsel %vm309, %v3760, 0
      %v3765 = vsel %vm313, %v2535, 0
      %v3768 = vsel %vm313, %v2536, 0
      %3770 = vmatprep.subr.bf16.mxu0 %v3768
      %3771 = vmatpush1.bf16.msra.mxu0 %v3765
      %3772 = vmatprep.subr.bf16.mxu0 0
      %3773 = vmatpush1.bf16.msra.mxu0 0
      %3774 = vmatprep.subr.bf16.mxu0 0
      %3775 = vmatpush1.bf16.msra.mxu0 0
      %3776 = vmatprep.subr.bf16.mxu0 0
      %3777 = vmatpush1.bf16.msra.mxu0 0
      %3778 = vmatprep.subr.bf16.mxu0 0
      %3779 = vmatpush1.bf16.msra.mxu0 0
      %3780 = vmatprep.subr.bf16.mxu0 0
      %3781 = vmatpush1.bf16.msra.mxu0 0
      %3782 = vmatprep.subr.bf16.mxu0 0
      %3783 = vmatpush1.bf16.msra.mxu0 0
      %3784 = vmatprep.subr.bf16.mxu0 0
      %3785 = vmatpush1.bf16.msra.mxu0 0
      %3786 = vmatprep.subr.bf16.mxu0 0
      %3787 = vmatpush1.bf16.msra.mxu0 0
      %3788 = vmatprep.subr.bf16.mxu0 0
      %3789 = vmatpush1.bf16.msra.mxu0 0
      %3790 = vmatprep.subr.bf16.mxu0 0
      %3791 = vmatpush1.bf16.msra.mxu0 0
      %3792 = vmatprep.subr.bf16.mxu0 0
      %3793 = vmatpush1.bf16.msra.mxu0 0
      %3794 = vmatprep.subr.bf16.mxu0 0
      %3795 = vmatpush1.bf16.msra.mxu0 0
      %3796 = vmatprep.subr.bf16.mxu0 0
      %3797 = vmatpush1.bf16.msra.mxu0 0
      %3798 = vmatprep.subr.bf16.mxu0 0
      %3799 = vmatpush1.bf16.msra.mxu0 0
      %3800 = vmatprep.subr.bf16.mxu0 0
      %3801 = vmatpush1.bf16.msra.mxu0 0
      %3802 = vmatprep.mubr.bf16.mxu0 0
      %3803 = vmatmul.mubr.bf16.gmra.mrb[0].mxu0 %v3762
      %v3804 = vpop.f32.mrb[0].mxu0
      %v3805 = vadd.f32 0.0, %v3804
      %v3806 = vpop.f32.mrb[0].mxu0
      %v3807 = vadd.f32 0.0, %v3806
      %v3808 = vpop.f32.mrb[0].mxu0
      %v3809 = vpop.f32.mrb[0].mxu0
      %3810 = vdwg.mxu0
      %v3812 = vsel %vm309, %v3757, 0
      %v3815 = vsel %vm313, %v3758, 0
      %v3818 = vsel %vm313, %v3759, 0
      %3820 = vmatprep.subr.bf16.mxu0 %v3818
      %3821 = vmatpush1.bf16.msra.mxu0 %v3815
      %3822 = vmatprep.subr.bf16.mxu0 0
      %3823 = vmatpush1.bf16.msra.mxu0 0
      %3824 = vmatprep.subr.bf16.mxu0 0
      %3825 = vmatpush1.bf16.msra.mxu0 0
      %3826 = vmatprep.subr.bf16.mxu0 0
      %3827 = vmatpush1.bf16.msra.mxu0 0
      %3828 = vmatprep.subr.bf16.mxu0 0
      %3829 = vmatpush1.bf16.msra.mxu0 0
      %3830 = vmatprep.subr.bf16.mxu0 0
      %3831 = vmatpush1.bf16.msra.mxu0 0
      %3832 = vmatprep.subr.bf16.mxu0 0
      %3833 = vmatpush1.bf16.msra.mxu0 0
      %3834 = vmatprep.subr.bf16.mxu0 0
      %3835 = vmatpush1.bf16.msra.mxu0 0
      %3836 = vmatprep.subr.bf16.mxu0 0
      %3837 = vmatpush1.bf16.msra.mxu0 0
      %3838 = vmatprep.subr.bf16.mxu0 0
      %3839 = vmatpush1.bf16.msra.mxu0 0
      %3840 = vmatprep.subr.bf16.mxu0 0
      %3841 = vmatpush1.bf16.msra.mxu0 0
      %3842 = vmatprep.subr.bf16.mxu0 0
      %3843 = vmatpush1.bf16.msra.mxu0 0
      %3844 = vmatprep.subr.bf16.mxu0 0
      %3845 = vmatpush1.bf16.msra.mxu0 0
      %3846 = vmatprep.subr.bf16.mxu0 0
      %3847 = vmatpush1.bf16.msra.mxu0 0
      %3848 = vmatprep.subr.bf16.mxu0 0
      %3849 = vmatpush1.bf16.msra.mxu0 0
      %3850 = vmatprep.subr.bf16.mxu0 0
      %3851 = vmatpush1.bf16.msra.mxu0 0
      %3852 = vmatprep.mubr.bf16.mxu0 0
      %3853 = vmatmul.mubr.bf16.gmra.mrb[0].mxu0 %v3812
      %v3854 = vpop.f32.mrb[0].mxu0
      %v3855 = vadd.f32 %v3805, %v3854
      %v3856 = vpop.f32.mrb[0].mxu0
      %v3857 = vadd.f32 %v3807, %v3856
      %v3858 = vpop.f32.mrb[0].mxu0
      %v3859 = vpop.f32.mrb[0].mxu0
      %3860 = vdwg.mxu0
      %v3861 = vld [vmem:[%s2 + $0x58] sm:$0xff]
      %3863 = vset.pattern.permute.xlu0 0
      %3864 = vperm.xlu0 %3863, %v3861
      %v3865 = vpop.permute.xlu0 %3864
      %v3867 = vadd.f32 %v3855, %v3865
      %v3868 = vadd.f32 %v3857, %v3865
      %v3869 = vxor.u32 %v3867, 2147483648
      %v3870 = vxor.u32 %v3868, 2147483648
      %v3871 = vmul.f32 %v3869, 1.442695
      %v3872 = vpow.pop %v3871
      %v3873 = vmul.f32 %v3870, 1.442695
      %v3874 = vpow.pop %v3873
      %v3875 = vadd.f32 %v3872, 1.0
      %v3876 = vadd.f32 %v3874, 1.0
      %v3877 = vrcp.pop %v3875
      %v3878 = vmul.f32 1.0, %v3877
      %v3879 = vrcp.pop %v3876
      %v3880 = vmul.f32 1.0, %v3879
      %v3881 = vmul.f32 %v3867, %v3878
      %v3882 = vmul.f32 %v3868, %v3880
      %v3883 = vpack.c.bf16 %v3881, %v3881
      %v3884 = vpack.c.bf16 %v3882, %v3882
      %v3885 = vld [vmem:[%s2 + $0x60] sm:$0xff]
      %3888 = vrot.lane.b32.xlu0 %v3883, 17
      %v3889 = vpop.permute.xlu0 %3888
      %3890 = vrot.lane.b32.xlu0 %v3884, 17
      %v3891 = vpop.permute.xlu0 %3890
      %v3892 = vsel %vm402, %v3889, %v3891
      %v3895 = vsel %vm405, 0, %v3889
      %v3898 = vsel %vm405, %v3891, 0
      %v3900 = vsel %vm427, %v3895, 0
      %v3901 = vsel %vm428, %v3892, 0
      %v3902 = vld [vmem:[%s1 + $0xd8] sm:$0xf]
      %v3903 = vld [vmem:[%s1 + $0xdc] sm:$0xf]
      %3906 = vrot.lane.b32.xlu0 %v3895, 127
      %v3907 = vpop.permute.xlu0 %3906
      %3908 = vrot.lane.b32.xlu0 %v3892, 127
      %v3909 = vpop.permute.xlu0 %3908
      %3910 = vrot.lane.b32.xlu0 %v3898, 127
      %v3911 = vpop.permute.xlu0 %3910
      %v3912 = vsel %vm441, %v3907, %v3909
      %v3913 = vsel %vm441, %v3909, %v3911
      %v3915 = vsel %vm309, %v3903, 0
      %v3918 = vsel %vm313, %v3912, 0
      %v3921 = vsel %vm313, %v3913, 0
      %3923 = vmatprep.subr.bf16.mxu0 %v3921
      %3924 = vmatpush1.bf16.msra.mxu0 %v3918
      %3925 = vmatprep.subr.bf16.mxu0 0
      %3926 = vmatpush1.bf16.msra.mxu0 0
      %3927 = vmatprep.subr.bf16.mxu0 0
      %3928 = vmatpush1.bf16.msra.mxu0 0
      %3929 = vmatprep.subr.bf16.mxu0 0
      %3930 = vmatpush1.bf16.msra.mxu0 0
      %3931 = vmatprep.subr.bf16.mxu0 0
      %3932 = vmatpush1.bf16.msra.mxu0 0
      %3933 = vmatprep.subr.bf16.mxu0 0
      %3934 = vmatpush1.bf16.msra.mxu0 0
      %3935 = vmatprep.subr.bf16.mxu0 0
      %3936 = vmatpush1.bf16.msra.mxu0 0
      %3937 = vmatprep.subr.bf16.mxu0 0
      %3938 = vmatpush1.bf16.msra.mxu0 0
      %3939 = vmatprep.subr.bf16.mxu0 0
      %3940 = vmatpush1.bf16.msra.mxu0 0
      %3941 = vmatprep.subr.bf16.mxu0 0
      %3942 = vmatpush1.bf16.msra.mxu0 0
      %3943 = vmatprep.subr.bf16.mxu0 0
      %3944 = vmatpush1.bf16.msra.mxu0 0
      %3945 = vmatprep.subr.bf16.mxu0 0
      %3946 = vmatpush1.bf16.msra.mxu0 0
      %3947 = vmatprep.subr.bf16.mxu0 0
      %3948 = vmatpush1.bf16.msra.mxu0 0
      %3949 = vmatprep.subr.bf16.mxu0 0
      %3950 = vmatpush1.bf16.msra.mxu0 0
      %3951 = vmatprep.subr.bf16.mxu0 0
      %3952 = vmatpush1.bf16.msra.mxu0 0
      %3953 = vmatprep.subr.bf16.mxu0 0
      %3954 = vmatpush1.bf16.msra.mxu0 0
      %3955 = vmatprep.mubr.bf16.mxu0 0
      %3956 = vmatmul.mubr.bf16.gmra.mrb[0].mxu0 %v3915
      %v3957 = vpop.f32.mrb[0].mxu0
      %v3958 = vadd.f32 0.0, %v3957
      %v3959 = vpop.f32.mrb[0].mxu0
      %v3960 = vadd.f32 0.0, %v3959
      %v3961 = vpop.f32.mrb[0].mxu0
      %v3962 = vpop.f32.mrb[0].mxu0
      %3963 = vdwg.mxu0
      %v3965 = vsel %vm309, %v3902, 0
      %v3968 = vsel %vm313, %v3900, 0
      %v3971 = vsel %vm313, %v3901, 0
      %3973 = vmatprep.subr.bf16.mxu0 %v3971
      %3974 = vmatpush1.bf16.msra.mxu0 %v3968
      %3975 = vmatprep.subr.bf16.mxu0 0
      %3976 = vmatpush1.bf16.msra.mxu0 0
      %3977 = vmatprep.subr.bf16.mxu0 0
      %3978 = vmatpush1.bf16.msra.mxu0 0
      %3979 = vmatprep.subr.bf16.mxu0 0
      %3980 = vmatpush1.bf16.msra.mxu0 0
      %3981 = vmatprep.subr.bf16.mxu0 0
      %3982 = vmatpush1.bf16.msra.mxu0 0
      %3983 = vmatprep.subr.bf16.mxu0 0
      %3984 = vmatpush1.bf16.msra.mxu0 0
      %3985 = vmatprep.subr.bf16.mxu0 0
      %3986 = vmatpush1.bf16.msra.mxu0 0
      %3987 = vmatprep.subr.bf16.mxu0 0
      %3988 = vmatpush1.bf16.msra.mxu0 0
      %3989 = vmatprep.subr.bf16.mxu0 0
      %3990 = vmatpush1.bf16.msra.mxu0 0
      %3991 = vmatprep.subr.bf16.mxu0 0
      %3992 = vmatpush1.bf16.msra.mxu0 0
      %3993 = vmatprep.subr.bf16.mxu0 0
      %3994 = vmatpush1.bf16.msra.mxu0 0
      %3995 = vmatprep.subr.bf16.mxu0 0
      %3996 = vmatpush1.bf16.msra.mxu0 0
      %3997 = vmatprep.subr.bf16.mxu0 0
      %3998 = vmatpush1.bf16.msra.mxu0 0
      %3999 = vmatprep.subr.bf16.mxu0 0
      %4000 = vmatpush1.bf16.msra.mxu0 0
      %4001 = vmatprep.subr.bf16.mxu0 0
      %4002 = vmatpush1.bf16.msra.mxu0 0
      %4003 = vmatprep.subr.bf16.mxu0 0
      %4004 = vmatpush1.bf16.msra.mxu0 0
      %4005 = vmatprep.mubr.bf16.mxu0 0
      %4006 = vmatmul.mubr.bf16.gmra.mrb[0].mxu0 %v3965
      %v4007 = vpop.f32.mrb[0].mxu0
      %v4008 = vadd.f32 %v3958, %v4007
      %v4009 = vpop.f32.mrb[0].mxu0
      %v4010 = vadd.f32 %v3960, %v4009
      %v4011 = vpop.f32.mrb[0].mxu0
      %v4012 = vpop.f32.mrb[0].mxu0
      %4013 = vdwg.mxu0
      %v4014 = vsel %vm564, %v3895, 0
      %v4015 = vsel %vm565, %v3892, 0
      %v4016 = vsel %vm566, %v3898, 0
      %v4017 = vld [vmem:[%s1 + $0xe0] sm:$0xf]
      %4021 = vrot.lane.b32.xlu0 %v4014, 126
      %v4022 = vpop.permute.xlu0 %4021
      %4023 = vrot.lane.b32.xlu0 %v4015, 126
      %v4024 = vpop.permute.xlu0 %4023
      %4025 = vrot.lane.b32.xlu0 %v4016, 126
      %v4026 = vpop.permute.xlu0 %4025
      %v4027 = vsel %vm580, %v4022, %v4024
      %v4028 = vsel %vm580, %v4024, %v4026
      %v4030 = vsel %vm309, %v4017, 0
      %v4033 = vsel %vm313, %v4027, 0
      %v4036 = vsel %vm313, %v4028, 0
      %4038 = vmatprep.subr.bf16.mxu0 %v4036
      %4039 = vmatpush1.bf16.msra.mxu0 %v4033
      %4040 = vmatprep.subr.bf16.mxu0 0
      %4041 = vmatpush1.bf16.msra.mxu0 0
      %4042 = vmatprep.subr.bf16.mxu0 0
      %4043 = vmatpush1.bf16.msra.mxu0 0
      %4044 = vmatprep.subr.bf16.mxu0 0
      %4045 = vmatpush1.bf16.msra.mxu0 0
      %4046 = vmatprep.subr.bf16.mxu0 0
      %4047 = vmatpush1.bf16.msra.mxu0 0
      %4048 = vmatprep.subr.bf16.mxu0 0
      %4049 = vmatpush1.bf16.msra.mxu0 0
      %4050 = vmatprep.subr.bf16.mxu0 0
      %4051 = vmatpush1.bf16.msra.mxu0 0
      %4052 = vmatprep.subr.bf16.mxu0 0
      %4053 = vmatpush1.bf16.msra.mxu0 0
      %4054 = vmatprep.subr.bf16.mxu0 0
      %4055 = vmatpush1.bf16.msra.mxu0 0
      %4056 = vmatprep.subr.bf16.mxu0 0
      %4057 = vmatpush1.bf16.msra.mxu0 0
      %4058 = vmatprep.subr.bf16.mxu0 0
      %4059 = vmatpush1.bf16.msra.mxu0 0
      %4060 = vmatprep.subr.bf16.mxu0 0
      %4061 = vmatpush1.bf16.msra.mxu0 0
      %4062 = vmatprep.subr.bf16.mxu0 0
      %4063 = vmatpush1.bf16.msra.mxu0 0
      %4064 = vmatprep.subr.bf16.mxu0 0
      %4065 = vmatpush1.bf16.msra.mxu0 0
      %4066 = vmatprep.subr.bf16.mxu0 0
      %4067 = vmatpush1.bf16.msra.mxu0 0
      %4068 = vmatprep.subr.bf16.mxu0 0
      %4069 = vmatpush1.bf16.msra.mxu0 0
      %4070 = vmatprep.mubr.bf16.mxu0 0
      %4071 = vmatmul.mubr.bf16.gmra.mrb[0].mxu0 %v4030
      %v4072 = vpop.f32.mrb[0].mxu0
      %v4073 = vadd.f32 0.0, %v4072
      %v4074 = vpop.f32.mrb[0].mxu0
      %v4075 = vadd.f32 0.0, %v4074
      %v4076 = vpop.f32.mrb[0].mxu0
      %v4077 = vpop.f32.mrb[0].mxu0
      %4078 = vdwg.mxu0
      %v4079 = vadd.f32 %v4008, %v4073
      %v4080 = vadd.f32 %v4010, %v4075
      %v4081 = vsel %vm641, %v3895, 0
      %v4082 = vsel %vm642, %v3892, 0
      %v4083 = vsel %vm643, %v3898, 0
      %v4084 = vld [vmem:[%s1 + $0xe4] sm:$0xf]
      %4088 = vrot.lane.b32.xlu0 %v4081, 112
      %v4089 = vpop.permute.xlu0 %4088
      %4090 = vrot.lane.b32.xlu0 %v4082, 112
      %v4091 = vpop.permute.xlu0 %4090
      %4092 = vrot.lane.b32.xlu0 %v4083, 112
      %v4093 = vpop.permute.xlu0 %4092
      %v4094 = vsel %vm657, %v4089, %v4091
      %v4095 = vsel %vm657, %v4091, %v4093
      %v4097 = vsel %vm309, %v4084, 0
      %v4100 = vsel %vm313, %v4094, 0
      %v4103 = vsel %vm313, %v4095, 0
      %4105 = vmatprep.subr.bf16.mxu0 %v4103
      %4106 = vmatpush1.bf16.msra.mxu0 %v4100
      %4107 = vmatprep.subr.bf16.mxu0 0
      %4108 = vmatpush1.bf16.msra.mxu0 0
      %4109 = vmatprep.subr.bf16.mxu0 0
      %4110 = vmatpush1.bf16.msra.mxu0 0
      %4111 = vmatprep.subr.bf16.mxu0 0
      %4112 = vmatpush1.bf16.msra.mxu0 0
      %4113 = vmatprep.subr.bf16.mxu0 0
      %4114 = vmatpush1.bf16.msra.mxu0 0
      %4115 = vmatprep.subr.bf16.mxu0 0
      %4116 = vmatpush1.bf16.msra.mxu0 0
      %4117 = vmatprep.subr.bf16.mxu0 0
      %4118 = vmatpush1.bf16.msra.mxu0 0
      %4119 = vmatprep.subr.bf16.mxu0 0
      %4120 = vmatpush1.bf16.msra.mxu0 0
      %4121 = vmatprep.subr.bf16.mxu0 0
      %4122 = vmatpush1.bf16.msra.mxu0 0
      %4123 = vmatprep.subr.bf16.mxu0 0
      %4124 = vmatpush1.bf16.msra.mxu0 0
      %4125 = vmatprep.subr.bf16.mxu0 0
      %4126 = vmatpush1.bf16.msra.mxu0 0
      %4127 = vmatprep.subr.bf16.mxu0 0
      %4128 = vmatpush1.bf16.msra.mxu0 0
      %4129 = vmatprep.subr.bf16.mxu0 0
      %4130 = vmatpush1.bf16.msra.mxu0 0
      %4131 = vmatprep.subr.bf16.mxu0 0
      %4132 = vmatpush1.bf16.msra.mxu0 0
      %4133 = vmatprep.subr.bf16.mxu0 0
      %4134 = vmatpush1.bf16.msra.mxu0 0
      %4135 = vmatprep.subr.bf16.mxu0 0
      %4136 = vmatpush1.bf16.msra.mxu0 0
      %4137 = vmatprep.mubr.bf16.mxu0 0
      %4138 = vmatmul.mubr.bf16.gmra.mrb[0].mxu0 %v4097
      %v4139 = vpop.f32.mrb[0].mxu0
      %v4140 = vadd.f32 0.0, %v4139
      %v4141 = vpop.f32.mrb[0].mxu0
      %v4142 = vadd.f32 0.0, %v4141
      %v4143 = vpop.f32.mrb[0].mxu0
      %v4144 = vpop.f32.mrb[0].mxu0
      %4145 = vdwg.mxu0
      %v4146 = vadd.f32 %v4079, %v4140
      %v4147 = vadd.f32 %v4080, %v4142
      %v4148 = vld [vmem:[%s1 + $0xe8] sm:$0xf]
      %4149 = vrot.lane.b32.xlu0 %v3895, 111
      %v4150 = vpop.permute.xlu0 %4149
      %4151 = vrot.lane.b32.xlu0 %v3892, 111
      %v4152 = vpop.permute.xlu0 %4151
      %4153 = vrot.lane.b32.xlu0 %v3898, 111
      %v4154 = vpop.permute.xlu0 %4153
      %v4155 = vsel %vm719, %v4150, %v4152
      %v4156 = vsel %vm719, %v4152, %v4154
      %v4158 = vsel %vm309, %v4148, 0
      %v4161 = vsel %vm313, %v4155, 0
      %v4164 = vsel %vm313, %v4156, 0
      %4166 = vmatprep.subr.bf16.mxu0 %v4164
      %4167 = vmatpush1.bf16.msra.mxu0 %v4161
      %4168 = vmatprep.subr.bf16.mxu0 0
      %4169 = vmatpush1.bf16.msra.mxu0 0
      %4170 = vmatprep.subr.bf16.mxu0 0
      %4171 = vmatpush1.bf16.msra.mxu0 0
      %4172 = vmatprep.subr.bf16.mxu0 0
      %4173 = vmatpush1.bf16.msra.mxu0 0
      %4174 = vmatprep.subr.bf16.mxu0 0
      %4175 = vmatpush1.bf16.msra.mxu0 0
      %4176 = vmatprep.subr.bf16.mxu0 0
      %4177 = vmatpush1.bf16.msra.mxu0 0
      %4178 = vmatprep.subr.bf16.mxu0 0
      %4179 = vmatpush1.bf16.msra.mxu0 0
      %4180 = vmatprep.subr.bf16.mxu0 0
      %4181 = vmatpush1.bf16.msra.mxu0 0
      %4182 = vmatprep.subr.bf16.mxu0 0
      %4183 = vmatpush1.bf16.msra.mxu0 0
      %4184 = vmatprep.subr.bf16.mxu0 0
      %4185 = vmatpush1.bf16.msra.mxu0 0
      %4186 = vmatprep.subr.bf16.mxu0 0
      %4187 = vmatpush1.bf16.msra.mxu0 0
      %4188 = vmatprep.subr.bf16.mxu0 0
      %4189 = vmatpush1.bf16.msra.mxu0 0
      %4190 = vmatprep.subr.bf16.mxu0 0
      %4191 = vmatpush1.bf16.msra.mxu0 0
      %4192 = vmatprep.subr.bf16.mxu0 0
      %4193 = vmatpush1.bf16.msra.mxu0 0
      %4194 = vmatprep.subr.bf16.mxu0 0
      %4195 = vmatpush1.bf16.msra.mxu0 0
      %4196 = vmatprep.subr.bf16.mxu0 0
      %4197 = vmatpush1.bf16.msra.mxu0 0
      %4198 = vmatprep.mubr.bf16.mxu0 0
      %4199 = vmatmul.mubr.bf16.gmra.mrb[0].mxu0 %v4158
      %v4200 = vpop.f32.mrb[0].mxu0
      %v4201 = vadd.f32 0.0, %v4200
      %v4202 = vpop.f32.mrb[0].mxu0
      %v4203 = vadd.f32 0.0, %v4202
      %v4204 = vpop.f32.mrb[0].mxu0
      %v4205 = vpop.f32.mrb[0].mxu0
      %4206 = vdwg.mxu0
      %v4207 = vadd.f32 %v4146, %v4201
      %v4208 = vadd.f32 %v4147, %v4203
      %v4209 = vsel %vm780, %v3895, 0
      %v4210 = vsel %vm781, %v3892, 0
      %v4211 = vsel %vm782, %v3898, 0
      %v4212 = vld [vmem:[%s1 + $0xec] sm:$0xf]
      %4216 = vrot.lane.b32.xlu0 %v4209, 110
      %v4217 = vpop.permute.xlu0 %4216
      %4218 = vrot.lane.b32.xlu0 %v4210, 110
      %v4219 = vpop.permute.xlu0 %4218
      %4220 = vrot.lane.b32.xlu0 %v4211, 110
      %v4221 = vpop.permute.xlu0 %4220
      %v4222 = vsel %vm796, %v4217, %v4219
      %v4223 = vsel %vm796, %v4219, %v4221
      %v4225 = vsel %vm309, %v4212, 0
      %v4228 = vsel %vm313, %v4222, 0
      %v4231 = vsel %vm313, %v4223, 0
      %4233 = vmatprep.subr.bf16.mxu0 %v4231
      %4234 = vmatpush1.bf16.msra.mxu0 %v4228
      %4235 = vmatprep.subr.bf16.mxu0 0
      %4236 = vmatpush1.bf16.msra.mxu0 0
      %4237 = vmatprep.subr.bf16.mxu0 0
      %4238 = vmatpush1.bf16.msra.mxu0 0
      %4239 = vmatprep.subr.bf16.mxu0 0
      %4240 = vmatpush1.bf16.msra.mxu0 0
      %4241 = vmatprep.subr.bf16.mxu0 0
      %4242 = vmatpush1.bf16.msra.mxu0 0
      %4243 = vmatprep.subr.bf16.mxu0 0
      %4244 = vmatpush1.bf16.msra.mxu0 0
      %4245 = vmatprep.subr.bf16.mxu0 0
      %4246 = vmatpush1.bf16.msra.mxu0 0
      %4247 = vmatprep.subr.bf16.mxu0 0
      %4248 = vmatpush1.bf16.msra.mxu0 0
      %4249 = vmatprep.subr.bf16.mxu0 0
      %4250 = vmatpush1.bf16.msra.mxu0 0
      %4251 = vmatprep.subr.bf16.mxu0 0
      %4252 = vmatpush1.bf16.msra.mxu0 0
      %4253 = vmatprep.subr.bf16.mxu0 0
      %4254 = vmatpush1.bf16.msra.mxu0 0
      %4255 = vmatprep.subr.bf16.mxu0 0
      %4256 = vmatpush1.bf16.msra.mxu0 0
      %4257 = vmatprep.subr.bf16.mxu0 0
      %4258 = vmatpush1.bf16.msra.mxu0 0
      %4259 = vmatprep.subr.bf16.mxu0 0
      %4260 = vmatpush1.bf16.msra.mxu0 0
      %4261 = vmatprep.subr.bf16.mxu0 0
      %4262 = vmatpush1.bf16.msra.mxu0 0
      %4263 = vmatprep.subr.bf16.mxu0 0
      %4264 = vmatpush1.bf16.msra.mxu0 0
      %4265 = vmatprep.mubr.bf16.mxu0 0
      %4266 = vmatmul.mubr.bf16.gmra.mrb[0].mxu0 %v4225
      %v4267 = vpop.f32.mrb[0].mxu0
      %v4268 = vadd.f32 0.0, %v4267
      %v4269 = vpop.f32.mrb[0].mxu0
      %v4270 = vadd.f32 0.0, %v4269
      %v4271 = vpop.f32.mrb[0].mxu0
      %v4272 = vpop.f32.mrb[0].mxu0
      %4273 = vdwg.mxu0
      %v4274 = vadd.f32 %v4207, %v4268
      %v4275 = vadd.f32 %v4208, %v4270
      %v4276 = vsel %vm857, %v3895, 0
      %v4277 = vsel %vm858, %v3892, 0
      %v4278 = vsel %vm859, %v3898, 0
      %v4279 = vld [vmem:[%s1 + $0xf0] sm:$0xf]
      %4283 = vrot.lane.b32.xlu0 %v4276, 96
      %v4284 = vpop.permute.xlu0 %4283
      %4285 = vrot.lane.b32.xlu0 %v4277, 96
      %v4286 = vpop.permute.xlu0 %4285
      %4287 = vrot.lane.b32.xlu0 %v4278, 96
      %v4288 = vpop.permute.xlu0 %4287
      %v4289 = vsel %vm873, %v4284, %v4286
      %v4290 = vsel %vm873, %v4286, %v4288
      %v4292 = vsel %vm309, %v4279, 0
      %v4295 = vsel %vm313, %v4289, 0
      %v4298 = vsel %vm313, %v4290, 0
      %4300 = vmatprep.subr.bf16.mxu0 %v4298
      %4301 = vmatpush1.bf16.msra.mxu0 %v4295
      %4302 = vmatprep.subr.bf16.mxu0 0
      %4303 = vmatpush1.bf16.msra.mxu0 0
      %4304 = vmatprep.subr.bf16.mxu0 0
      %4305 = vmatpush1.bf16.msra.mxu0 0
      %4306 = vmatprep.subr.bf16.mxu0 0
      %4307 = vmatpush1.bf16.msra.mxu0 0
      %4308 = vmatprep.subr.bf16.mxu0 0
      %4309 = vmatpush1.bf16.msra.mxu0 0
      %4310 = vmatprep.subr.bf16.mxu0 0
      %4311 = vmatpush1.bf16.msra.mxu0 0
      %4312 = vmatprep.subr.bf16.mxu0 0
      %4313 = vmatpush1.bf16.msra.mxu0 0
      %4314 = vmatprep.subr.bf16.mxu0 0
      %4315 = vmatpush1.bf16.msra.mxu0 0
      %4316 = vmatprep.subr.bf16.mxu0 0
      %4317 = vmatpush1.bf16.msra.mxu0 0
      %4318 = vmatprep.subr.bf16.mxu0 0
      %4319 = vmatpush1.bf16.msra.mxu0 0
      %4320 = vmatprep.subr.bf16.mxu0 0
      %4321 = vmatpush1.bf16.msra.mxu0 0
      %4322 = vmatprep.subr.bf16.mxu0 0
      %4323 = vmatpush1.bf16.msra.mxu0 0
      %4324 = vmatprep.subr.bf16.mxu0 0
      %4325 = vmatpush1.bf16.msra.mxu0 0
      %4326 = vmatprep.subr.bf16.mxu0 0
      %4327 = vmatpush1.bf16.msra.mxu0 0
      %4328 = vmatprep.subr.bf16.mxu0 0
      %4329 = vmatpush1.bf16.msra.mxu0 0
      %4330 = vmatprep.subr.bf16.mxu0 0
      %4331 = vmatpush1.bf16.msra.mxu0 0
      %4332 = vmatprep.mubr.bf16.mxu0 0
      %4333 = vmatmul.mubr.bf16.gmra.mrb[0].mxu0 %v4292
      %v4334 = vpop.f32.mrb[0].mxu0
      %v4335 = vadd.f32 0.0, %v4334
      %v4336 = vpop.f32.mrb[0].mxu0
      %v4337 = vadd.f32 0.0, %v4336
      %v4338 = vpop.f32.mrb[0].mxu0
      %v4339 = vpop.f32.mrb[0].mxu0
      %4340 = vdwg.mxu0
      %v4341 = vadd.f32 %v4274, %v4335
      %v4342 = vadd.f32 %v4275, %v4337
      %v4343 = vld [vmem:[%s1 + $0xf4] sm:$0xf]
      %4344 = vrot.lane.b32.xlu0 %v3895, 95
      %v4345 = vpop.permute.xlu0 %4344
      %4346 = vrot.lane.b32.xlu0 %v3892, 95
      %v4347 = vpop.permute.xlu0 %4346
      %4348 = vrot.lane.b32.xlu0 %v3898, 95
      %v4349 = vpop.permute.xlu0 %4348
      %v4350 = vsel %vm935, %v4345, %v4347
      %v4351 = vsel %vm935, %v4347, %v4349
      %v4353 = vsel %vm309, %v4343, 0
      %v4356 = vsel %vm313, %v4350, 0
      %v4359 = vsel %vm313, %v4351, 0
      %4361 = vmatprep.subr.bf16.mxu0 %v4359
      %4362 = vmatpush1.bf16.msra.mxu0 %v4356
      %4363 = vmatprep.subr.bf16.mxu0 0
      %4364 = vmatpush1.bf16.msra.mxu0 0
      %4365 = vmatprep.subr.bf16.mxu0 0
      %4366 = vmatpush1.bf16.msra.mxu0 0
      %4367 = vmatprep.subr.bf16.mxu0 0
      %4368 = vmatpush1.bf16.msra.mxu0 0
      %4369 = vmatprep.subr.bf16.mxu0 0
      %4370 = vmatpush1.bf16.msra.mxu0 0
      %4371 = vmatprep.subr.bf16.mxu0 0
      %4372 = vmatpush1.bf16.msra.mxu0 0
      %4373 = vmatprep.subr.bf16.mxu0 0
      %4374 = vmatpush1.bf16.msra.mxu0 0
      %4375 = vmatprep.subr.bf16.mxu0 0
      %4376 = vmatpush1.bf16.msra.mxu0 0
      %4377 = vmatprep.subr.bf16.mxu0 0
      %4378 = vmatpush1.bf16.msra.mxu0 0
      %4379 = vmatprep.subr.bf16.mxu0 0
      %4380 = vmatpush1.bf16.msra.mxu0 0
      %4381 = vmatprep.subr.bf16.mxu0 0
      %4382 = vmatpush1.bf16.msra.mxu0 0
      %4383 = vmatprep.subr.bf16.mxu0 0
      %4384 = vmatpush1.bf16.msra.mxu0 0
      %4385 = vmatprep.subr.bf16.mxu0 0
      %4386 = vmatpush1.bf16.msra.mxu0 0
      %4387 = vmatprep.subr.bf16.mxu0 0
      %4388 = vmatpush1.bf16.msra.mxu0 0
      %4389 = vmatprep.subr.bf16.mxu0 0
      %4390 = vmatpush1.bf16.msra.mxu0 0
      %4391 = vmatprep.subr.bf16.mxu0 0
      %4392 = vmatpush1.bf16.msra.mxu0 0
      %4393 = vmatprep.mubr.bf16.mxu0 0
      %4394 = vmatmul.mubr.bf16.gmra.mrb[0].mxu0 %v4353
      %v4395 = vpop.f32.mrb[0].mxu0
      %v4396 = vadd.f32 0.0, %v4395
      %v4397 = vpop.f32.mrb[0].mxu0
      %v4398 = vadd.f32 0.0, %v4397
      %v4399 = vpop.f32.mrb[0].mxu0
      %v4400 = vpop.f32.mrb[0].mxu0
      %4401 = vdwg.mxu0
      %v4402 = vadd.f32 %v4341, %v4396
      %v4403 = vadd.f32 %v4342, %v4398
      %v4404 = vsel %vm996, %v3895, 0
      %v4405 = vsel %vm997, %v3892, 0
      %v4406 = vsel %vm998, %v3898, 0
      %v4407 = vld [vmem:[%s1 + $0xf8] sm:$0xf]
      %4411 = vrot.lane.b32.xlu0 %v4404, 94
      %v4412 = vpop.permute.xlu0 %4411
      %4413 = vrot.lane.b32.xlu0 %v4405, 94
      %v4414 = vpop.permute.xlu0 %4413
      %4415 = vrot.lane.b32.xlu0 %v4406, 94
      %v4416 = vpop.permute.xlu0 %4415
      %v4417 = vsel %vm1012, %v4412, %v4414
      %v4418 = vsel %vm1012, %v4414, %v4416
      %v4420 = vsel %vm309, %v4407, 0
      %v4423 = vsel %vm313, %v4417, 0
      %v4426 = vsel %vm313, %v4418, 0
      %4428 = vmatprep.subr.bf16.mxu0 %v4426
      %4429 = vmatpush1.bf16.msra.mxu0 %v4423
      %4430 = vmatprep.subr.bf16.mxu0 0
      %4431 = vmatpush1.bf16.msra.mxu0 0
      %4432 = vmatprep.subr.bf16.mxu0 0
      %4433 = vmatpush1.bf16.msra.mxu0 0
      %4434 = vmatprep.subr.bf16.mxu0 0
      %4435 = vmatpush1.bf16.msra.mxu0 0
      %4436 = vmatprep.subr.bf16.mxu0 0
      %4437 = vmatpush1.bf16.msra.mxu0 0
      %4438 = vmatprep.subr.bf16.mxu0 0
      %4439 = vmatpush1.bf16.msra.mxu0 0
      %4440 = vmatprep.subr.bf16.mxu0 0
      %4441 = vmatpush1.bf16.msra.mxu0 0
      %4442 = vmatprep.subr.bf16.mxu0 0
      %4443 = vmatpush1.bf16.msra.mxu0 0
      %4444 = vmatprep.subr.bf16.mxu0 0
      %4445 = vmatpush1.bf16.msra.mxu0 0
      %4446 = vmatprep.subr.bf16.mxu0 0
      %4447 = vmatpush1.bf16.msra.mxu0 0
      %4448 = vmatprep.subr.bf16.mxu0 0
      %4449 = vmatpush1.bf16.msra.mxu0 0
      %4450 = vmatprep.subr.bf16.mxu0 0
      %4451 = vmatpush1.bf16.msra.mxu0 0
      %4452 = vmatprep.subr.bf16.mxu0 0
      %4453 = vmatpush1.bf16.msra.mxu0 0
      %4454 = vmatprep.subr.bf16.mxu0 0
      %4455 = vmatpush1.bf16.msra.mxu0 0
      %4456 = vmatprep.subr.bf16.mxu0 0
      %4457 = vmatpush1.bf16.msra.mxu0 0
      %4458 = vmatprep.subr.bf16.mxu0 0
      %4459 = vmatpush1.bf16.msra.mxu0 0
      %4460 = vmatprep.mubr.bf16.mxu0 0
      %4461 = vmatmul.mubr.bf16.gmra.mrb[0].mxu0 %v4420
      %v4462 = vpop.f32.mrb[0].mxu0
      %v4463 = vadd.f32 0.0, %v4462
      %v4464 = vpop.f32.mrb[0].mxu0
      %v4465 = vadd.f32 0.0, %v4464
      %v4466 = vpop.f32.mrb[0].mxu0
      %v4467 = vpop.f32.mrb[0].mxu0
      %4468 = vdwg.mxu0
      %v4469 = vadd.f32 %v4402, %v4463
      %v4470 = vadd.f32 %v4403, %v4465
      %4472 = vset.pattern.permute.xlu0 0
      %4473 = vperm.xlu0 %4472, %v3885
      %v4474 = vpop.permute.xlu0 %4473
      %v4476 = vadd.f32 %v4469, %v4474
      %v4477 = vadd.f32 %v4470, %v4474
      %v4478 = vxor.u32 %v4476, 2147483648
      %v4479 = vxor.u32 %v4477, 2147483648
      %v4480 = vmul.f32 %v4478, 1.442695
      %v4481 = vpow.pop %v4480
      %v4482 = vmul.f32 %v4479, 1.442695
      %v4483 = vpow.pop %v4482
      %v4484 = vadd.f32 %v4481, 1.0
      %v4485 = vadd.f32 %v4483, 1.0
      %v4486 = vrcp.pop %v4484
      %v4487 = vmul.f32 1.0, %v4486
      %v4488 = vrcp.pop %v4485
      %v4489 = vmul.f32 1.0, %v4488
      %v4490 = vmul.f32 %v4476, %v4487
      %v4491 = vmul.f32 %v4477, %v4489
      %v4492 = vpack.c.bf16 %v4490, %v4490
      %v4493 = vpack.c.bf16 %v4491, %v4491
      %v4494 = vld [vmem:[%s1 + $0xfc] sm:$0xf]
      %v4495 = vld [vmem:[%s1 + $0x100] sm:$0xf]
      %v4496 = vld [vmem:[%s1 + $0x104] sm:$0xf]
      %v4497 = vld [vmem:[%s1 + $0x108] sm:$0xf]
      %v4500 = vunpack.c.l.b16 %v4496
      %v4501 = vunpack.c.l.b16 %v4497
      %v4502 = vpack.c.b16 %v4501, %v4500
      %v4504 = vsel %vm309, %v4502, 0
      %4506 = vmatprep.subr.bf16.mxu0 %v2462
      %4507 = vmatpush1.bf16.msra.mxu0 %v2459
      %4508 = vmatprep.subr.bf16.mxu0 0
      %4509 = vmatpush1.bf16.msra.mxu0 0
      %4510 = vmatprep.subr.bf16.mxu0 0
      %4511 = vmatpush1.bf16.msra.mxu0 0
      %4512 = vmatprep.subr.bf16.mxu0 0
      %4513 = vmatpush1.bf16.msra.mxu0 0
      %4514 = vmatprep.subr.bf16.mxu0 0
      %4515 = vmatpush1.bf16.msra.mxu0 0
      %4516 = vmatprep.subr.bf16.mxu0 0
      %4517 = vmatpush1.bf16.msra.mxu0 0
      %4518 = vmatprep.subr.bf16.mxu0 0
      %4519 = vmatpush1.bf16.msra.mxu0 0
      %4520 = vmatprep.subr.bf16.mxu0 0
      %4521 = vmatpush1.bf16.msra.mxu0 0
      %4522 = vmatprep.subr.bf16.mxu0 0
      %4523 = vmatpush1.bf16.msra.mxu0 0
      %4524 = vmatprep.subr.bf16.mxu0 0
      %4525 = vmatpush1.bf16.msra.mxu0 0
      %4526 = vmatprep.subr.bf16.mxu0 0
      %4527 = vmatpush1.bf16.msra.mxu0 0
      %4528 = vmatprep.subr.bf16.mxu0 0
      %4529 = vmatpush1.bf16.msra.mxu0 0
      %4530 = vmatprep.subr.bf16.mxu0 0
      %4531 = vmatpush1.bf16.msra.mxu0 0
      %4532 = vmatprep.subr.bf16.mxu0 0
      %4533 = vmatpush1.bf16.msra.mxu0 0
      %4534 = vmatprep.subr.bf16.mxu0 0
      %4535 = vmatpush1.bf16.msra.mxu0 0
      %4536 = vmatprep.subr.bf16.mxu0 0
      %4537 = vmatpush1.bf16.msra.mxu0 0
      %4538 = vmatprep.mubr.bf16.mxu0 0
      %4539 = vmatmul.mubr.bf16.gmra.mrb[0].mxu0 %v4504
      %v4540 = vpop.f32.mrb[0].mxu0
      %v4541 = vadd.f32 0.0, %v4540
      %v4542 = vpop.f32.mrb[0].mxu0
      %v4543 = vadd.f32 0.0, %v4542
      %v4544 = vpop.f32.mrb[0].mxu0
      %v4545 = vadd.f32 0.0, %v4544
      %v4546 = vpop.f32.mrb[0].mxu0
      %v4547 = vadd.f32 0.0, %v4546
      %4548 = vdwg.mxu0
      %v4551 = vunpack.c.l.b16 %v4494
      %v4552 = vunpack.c.l.b16 %v4495
      %v4553 = vpack.c.b16 %v4552, %v4551
      %v4555 = vsel %vm309, %v4553, 0
      %4557 = vmatprep.subr.bf16.mxu0 %v318
      %4558 = vmatpush1.bf16.msra.mxu0 %v315
      %4559 = vmatprep.subr.bf16.mxu0 0
      %4560 = vmatpush1.bf16.msra.mxu0 0
      %4561 = vmatprep.subr.bf16.mxu0 0
      %4562 = vmatpush1.bf16.msra.mxu0 0
      %4563 = vmatprep.subr.bf16.mxu0 0
      %4564 = vmatpush1.bf16.msra.mxu0 0
      %4565 = vmatprep.subr.bf16.mxu0 0
      %4566 = vmatpush1.bf16.msra.mxu0 0
      %4567 = vmatprep.subr.bf16.mxu0 0
      %4568 = vmatpush1.bf16.msra.mxu0 0
      %4569 = vmatprep.subr.bf16.mxu0 0
      %4570 = vmatpush1.bf16.msra.mxu0 0
      %4571 = vmatprep.subr.bf16.mxu0 0
      %4572 = vmatpush1.bf16.msra.mxu0 0
      %4573 = vmatprep.subr.bf16.mxu0 0
      %4574 = vmatpush1.bf16.msra.mxu0 0
      %4575 = vmatprep.subr.bf16.mxu0 0
      %4576 = vmatpush1.bf16.msra.mxu0 0
      %4577 = vmatprep.subr.bf16.mxu0 0
      %4578 = vmatpush1.bf16.msra.mxu0 0
      %4579 = vmatprep.subr.bf16.mxu0 0
      %4580 = vmatpush1.bf16.msra.mxu0 0
      %4581 = vmatprep.subr.bf16.mxu0 0
      %4582 = vmatpush1.bf16.msra.mxu0 0
      %4583 = vmatprep.subr.bf16.mxu0 0
      %4584 = vmatpush1.bf16.msra.mxu0 0
      %4585 = vmatprep.subr.bf16.mxu0 0
      %4586 = vmatpush1.bf16.msra.mxu0 0
      %4587 = vmatprep.subr.bf16.mxu0 0
      %4588 = vmatpush1.bf16.msra.mxu0 0
      %4589 = vmatprep.mubr.bf16.mxu0 0
      %4590 = vmatmul.mubr.bf16.gmra.mrb[0].mxu0 %v4555
      %v4591 = vpop.f32.mrb[0].mxu0
      %v4592 = vadd.f32 %v4541, %v4591
      %v4593 = vpop.f32.mrb[0].mxu0
      %v4594 = vadd.f32 %v4543, %v4593
      %v4595 = vpop.f32.mrb[0].mxu0
      %v4596 = vadd.f32 %v4545, %v4595
      %v4597 = vpop.f32.mrb[0].mxu0
      %v4598 = vadd.f32 %v4547, %v4597
      %4599 = vdwg.mxu0
      %v4600 = vld [vmem:[%s1 + $0x10c] sm:$0xf]
      %v4601 = vld [vmem:[%s1 + $0x110] sm:$0xf]
      %v4604 = vunpack.c.l.b16 %v4600
      %v4605 = vunpack.c.l.b16 %v4601
      %v4606 = vpack.c.b16 %v4605, %v4604
      %v4608 = vsel %vm309, %v4606, 0
      %v4611 = vsel %vm313, %v4492, 0
      %v4614 = vsel %vm313, %v4493, 0
      %4616 = vmatprep.subr.bf16.mxu0 %v4614
      %4617 = vmatpush1.bf16.msra.mxu0 %v4611
      %4618 = vmatprep.subr.bf16.mxu0 0
      %4619 = vmatpush1.bf16.msra.mxu0 0
      %4620 = vmatprep.subr.bf16.mxu0 0
      %4621 = vmatpush1.bf16.msra.mxu0 0
      %4622 = vmatprep.subr.bf16.mxu0 0
      %4623 = vmatpush1.bf16.msra.mxu0 0
      %4624 = vmatprep.subr.bf16.mxu0 0
      %4625 = vmatpush1.bf16.msra.mxu0 0
      %4626 = vmatprep.subr.bf16.mxu0 0
      %4627 = vmatpush1.bf16.msra.mxu0 0
      %4628 = vmatprep.subr.bf16.mxu0 0
      %4629 = vmatpush1.bf16.msra.mxu0 0
      %4630 = vmatprep.subr.bf16.mxu0 0
      %4631 = vmatpush1.bf16.msra.mxu0 0
      %4632 = vmatprep.subr.bf16.mxu0 0
      %4633 = vmatpush1.bf16.msra.mxu0 0
      %4634 = vmatprep.subr.bf16.mxu0 0
      %4635 = vmatpush1.bf16.msra.mxu0 0
      %4636 = vmatprep.subr.bf16.mxu0 0
      %4637 = vmatpush1.bf16.msra.mxu0 0
      %4638 = vmatprep.subr.bf16.mxu0 0
      %4639 = vmatpush1.bf16.msra.mxu0 0
      %4640 = vmatprep.subr.bf16.mxu0 0
      %4641 = vmatpush1.bf16.msra.mxu0 0
      %4642 = vmatprep.subr.bf16.mxu0 0
      %4643 = vmatpush1.bf16.msra.mxu0 0
      %4644 = vmatprep.subr.bf16.mxu0 0
      %4645 = vmatpush1.bf16.msra.mxu0 0
      %4646 = vmatprep.subr.bf16.mxu0 0
      %4647 = vmatpush1.bf16.msra.mxu0 0
      %4648 = vmatprep.mubr.bf16.mxu0 0
      %4649 = vmatmul.mubr.bf16.gmra.mrb[0].mxu0 %v4608
      %v4650 = vpop.f32.mrb[0].mxu0
      %v4651 = vadd.f32 0.0, %v4650
      %v4652 = vpop.f32.mrb[0].mxu0
      %v4653 = vadd.f32 0.0, %v4652
      %v4654 = vpop.f32.mrb[0].mxu0
      %v4655 = vadd.f32 0.0, %v4654
      %v4656 = vpop.f32.mrb[0].mxu0
      %v4657 = vadd.f32 0.0, %v4656
      %4658 = vdwg.mxu0
      %v4659 = vadd.f32 %v4592, %v4651
      %v4660 = vadd.f32 %v4594, %v4653
      %v4661 = vadd.f32 %v4596, %v4655
      %v4662 = vadd.f32 %v4598, %v4657
      %v4663 = vld [vmem:[%s2 + $0x68] sm:$0xff]
      %v4664 = vld [vmem:[%s2 + $0x70] sm:$0xff]
      %4666 = vset.pattern.permute.xlu0 0
      %4667 = vperm.xlu0 %4666, %v4663
      %v4668 = vpop.permute.xlu0 %4667
      %4671 = vset.pattern.permute.xlu0 0
      %4672 = vperm.xlu0 %4671, %v4664
      %v4673 = vpop.permute.xlu0 %4672
      %v4675 = vadd.f32 %v4659, %v4668
      %v4676 = vadd.f32 %v4660, %v4668
      %v4677 = vadd.f32 %v4661, %v4673
      %v4678 = vadd.f32 %v4662, %v4673
      %v4679 = vxor.u32 %v4675, 2147483648
      %v4680 = vxor.u32 %v4676, 2147483648
      %v4681 = vxor.u32 %v4677, 2147483648
      %v4682 = vxor.u32 %v4678, 2147483648
      %v4683 = vmul.f32 %v4679, 1.442695
      %v4684 = vpow.pop %v4683
      %v4685 = vmul.f32 %v4680, 1.442695
      %v4686 = vpow.pop %v4685
      %v4687 = vmul.f32 %v4681, 1.442695
      %v4688 = vpow.pop %v4687
      %v4689 = vmul.f32 %v4682, 1.442695
      %v4690 = vpow.pop %v4689
      %v4691 = vadd.f32 %v4684, 1.0
      %v4692 = vadd.f32 %v4686, 1.0
      %v4693 = vadd.f32 %v4688, 1.0
      %v4694 = vadd.f32 %v4690, 1.0
      %v4695 = vrcp.pop %v4691
      %v4696 = vmul.f32 1.0, %v4695
      %v4697 = vrcp.pop %v4692
      %v4698 = vmul.f32 1.0, %v4697
      %v4699 = vrcp.pop %v4693
      %v4700 = vmul.f32 1.0, %v4699
      %v4701 = vrcp.pop %v4694
      %v4702 = vmul.f32 1.0, %v4701
      %v4703 = vmul.f32 %v4675, %v4696
      %v4704 = vmul.f32 %v4676, %v4698
      %v4705 = vmul.f32 %v4677, %v4700
      %v4706 = vmul.f32 %v4678, %v4702
      %4707 = vst [vmem:[%s170] sm:$0xff] %v4703
      %4708 = vst [vmem:[%s170 + $0x8] sm:$0xff] %v4704
      %4709 = vst [vmem:[%s170 + $0x10] sm:$0xff] %v4705
      %4710 = vst [vmem:[%s170 + $0x18] sm:$0xff] %v4706
      %p4711 = scmp.lt.s32.totalorder %s14, 1
      %s4712 = scalar_select %p4711, %s14, 1
      %s4713 = smul.addr %s4712, 4
      %s4714 = smul.addr %s4713, 8
      %s4715 = scalar_lea.vmem %s3, %s4714
      // Predicated region
      $region33: #{repncspelan4.1} parent=31 // pred_check
        %p4716 = pneg %p100
      $region34: #{repncspelan4.1} parent=31 // pred_check_branch
        %4718 = sbr.rel (%p4716) target = $region36
      $region35: #{repncspelan4.1} parent=31 // pred_region
        _
      $region36: #{repncspelan4.1} parent=31 // pred_fallthru
        _
    $region32: #{repncspelan4.1} parent=5 // pred_fallthru
      _
    %p4719 = scmp.le.s32.totalorder 2, %s9
    // Predicated region
    $region37: #{repncspelan4.1} parent=5 // pred_check
      %p4720 = pneg %p4719
    $region38: #{repncspelan4.1} parent=5 // pred_check_branch
      %4722 = sbr.rel (%p4720) target = $region40
    $region39: #{repncspelan4.1} parent=5 // pred_region
      %s4723 = ssub.s32 %s9, 2
      // Predicated region
      $region41: #{repncspelan4.1} parent=39 // pred_check
        %p4724 = pneg %p106
      $region42: #{repncspelan4.1} parent=39 // pred_check_branch
        %4726 = sbr.rel (%p4724) target = $region44
      $region43: #{repncspelan4.1} parent=39 // pred_region
        %p4727 = scmp.lt.s32.totalorder %s15, 1
        %s4728 = scalar_select %p4727, %s15, 1
        %s4729 = smul.addr %s4728, 4
        %s4730 = smul.addr %s4729, 8
        %s4731 = scalar_lea.vmem %s3, %s4730
      $region44: #{repncspelan4.1} parent=39 // pred_fallthru
        _
    $region40: #{repncspelan4.1} parent=5 // pred_fallthru
      _
  $region6: #{repncspelan4.1} parent=0 // loop_footer
    %s13 = sadd.s32 1, %s9
  $region7: #{repncspelan4.1} parent=0 // loop_footer_branch
    %8 = sbr.rel target = $region3
  $region8: #{repncspelan4.1} parent=0 // loop_exit
    _

</llo_original>
